<compile_context>
chip_gen: v7x
topology: tpu7x:2x2x1
jax: 0.10.0
libtpu: 0.0.40
codegen_flags: <defaults>
</compile_context>

<pallas_src>
import jax
import jax.numpy as jnp
from jax import lax
from jax.experimental import pallas as pl
from jax.experimental.pallas import tpu as pltpu

SCALES = (0, 1, 2, 4, 8, 16)      # default scale_list of HyperScatteringModule
N_WAVELETS = len(SCALES)          # 6
DIFFUSION_LEVELS = SCALES[-1]     # 16


# ----------------------------------------------------------------------------
# One HyperScatteringModule pass (normalize='right', activation='modulus'),
# expressed with snapshot differences instead of the dense wavelet matrix.
# TODO(synk): trainable_scales=True (arbitrary wavelet matrix) would need the
# generic 6x17 MAC; defaults use the fixed banded matrix reproduced here.
# ----------------------------------------------------------------------------
def _hsm_pass(x0, e0, H, dv, dhe, dhe2, write_node, write_edge):
    prev_n, prev_e, x = x0, e0, x0
    w = 0
    snap_steps = frozenset(SCALES[1:])
    for step in range(1, DIFFUSION_LEVELS + 1):
        # edge_level[step] = dhe * (H^T @ (dv * node_level[step-1]))
        ye = lax.dot_general(H, dv * x, (((0,), (0,)), ((), ())),
                             preferred_element_type=jnp.float32)
        # node_level[step] = dv * (H @ (dhe^2 * (H^T @ (dv * node_level[step-1]))))
        x = dv * jnp.dot(H, dhe2 * ye, preferred_element_type=jnp.float32)
        if step in snap_steps:
            e_snap = dhe * ye
            write_node(w, jnp.abs(prev_n - x))        # 'modulus' activation
            write_edge(w, jnp.abs(prev_e - e_snap))
            prev_n, prev_e = x, e_snap
            w += 1
    write_node(N_WAVELETS - 1, jnp.abs(prev_n))
    write_edge(N_WAVELETS - 1, jnp.abs(prev_e))


# ----------------------------------------------------------------------------
# Fused kernel: HSM layer 1 -> HSM layer 2 -> MLP head (fc2(relu(fc1(.))))
# ----------------------------------------------------------------------------
def _hsn_kernel(x_ref, hatt_ref, h_ref, dv_ref, dhe_ref,
                w1_ref, b1_ref, w2_ref, b2_ref,
                out_ref, s2e_ref,
                s1n_ref, s1e_ref, s2n_ref):
    H = h_ref[...]                  # (N, E) dense incidence
    dv = dv_ref[...]                # (N, 1)  = D_v^-1
    dhe = dhe_ref[...]              # (E, 1)  = D_he^-1
    dhe2 = dhe * dhe                # hoisted out of the diffusion loops

    C = x_ref.shape[1]
    F1 = N_WAVELETS * C             # width of one layer-2 wavelet block

    # ---- scattering layer 1: (N, C) -> (N, 6C), (E, C) -> (E, 6C) ----
    def wn1(w, v):
        s1n_ref[:, w * C:(w + 1) * C] = v

    def we1(w, v):
        s1e_ref[:, w * C:(w + 1) * C] = v

    _hsm_pass(x_ref[...].astype(jnp.float32),
              hatt_ref[...].astype(jnp.float32),
              H, dv, dhe, dhe2, wn1, we1)

    # ---- scattering layer 2: (N, 6C) -> (N, 36C); edge output written directly ----
    def wn2(w, v):
        s2n_ref[:, w * F1:(w + 1) * F1] = v

    def we2(w, v):
        s2e_ref[:, w * F1:(w + 1) * F1] = v

    _hsm_pass(s1n_ref[...], s1e_ref[...], H, dv, dhe, dhe2, wn2, we2)

    # ---- MLP head on node features (task='classification', pooling=None) ----
    h = jnp.dot(s2n_ref[...], w1_ref[...],
                preferred_element_type=jnp.float32) + b1_ref[...]
    h = jnp.maximum(h, 0.0)
    out_ref[...] = jnp.dot(h, w2_ref[...],
                           preferred_element_type=jnp.float32) + b2_ref[...]


def hsn_fused_call(x, hatt, H, dv_inv, dhe_inv, w1t, b1, w2t, b2):
    N, C = x.shape
    E = H.shape[1]
    F1 = N_WAVELETS * C
    F2 = N_WAVELETS * F1
    O = w2t.shape[1]
    vmem = pl.BlockSpec(memory_space=pltpu.MemorySpace.VMEM)
    return pl.pallas_call(
        _hsn_kernel,
        out_shape=(jax.ShapeDtypeStruct((N, O), jnp.float32),
                   jax.ShapeDtypeStruct((E, F2), jnp.float32)),
        in_specs=[vmem] * 9,
        out_specs=(vmem, vmem),
        scratch_shapes=[pltpu.VMEM((N, F1), jnp.float32),
                        pltpu.VMEM((E, F1), jnp.float32),
                        pltpu.VMEM((N, F2), jnp.float32)],
    )(x, hatt, H, dv_inv, dhe_inv, w1t, b1, w2t, b2)


# ----------------------------------------------------------------------------
# Glue (plain JAX): dense incidence, degree inverses, full HSN forward
# ----------------------------------------------------------------------------
def hsn_forward(params, x, hyperedge_index, hyperedge_weight, hyperedge_attr,
                num_nodes, num_edges):
    # TODO(synk): the PyTorch forward's python loop building `edge_batch` is only
    # used when pooling=='max'; pooling=None here so it is intentionally omitted.
    N, E = num_nodes, num_edges
    H = jnp.zeros((N, E), jnp.float32).at[
        hyperedge_index[0], hyperedge_index[1]].add(1.0)
    deg_v = H @ hyperedge_weight
    dv_inv = jnp.where(deg_v != 0, 1.0 / deg_v, 0.0).reshape(N, 1)
    deg_e = jnp.sum(H, axis=0)
    dhe_inv = jnp.where(deg_e != 0, 1.0 / deg_e, 0.0).reshape(E, 1)

    out, s2_e = hsn_fused_call(
        x, hyperedge_attr, H, dv_inv, dhe_inv,
        params["W1"].T, params["b1"].reshape(1, -1),
        params["W2"].T, params["b2"].reshape(1, -1))
    return out, s2_e


# pure-JAX reference (dense 6x17 wavelet matrix, same math as PyTorch) --------
def default_wavelet_matrix():
    W = jnp.zeros((N_WAVELETS, DIFFUSION_LEVELS + 1), jnp.float32)
    for i in range(len(SCALES) - 1):
        W = W.at[i, SCALES[i]].set(1.0).at[i, SCALES[i + 1]].set(-1.0)
    W = W.at[-1, -1].set(1.0)
    return W


def _ref_hsm(x, hatt, H, dv, dhe, W):
    node_levels = [x]
    edge_levels = [hatt]
    for _ in range(DIFFUSION_LEVELS):
        out = dv * node_levels[-1]
        out_edge = dhe * (H.T @ out)
        out_node = dv * (H @ (dhe * out_edge))
        node_levels.append(out_node)
        edge_levels.append(out_edge)
    dn = jnp.stack(node_levels)        # (17, N, F)
    de = jnp.stack(edge_levels)        # (17, E, F)
    cn = jnp.einsum('ij,jkl->ikl', W, dn)
    ce = jnp.einsum('ij,jkl->ikl', W, de)
    s_n = jnp.transpose(jnp.abs(cn), (1, 0, 2)).reshape(x.shape[0], -1)
    s_e = jnp.transpose(jnp.abs(ce), (1, 0, 2)).reshape(hatt.shape[0], -1)
    return s_n, s_e


if __name__ == "__main__":
    key = jax.random.PRNGKey(0)
    C, hidden_channels, out_channels = 4, 16, 3   # hidden_channels unused in forward
    N, E = 16, 8

    # deterministic hypergraph: each of the 8 hyperedges contains 4 nodes
    nodes, edges = [], []
    for e in range(E):
        for k in range(4):
            nodes.append((3 * e + k) % N)
            edges.append(e)
    hyperedge_index = jnp.array([nodes, edges], dtype=jnp.int32)   # (2, 32)

    k1, k2, k3, k4, k5, k6 = jax.random.split(key, 6)
    x = jax.random.normal(k1, (N, C), jnp.float32)
    hyperedge_attr = jax.random.normal(k2, (E, C), jnp.float32)
    hyperedge_weight = jnp.ones((E,), jnp.float32)

    d_final = 6 * 6 * C            # out_dimensions[-1] after two 'hsm' layers
    d_hidden = d_final // 2
    params = {
        "W1": jax.random.normal(k3, (d_hidden, d_final), jnp.float32) * 0.1,
        "b1": jax.random.normal(k4, (d_hidden,), jnp.float32) * 0.1,
        "W2": jax.random.normal(k5, (out_channels, d_hidden), jnp.float32) * 0.1,
        "b2": jax.random.normal(k6, (out_channels,), jnp.float32) * 0.1,
    }

    out, he_out = hsn_forward(params, x, hyperedge_index, hyperedge_weight,
                              hyperedge_attr, num_nodes=N, num_edges=E)
    out, he_out = jax.block_until_ready((out, he_out))

    # reference check against the dense wavelet-matrix formulation
    H = jnp.zeros((N, E), jnp.float32).at[
        hyperedge_index[0], hyperedge_index[1]].add(1.0)
    deg_v = H @ hyperedge_weight
    dv_inv = jnp.where(deg_v != 0, 1.0 / deg_v, 0.0).reshape(N, 1)
    deg_e = jnp.sum(H, axis=0)
    dhe_inv = jnp.where(deg_e != 0, 1.0 / deg_e, 0.0).reshape(E, 1)
    W = default_wavelet_matrix()
    r1n, r1e = _ref_hsm(x, hyperedge_attr, H, dv_inv, dhe_inv, W)
    r2n, r2e = _ref_hsm(r1n, r1e, H, dv_inv, dhe_inv, W)
    ref_out = jnp.maximum(r2n @ params["W1"].T + params["b1"], 0.0) \
        @ params["W2"].T + params["b2"]

    assert out.shape == (N, out_channels)
    assert he_out.shape == (E, d_final)
    assert jnp.allclose(out, ref_out, atol=1e-3, rtol=1e-3)
    assert jnp.allclose(he_out, r2e, atol=1e-3, rtol=1e-3)
    print("KERNEL_OK")
</pallas_src>

<mosaic_0001>
module attributes {stable_mosaic.version = 11 : i64} {
  func.func @_hsn_kernel(%arg0: memref<16x4xf32, #tpu.memory_space<vmem>>, %arg1: memref<8x4xf32, #tpu.memory_space<vmem>>, %arg2: memref<16x8xf32, #tpu.memory_space<vmem>>, %arg3: memref<16x1xf32, #tpu.memory_space<vmem>>, %arg4: memref<8x1xf32, #tpu.memory_space<vmem>>, %arg5: memref<144x72xf32, #tpu.memory_space<vmem>>, %arg6: memref<1x72xf32, #tpu.memory_space<vmem>>, %arg7: memref<72x3xf32, #tpu.memory_space<vmem>>, %arg8: memref<1x3xf32, #tpu.memory_space<vmem>>, %arg9: memref<16x3xf32, #tpu.memory_space<vmem>>, %arg10: memref<8x144xf32, #tpu.memory_space<vmem>>, %arg11: memref<16x24xf32, #tpu.memory_space<vmem>>, %arg12: memref<8x24xf32, #tpu.memory_space<vmem>>, %arg13: memref<16x144xf32, #tpu.memory_space<vmem>>) attributes {dimension_semantics = [], scalar_prefetch = 0 : i64, scratch_operands = 3 : i64, tpu.core_type = #tpu.core_type<tc>} {
    %c0 = arith.constant 0 : index
    %c0_0 = arith.constant 0 : index
    %0 = vector.load %arg2[%c0, %c0_0] : memref<16x8xf32, #tpu.memory_space<vmem>>, vector<16x8xf32>
    %c0_1 = arith.constant 0 : index
    %c0_2 = arith.constant 0 : index
    %1 = vector.load %arg3[%c0_1, %c0_2] : memref<16x1xf32, #tpu.memory_space<vmem>>, vector<16x1xf32>
    %c0_3 = arith.constant 0 : index
    %c0_4 = arith.constant 0 : index
    %2 = vector.load %arg4[%c0_3, %c0_4] : memref<8x1xf32, #tpu.memory_space<vmem>>, vector<8x1xf32>
    %3 = arith.mulf %2, %2 : vector<8x1xf32>
    %c0_5 = arith.constant 0 : index
    %c0_6 = arith.constant 0 : index
    %4 = vector.load %arg0[%c0_5, %c0_6] : memref<16x4xf32, #tpu.memory_space<vmem>>, vector<16x4xf32>
    %c0_7 = arith.constant 0 : index
    %c0_8 = arith.constant 0 : index
    %5 = vector.load %arg1[%c0_7, %c0_8] : memref<8x4xf32, #tpu.memory_space<vmem>>, vector<8x4xf32>
    %6 = vector.broadcast %1 : vector<16x1xf32> to vector<16x4xf32>
    %7 = arith.mulf %6, %4 : vector<16x4xf32>
    %cst = arith.constant dense<0.000000e+00> : vector<8x4xf32>
    %8 = tpu.matmul %0, %7, %cst {dimension_numbers = #tpu.dot_dimension_numbers<[0], [0], [1], [1], [0, 1, 1, 1], [], []>} : vector<16x8xf32>, vector<16x4xf32>, vector<8x4xf32> -> vector<8x4xf32>
    %9 = vector.broadcast %3 : vector<8x1xf32> to vector<8x4xf32>
    %10 = arith.mulf %9, %8 : vector<8x4xf32>
    %cst_9 = arith.constant dense<0.000000e+00> : vector<16x4xf32>
    %11 = tpu.matmul %0, %10, %cst_9 {dimension_numbers = #tpu.dot_dimension_numbers<[1], [0], [0], [1], [0, 0, 1, 1], [], []>} : vector<16x8xf32>, vector<8x4xf32>, vector<16x4xf32> -> vector<16x4xf32>
    %12 = vector.broadcast %1 : vector<16x1xf32> to vector<16x4xf32>
    %13 = arith.mulf %12, %11 : vector<16x4xf32>
    %14 = vector.broadcast %2 : vector<8x1xf32> to vector<8x4xf32>
    %15 = arith.mulf %14, %8 : vector<8x4xf32>
    %16 = arith.subf %4, %13 : vector<16x4xf32>
    %17 = math.absf %16 : vector<16x4xf32>
    %c0_10 = arith.constant 0 : index
    %c0_11 = arith.constant 0 : index
    %18 = vector.load %arg11[%c0_10, %c0_11] : memref<16x24xf32, #tpu.memory_space<vmem>>, vector<16x4xf32>
    tpu.vector_store %arg11[%c0_10, %c0_11], %17 {strides = array<i32>} : memref<16x24xf32, #tpu.memory_space<vmem>>, vector<16x4xf32>,
    %19 = arith.subf %5, %15 : vector<8x4xf32>
    %20 = math.absf %19 : vector<8x4xf32>
    %c0_12 = arith.constant 0 : index
    %c0_13 = arith.constant 0 : index
    %21 = vector.load %arg12[%c0_12, %c0_13] : memref<8x24xf32, #tpu.memory_space<vmem>>, vector<8x4xf32>
    tpu.vector_store %arg12[%c0_12, %c0_13], %20 {strides = array<i32>} : memref<8x24xf32, #tpu.memory_space<vmem>>, vector<8x4xf32>,
    %22 = vector.broadcast %1 : vector<16x1xf32> to vector<16x4xf32>
    %23 = arith.mulf %22, %13 : vector<16x4xf32>
    %cst_14 = arith.constant dense<0.000000e+00> : vector<8x4xf32>
    %24 = tpu.matmul %0, %23, %cst_14 {dimension_numbers = #tpu.dot_dimension_numbers<[0], [0], [1], [1], [0, 1, 1, 1], [], []>} : vector<16x8xf32>, vector<16x4xf32>, vector<8x4xf32> -> vector<8x4xf32>
    %25 = vector.broadcast %3 : vector<8x1xf32> to vector<8x4xf32>
    %26 = arith.mulf %25, %24 : vector<8x4xf32>
    %cst_15 = arith.constant dense<0.000000e+00> : vector<16x4xf32>
    %27 = tpu.matmul %0, %26, %cst_15 {dimension_numbers = #tpu.dot_dimension_numbers<[1], [0], [0], [1], [0, 0, 1, 1], [], []>} : vector<16x8xf32>, vector<8x4xf32>, vector<16x4xf32> -> vector<16x4xf32>
    %28 = vector.broadcast %1 : vector<16x1xf32> to vector<16x4xf32>
    %29 = arith.mulf %28, %27 : vector<16x4xf32>
    %30 = vector.broadcast %2 : vector<8x1xf32> to vector<8x4xf32>
    %31 = arith.mulf %30, %24 : vector<8x4xf32>
    %32 = arith.subf %13, %29 : vector<16x4xf32>
    %33 = math.absf %32 : vector<16x4xf32>
    %c0_16 = arith.constant 0 : index
    %c4 = arith.constant 4 : index
    %34 = vector.load %arg11[%c0_16, %c4] : memref<16x24xf32, #tpu.memory_space<vmem>>, vector<16x4xf32>
    tpu.vector_store %arg11[%c0_16, %c4], %33 {strides = array<i32>} : memref<16x24xf32, #tpu.memory_space<vmem>>, vector<16x4xf32>,
    %35 = arith.subf %15, %31 : vector<8x4xf32>
    %36 = math.absf %35 : vector<8x4xf32>
    %c0_17 = arith.constant 0 : index
    %c4_18 = arith.constant 4 : index
    %37 = vector.load %arg12[%c0_17, %c4_18] : memref<8x24xf32, #tpu.memory_space<vmem>>, vector<8x4xf32>
    tpu.vector_store %arg12[%c0_17, %c4_18], %36 {strides = array<i32>} : memref<8x24xf32, #tpu.memory_space<vmem>>, vector<8x4xf32>,
    %38 = vector.broadcast %1 : vector<16x1xf32> to vector<16x4xf32>
    %39 = arith.mulf %38, %29 : vector<16x4xf32>
    %cst_19 = arith.constant dense<0.000000e+00> : vector<8x4xf32>
    %40 = tpu.matmul %0, %39, %cst_19 {dimension_numbers = #tpu.dot_dimension_numbers<[0], [0], [1], [1], [0, 1, 1, 1], [], []>} : vector<16x8xf32>, vector<16x4xf32>, vector<8x4xf32> -> vector<8x4xf32>
    %41 = vector.broadcast %3 : vector<8x1xf32> to vector<8x4xf32>
    %42 = arith.mulf %41, %40 : vector<8x4xf32>
    %cst_20 = arith.constant dense<0.000000e+00> : vector<16x4xf32>
    %43 = tpu.matmul %0, %42, %cst_20 {dimension_numbers = #tpu.dot_dimension_numbers<[1], [0], [0], [1], [0, 0, 1, 1], [], []>} : vector<16x8xf32>, vector<8x4xf32>, vector<16x4xf32> -> vector<16x4xf32>
    %44 = vector.broadcast %1 : vector<16x1xf32> to vector<16x4xf32>
    %45 = arith.mulf %44, %43 : vector<16x4xf32>
    %46 = vector.broadcast %1 : vector<16x1xf32> to vector<16x4xf32>
    %47 = arith.mulf %46, %45 : vector<16x4xf32>
    %cst_21 = arith.constant dense<0.000000e+00> : vector<8x4xf32>
    %48 = tpu.matmul %0, %47, %cst_21 {dimension_numbers = #tpu.dot_dimension_numbers<[0], [0], [1], [1], [0, 1, 1, 1], [], []>} : vector<16x8xf32>, vector<16x4xf32>, vector<8x4xf32> -> vector<8x4xf32>
    %49 = vector.broadcast %3 : vector<8x1xf32> to vector<8x4xf32>
    %50 = arith.mulf %49, %48 : vector<8x4xf32>
    %cst_22 = arith.constant dense<0.000000e+00> : vector<16x4xf32>
    %51 = tpu.matmul %0, %50, %cst_22 {dimension_numbers = #tpu.dot_dimension_numbers<[1], [0], [0], [1], [0, 0, 1, 1], [], []>} : vector<16x8xf32>, vector<8x4xf32>, vector<16x4xf32> -> vector<16x4xf32>
    %52 = vector.broadcast %1 : vector<16x1xf32> to vector<16x4xf32>
    %53 = arith.mulf %52, %51 : vector<16x4xf32>
    %54 = vector.broadcast %2 : vector<8x1xf32> to vector<8x4xf32>
    %55 = arith.mulf %54, %48 : vector<8x4xf32>
    %56 = arith.subf %29, %53 : vector<16x4xf32>
    %57 = math.absf %56 : vector<16x4xf32>
    %c0_23 = arith.constant 0 : index
    %c8 = arith.constant 8 : index
    %58 = vector.load %arg11[%c0_23, %c8] : memref<16x24xf32, #tpu.memory_space<vmem>>, vector<16x4xf32>
    tpu.vector_store %arg11[%c0_23, %c8], %57 {strides = array<i32>} : memref<16x24xf32, #tpu.memory_space<vmem>>, vector<16x4xf32>,
    %59 = arith.subf %31, %55 : vector<8x4xf32>
    %60 = math.absf %59 : vector<8x4xf32>
    %c0_24 = arith.constant 0 : index
    %c8_25 = arith.constant 8 : index
    %61 = vector.load %arg12[%c0_24, %c8_25] : memref<8x24xf32, #tpu.memory_space<vmem>>, vector<8x4xf32>
    tpu.vector_store %arg12[%c0_24, %c8_25], %60 {strides = array<i32>} : memref<8x24xf32, #tpu.memory_space<vmem>>, vector<8x4xf32>,
    %62 = vector.broadcast %1 : vector<16x1xf32> to vector<16x4xf32>
    %63 = arith.mulf %62, %53 : vector<16x4xf32>
    %cst_26 = arith.constant dense<0.000000e+00> : vector<8x4xf32>
    %64 = tpu.matmul %0, %63, %cst_26 {dimension_numbers = #tpu.dot_dimension_numbers<[0], [0], [1], [1], [0, 1, 1, 1], [], []>} : vector<16x8xf32>, vector<16x4xf32>, vector<8x4xf32> -> vector<8x4xf32>
    %65 = vector.broadcast %3 : vector<8x1xf32> to vector<8x4xf32>
    %66 = arith.mulf %65, %64 : vector<8x4xf32>
    %cst_27 = arith.constant dense<0.000000e+00> : vector<16x4xf32>
    %67 = tpu.matmul %0, %66, %cst_27 {dimension_numbers = #tpu.dot_dimension_numbers<[1], [0], [0], [1], [0, 0, 1, 1], [], []>} : vector<16x8xf32>, vector<8x4xf32>, vector<16x4xf32> -> vector<16x4xf32>
    %68 = vector.broadcast %1 : vector<16x1xf32> to vector<16x4xf32>
    %69 = arith.mulf %68, %67 : vector<16x4xf32>
    %70 = vector.broadcast %1 : vector<16x1xf32> to vector<16x4xf32>
    %71 = arith.mulf %70, %69 : vector<16x4xf32>
    %cst_28 = arith.constant dense<0.000000e+00> : vector<8x4xf32>
    %72 = tpu.matmul %0, %71, %cst_28 {dimension_numbers = #tpu.dot_dimension_numbers<[0], [0], [1], [1], [0, 1, 1, 1], [], []>} : vector<16x8xf32>, vector<16x4xf32>, vector<8x4xf32> -> vector<8x4xf32>
    %73 = vector.broadcast %3 : vector<8x1xf32> to vector<8x4xf32>
    %74 = arith.mulf %73, %72 : vector<8x4xf32>
    %cst_29 = arith.constant dense<0.000000e+00> : vector<16x4xf32>
    %75 = tpu.matmul %0, %74, %cst_29 {dimension_numbers = #tpu.dot_dimension_numbers<[1], [0], [0], [1], [0, 0, 1, 1], [], []>} : vector<16x8xf32>, vector<8x4xf32>, vector<16x4xf32> -> vector<16x4xf32>
    %76 = vector.broadcast %1 : vector<16x1xf32> to vector<16x4xf32>
    %77 = arith.mulf %76, %75 : vector<16x4xf32>
    %78 = vector.broadcast %1 : vector<16x1xf32> to vector<16x4xf32>
    %79 = arith.mulf %78, %77 : vector<16x4xf32>
    %cst_30 = arith.constant dense<0.000000e+00> : vector<8x4xf32>
    %80 = tpu.matmul %0, %79, %cst_30 {dimension_numbers = #tpu.dot_dimension_numbers<[0], [0], [1], [1], [0, 1, 1, 1], [], []>} : vector<16x8xf32>, vector<16x4xf32>, vector<8x4xf32> -> vector<8x4xf32>
    %81 = vector.broadcast %3 : vector<8x1xf32> to vector<8x4xf32>
    %82 = arith.mulf %81, %80 : vector<8x4xf32>
    %cst_31 = arith.constant dense<0.000000e+00> : vector<16x4xf32>
    %83 = tpu.matmul %0, %82, %cst_31 {dimension_numbers = #tpu.dot_dimension_numbers<[1], [0], [0], [1], [0, 0, 1, 1], [], []>} : vector<16x8xf32>, vector<8x4xf32>, vector<16x4xf32> -> vector<16x4xf32>
    %84 = vector.broadcast %1 : vector<16x1xf32> to vector<16x4xf32>
    %85 = arith.mulf %84, %83 : vector<16x4xf32>
    %86 = vector.broadcast %1 : vector<16x1xf32> to vector<16x4xf32>
    %87 = arith.mulf %86, %85 : vector<16x4xf32>
    %cst_32 = arith.constant dense<0.000000e+00> : vector<8x4xf32>
    %88 = tpu.matmul %0, %87, %cst_32 {dimension_numbers = #tpu.dot_dimension_numbers<[0], [0], [1], [1], [0, 1, 1, 1], [], []>} : vector<16x8xf32>, vector<16x4xf32>, vector<8x4xf32> -> vector<8x4xf32>
    %89 = vector.broadcast %3 : vector<8x1xf32> to vector<8x4xf32>
    %90 = arith.mulf %89, %88 : vector<8x4xf32>
    %cst_33 = arith.constant dense<0.000000e+00> : vector<16x4xf32>
    %91 = tpu.matmul %0, %90, %cst_33 {dimension_numbers = #tpu.dot_dimension_numbers<[1], [0], [0], [1], [0, 0, 1, 1], [], []>} : vector<16x8xf32>, vector<8x4xf32>, vector<16x4xf32> -> vector<16x4xf32>
    %92 = vector.broadcast %1 : vector<16x1xf32> to vector<16x4xf32>
    %93 = arith.mulf %92, %91 : vector<16x4xf32>
    %94 = vector.broadcast %2 : vector<8x1xf32> to vector<8x4xf32>
    %95 = arith.mulf %94, %88 : vector<8x4xf32>
    %96 = arith.subf %53, %93 : vector<16x4xf32>
    %97 = math.absf %96 : vector<16x4xf32>
    %c0_34 = arith.constant 0 : index
    %c12 = arith.constant 12 : index
    %98 = vector.load %arg11[%c0_34, %c12] : memref<16x24xf32, #tpu.memory_space<vmem>>, vector<16x4xf32>
    tpu.vector_store %arg11[%c0_34, %c12], %97 {strides = array<i32>} : memref<16x24xf32, #tpu.memory_space<vmem>>, vector<16x4xf32>,
    %99 = arith.subf %55, %95 : vector<8x4xf32>
    %100 = math.absf %99 : vector<8x4xf32>
    %c0_35 = arith.constant 0 : index
    %c12_36 = arith.constant 12 : index
    %101 = vector.load %arg12[%c0_35, %c12_36] : memref<8x24xf32, #tpu.memory_space<vmem>>, vector<8x4xf32>
    tpu.vector_store %arg12[%c0_35, %c12_36], %100 {strides = array<i32>} : memref<8x24xf32, #tpu.memory_space<vmem>>, vector<8x4xf32>,
    %102 = vector.broadcast %1 : vector<16x1xf32> to vector<16x4xf32>
    %103 = arith.mulf %102, %93 : vector<16x4xf32>
    %cst_37 = arith.constant dense<0.000000e+00> : vector<8x4xf32>
    %104 = tpu.matmul %0, %103, %cst_37 {dimension_numbers = #tpu.dot_dimension_numbers<[0], [0], [1], [1], [0, 1, 1, 1], [], []>} : vector<16x8xf32>, vector<16x4xf32>, vector<8x4xf32> -> vector<8x4xf32>
    %105 = vector.broadcast %3 : vector<8x1xf32> to vector<8x4xf32>
    %106 = arith.mulf %105, %104 : vector<8x4xf32>
    %cst_38 = arith.constant dense<0.000000e+00> : vector<16x4xf32>
    %107 = tpu.matmul %0, %106, %cst_38 {dimension_numbers = #tpu.dot_dimension_numbers<[1], [0], [0], [1], [0, 0, 1, 1], [], []>} : vector<16x8xf32>, vector<8x4xf32>, vector<16x4xf32> -> vector<16x4xf32>
    %108 = vector.broadcast %1 : vector<16x1xf32> to vector<16x4xf32>
    %109 = arith.mulf %108, %107 : vector<16x4xf32>
    %110 = vector.broadcast %1 : vector<16x1xf32> to vector<16x4xf32>
    %111 = arith.mulf %110, %109 : vector<16x4xf32>
    %cst_39 = arith.constant dense<0.000000e+00> : vector<8x4xf32>
    %112 = tpu.matmul %0, %111, %cst_39 {dimension_numbers = #tpu.dot_dimension_numbers<[0], [0], [1], [1], [0, 1, 1, 1], [], []>} : vector<16x8xf32>, vector<16x4xf32>, vector<8x4xf32> -> vector<8x4xf32>
    %113 = vector.broadcast %3 : vector<8x1xf32> to vector<8x4xf32>
    %114 = arith.mulf %113, %112 : vector<8x4xf32>
    %cst_40 = arith.constant dense<0.000000e+00> : vector<16x4xf32>
    %115 = tpu.matmul %0, %114, %cst_40 {dimension_numbers = #tpu.dot_dimension_numbers<[1], [0], [0], [1], [0, 0, 1, 1], [], []>} : vector<16x8xf32>, vector<8x4xf32>, vector<16x4xf32> -> vector<16x4xf32>
    %116 = vector.broadcast %1 : vector<16x1xf32> to vector<16x4xf32>
    %117 = arith.mulf %116, %115 : vector<16x4xf32>
    %118 = vector.broadcast %1 : vector<16x1xf32> to vector<16x4xf32>
    %119 = arith.mulf %118, %117 : vector<16x4xf32>
    %cst_41 = arith.constant dense<0.000000e+00> : vector<8x4xf32>
    %120 = tpu.matmul %0, %119, %cst_41 {dimension_numbers = #tpu.dot_dimension_numbers<[0], [0], [1], [1], [0, 1, 1, 1], [], []>} : vector<16x8xf32>, vector<16x4xf32>, vector<8x4xf32> -> vector<8x4xf32>
    %121 = vector.broadcast %3 : vector<8x1xf32> to vector<8x4xf32>
    %122 = arith.mulf %121, %120 : vector<8x4xf32>
    %cst_42 = arith.constant dense<0.000000e+00> : vector<16x4xf32>
    %123 = tpu.matmul %0, %122, %cst_42 {dimension_numbers = #tpu.dot_dimension_numbers<[1], [0], [0], [1], [0, 0, 1, 1], [], []>} : vector<16x8xf32>, vector<8x4xf32>, vector<16x4xf32> -> vector<16x4xf32>
    %124 = vector.broadcast %1 : vector<16x1xf32> to vector<16x4xf32>
    %125 = arith.mulf %124, %123 : vector<16x4xf32>
    %126 = vector.broadcast %1 : vector<16x1xf32> to vector<16x4xf32>
    %127 = arith.mulf %126, %125 : vector<16x4xf32>
    %cst_43 = arith.constant dense<0.000000e+00> : vector<8x4xf32>
    %128 = tpu.matmul %0, %127, %cst_43 {dimension_numbers = #tpu.dot_dimension_numbers<[0], [0], [1], [1], [0, 1, 1, 1], [], []>} : vector<16x8xf32>, vector<16x4xf32>, vector<8x4xf32> -> vector<8x4xf32>
    %129 = vector.broadcast %3 : vector<8x1xf32> to vector<8x4xf32>
    %130 = arith.mulf %129, %128 : vector<8x4xf32>
    %cst_44 = arith.constant dense<0.000000e+00> : vector<16x4xf32>
    %131 = tpu.matmul %0, %130, %cst_44 {dimension_numbers = #tpu.dot_dimension_numbers<[1], [0], [0], [1], [0, 0, 1, 1], [], []>} : vector<16x8xf32>, vector<8x4xf32>, vector<16x4xf32> -> vector<16x4xf32>
    %132 = vector.broadcast %1 : vector<16x1xf32> to vector<16x4xf32>
    %133 = arith.mulf %132, %131 : vector<16x4xf32>
    %134 = vector.broadcast %1 : vector<16x1xf32> to vector<16x4xf32>
    %135 = arith.mulf %134, %133 : vector<16x4xf32>
    %cst_45 = arith.constant dense<0.000000e+00> : vector<8x4xf32>
    %136 = tpu.matmul %0, %135, %cst_45 {dimension_numbers = #tpu.dot_dimension_numbers<[0], [0], [1], [1], [0, 1, 1, 1], [], []>} : vector<16x8xf32>, vector<16x4xf32>, vector<8x4xf32> -> vector<8x4xf32>
    %137 = vector.broadcast %3 : vector<8x1xf32> to vector<8x4xf32>
    %138 = arith.mulf %137, %136 : vector<8x4xf32>
    %cst_46 = arith.constant dense<0.000000e+00> : vector<16x4xf32>
    %139 = tpu.matmul %0, %138, %cst_46 {dimension_numbers = #tpu.dot_dimension_numbers<[1], [0], [0], [1], [0, 0, 1, 1], [], []>} : vector<16x8xf32>, vector<8x4xf32>, vector<16x4xf32> -> vector<16x4xf32>
    %140 = vector.broadcast %1 : vector<16x1xf32> to vector<16x4xf32>
    %141 = arith.mulf %140, %139 : vector<16x4xf32>
    %142 = vector.broadcast %1 : vector<16x1xf32> to vector<16x4xf32>
    %143 = arith.mulf %142, %141 : vector<16x4xf32>
    %cst_47 = arith.constant dense<0.000000e+00> : vector<8x4xf32>
    %144 = tpu.matmul %0, %143, %cst_47 {dimension_numbers = #tpu.dot_dimension_numbers<[0], [0], [1], [1], [0, 1, 1, 1], [], []>} : vector<16x8xf32>, vector<16x4xf32>, vector<8x4xf32> -> vector<8x4xf32>
    %145 = vector.broadcast %3 : vector<8x1xf32> to vector<8x4xf32>
    %146 = arith.mulf %145, %144 : vector<8x4xf32>
    %cst_48 = arith.constant dense<0.000000e+00> : vector<16x4xf32>
    %147 = tpu.matmul %0, %146, %cst_48 {dimension_numbers = #tpu.dot_dimension_numbers<[1], [0], [0], [1], [0, 0, 1, 1], [], []>} : vector<16x8xf32>, vector<8x4xf32>, vector<16x4xf32> -> vector<16x4xf32>
    %148 = vector.broadcast %1 : vector<16x1xf32> to vector<16x4xf32>
    %149 = arith.mulf %148, %147 : vector<16x4xf32>
    %150 = vector.broadcast %1 : vector<16x1xf32> to vector<16x4xf32>
    %151 = arith.mulf %150, %149 : vector<16x4xf32>
    %cst_49 = arith.constant dense<0.000000e+00> : vector<8x4xf32>
    %152 = tpu.matmul %0, %151, %cst_49 {dimension_numbers = #tpu.dot_dimension_numbers<[0], [0], [1], [1], [0, 1, 1, 1], [], []>} : vector<16x8xf32>, vector<16x4xf32>, vector<8x4xf32> -> vector<8x4xf32>
    %153 = vector.broadcast %3 : vector<8x1xf32> to vector<8x4xf32>
    %154 = arith.mulf %153, %152 : vector<8x4xf32>
    %cst_50 = arith.constant dense<0.000000e+00> : vector<16x4xf32>
    %155 = tpu.matmul %0, %154, %cst_50 {dimension_numbers = #tpu.dot_dimension_numbers<[1], [0], [0], [1], [0, 0, 1, 1], [], []>} : vector<16x8xf32>, vector<8x4xf32>, vector<16x4xf32> -> vector<16x4xf32>
    %156 = vector.broadcast %1 : vector<16x1xf32> to vector<16x4xf32>
    %157 = arith.mulf %156, %155 : vector<16x4xf32>
    %158 = vector.broadcast %1 : vector<16x1xf32> to vector<16x4xf32>
    %159 = arith.mulf %158, %157 : vector<16x4xf32>
    %cst_51 = arith.constant dense<0.000000e+00> : vector<8x4xf32>
    %160 = tpu.matmul %0, %159, %cst_51 {dimension_numbers = #tpu.dot_dimension_numbers<[0], [0], [1], [1], [0, 1, 1, 1], [], []>} : vector<16x8xf32>, vector<16x4xf32>, vector<8x4xf32> -> vector<8x4xf32>
    %161 = vector.broadcast %3 : vector<8x1xf32> to vector<8x4xf32>
    %162 = arith.mulf %161, %160 : vector<8x4xf32>
    %cst_52 = arith.constant dense<0.000000e+00> : vector<16x4xf32>
    %163 = tpu.matmul %0, %162, %cst_52 {dimension_numbers = #tpu.dot_dimension_numbers<[1], [0], [0], [1], [0, 0, 1, 1], [], []>} : vector<16x8xf32>, vector<8x4xf32>, vector<16x4xf32> -> vector<16x4xf32>
    %164 = vector.broadcast %1 : vector<16x1xf32> to vector<16x4xf32>
    %165 = arith.mulf %164, %163 : vector<16x4xf32>
    %166 = vector.broadcast %2 : vector<8x1xf32> to vector<8x4xf32>
    %167 = arith.mulf %166, %160 : vector<8x4xf32>
    %168 = arith.subf %93, %165 : vector<16x4xf32>
    %169 = math.absf %168 : vector<16x4xf32>
    %c0_53 = arith.constant 0 : index
    %c16 = arith.constant 16 : index
    %170 = vector.load %arg11[%c0_53, %c16] : memref<16x24xf32, #tpu.memory_space<vmem>>, vector<16x4xf32>
    tpu.vector_store %arg11[%c0_53, %c16], %169 {strides = array<i32>} : memref<16x24xf32, #tpu.memory_space<vmem>>, vector<16x4xf32>,
    %171 = arith.subf %95, %167 : vector<8x4xf32>
    %172 = math.absf %171 : vector<8x4xf32>
    %c0_54 = arith.constant 0 : index
    %c16_55 = arith.constant 16 : index
    %173 = vector.load %arg12[%c0_54, %c16_55] : memref<8x24xf32, #tpu.memory_space<vmem>>, vector<8x4xf32>
    tpu.vector_store %arg12[%c0_54, %c16_55], %172 {strides = array<i32>} : memref<8x24xf32, #tpu.memory_space<vmem>>, vector<8x4xf32>,
    %174 = math.absf %165 : vector<16x4xf32>
    %c0_56 = arith.constant 0 : index
    %c20 = arith.constant 20 : index
    %175 = vector.load %arg11[%c0_56, %c20] : memref<16x24xf32, #tpu.memory_space<vmem>>, vector<16x4xf32>
    tpu.vector_store %arg11[%c0_56, %c20], %174 {strides = array<i32>} : memref<16x24xf32, #tpu.memory_space<vmem>>, vector<16x4xf32>,
    %176 = math.absf %167 : vector<8x4xf32>
    %c0_57 = arith.constant 0 : index
    %c20_58 = arith.constant 20 : index
    %177 = vector.load %arg12[%c0_57, %c20_58] : memref<8x24xf32, #tpu.memory_space<vmem>>, vector<8x4xf32>
    tpu.vector_store %arg12[%c0_57, %c20_58], %176 {strides = array<i32>} : memref<8x24xf32, #tpu.memory_space<vmem>>, vector<8x4xf32>,
    %c0_59 = arith.constant 0 : index
    %c0_60 = arith.constant 0 : index
    %178 = vector.load %arg11[%c0_59, %c0_60] : memref<16x24xf32, #tpu.memory_space<vmem>>, vector<16x24xf32>
    %c0_61 = arith.constant 0 : index
    %c0_62 = arith.constant 0 : index
    %179 = vector.load %arg12[%c0_61, %c0_62] : memref<8x24xf32, #tpu.memory_space<vmem>>, vector<8x24xf32>
    %180 = vector.broadcast %1 : vector<16x1xf32> to vector<16x24xf32>
    %181 = arith.mulf %180, %178 : vector<16x24xf32>
    %cst_63 = arith.constant dense<0.000000e+00> : vector<8x24xf32>
    %182 = tpu.matmul %0, %181, %cst_63 {dimension_numbers = #tpu.dot_dimension_numbers<[0], [0], [1], [1], [0, 1, 1, 1], [], []>} : vector<16x8xf32>, vector<16x24xf32>, vector<8x24xf32> -> vector<8x24xf32>
    %183 = vector.broadcast %3 : vector<8x1xf32> to vector<8x24xf32>
    %184 = arith.mulf %183, %182 : vector<8x24xf32>
    %cst_64 = arith.constant dense<0.000000e+00> : vector<16x24xf32>
    %185 = tpu.matmul %0, %184, %cst_64 {dimension_numbers = #tpu.dot_dimension_numbers<[1], [0], [0], [1], [0, 0, 1, 1], [], []>} : vector<16x8xf32>, vector<8x24xf32>, vector<16x24xf32> -> vector<16x24xf32>
    %186 = vector.broadcast %1 : vector<16x1xf32> to vector<16x24xf32>
    %187 = arith.mulf %186, %185 : vector<16x24xf32>
    %188 = vector.broadcast %2 : vector<8x1xf32> to vector<8x24xf32>
    %189 = arith.mulf %188, %182 : vector<8x24xf32>
    %190 = arith.subf %178, %187 : vector<16x24xf32>
    %191 = math.absf %190 : vector<16x24xf32>
    %c0_65 = arith.constant 0 : index
    %c0_66 = arith.constant 0 : index
    %192 = vector.load %arg13[%c0_65, %c0_66] : memref<16x144xf32, #tpu.memory_space<vmem>>, vector<16x24xf32>
    tpu.vector_store %arg13[%c0_65, %c0_66], %191 {strides = array<i32>} : memref<16x144xf32, #tpu.memory_space<vmem>>, vector<16x24xf32>,
    %193 = arith.subf %179, %189 : vector<8x24xf32>
    %194 = math.absf %193 : vector<8x24xf32>
    %c0_67 = arith.constant 0 : index
    %c0_68 = arith.constant 0 : index
    %195 = vector.load %arg10[%c0_67, %c0_68] : memref<8x144xf32, #tpu.memory_space<vmem>>, vector<8x24xf32>
    tpu.vector_store %arg10[%c0_67, %c0_68], %194 {strides = array<i32>} : memref<8x144xf32, #tpu.memory_space<vmem>>, vector<8x24xf32>,
    %196 = vector.broadcast %1 : vector<16x1xf32> to vector<16x24xf32>
    %197 = arith.mulf %196, %187 : vector<16x24xf32>
    %cst_69 = arith.constant dense<0.000000e+00> : vector<8x24xf32>
    %198 = tpu.matmul %0, %197, %cst_69 {dimension_numbers = #tpu.dot_dimension_numbers<[0], [0], [1], [1], [0, 1, 1, 1], [], []>} : vector<16x8xf32>, vector<16x24xf32>, vector<8x24xf32> -> vector<8x24xf32>
    %199 = vector.broadcast %3 : vector<8x1xf32> to vector<8x24xf32>
    %200 = arith.mulf %199, %198 : vector<8x24xf32>
    %cst_70 = arith.constant dense<0.000000e+00> : vector<16x24xf32>
    %201 = tpu.matmul %0, %200, %cst_70 {dimension_numbers = #tpu.dot_dimension_numbers<[1], [0], [0], [1], [0, 0, 1, 1], [], []>} : vector<16x8xf32>, vector<8x24xf32>, vector<16x24xf32> -> vector<16x24xf32>
    %202 = vector.broadcast %1 : vector<16x1xf32> to vector<16x24xf32>
    %203 = arith.mulf %202, %201 : vector<16x24xf32>
    %204 = vector.broadcast %2 : vector<8x1xf32> to vector<8x24xf32>
    %205 = arith.mulf %204, %198 : vector<8x24xf32>
    %206 = arith.subf %187, %203 : vector<16x24xf32>
    %207 = math.absf %206 : vector<16x24xf32>
    %c0_71 = arith.constant 0 : index
    %c24 = arith.constant 24 : index
    %208 = vector.load %arg13[%c0_71, %c24] : memref<16x144xf32, #tpu.memory_space<vmem>>, vector<16x24xf32>
    tpu.vector_store %arg13[%c0_71, %c24], %207 {strides = array<i32>} : memref<16x144xf32, #tpu.memory_space<vmem>>, vector<16x24xf32>,
    %209 = arith.subf %189, %205 : vector<8x24xf32>
    %210 = math.absf %209 : vector<8x24xf32>
    %c0_72 = arith.constant 0 : index
    %c24_73 = arith.constant 24 : index
    %211 = vector.load %arg10[%c0_72, %c24_73] : memref<8x144xf32, #tpu.memory_space<vmem>>, vector<8x24xf32>
    tpu.vector_store %arg10[%c0_72, %c24_73], %210 {strides = array<i32>} : memref<8x144xf32, #tpu.memory_space<vmem>>, vector<8x24xf32>,
    %212 = vector.broadcast %1 : vector<16x1xf32> to vector<16x24xf32>
    %213 = arith.mulf %212, %203 : vector<16x24xf32>
    %cst_74 = arith.constant dense<0.000000e+00> : vector<8x24xf32>
    %214 = tpu.matmul %0, %213, %cst_74 {dimension_numbers = #tpu.dot_dimension_numbers<[0], [0], [1], [1], [0, 1, 1, 1], [], []>} : vector<16x8xf32>, vector<16x24xf32>, vector<8x24xf32> -> vector<8x24xf32>
    %215 = vector.broadcast %3 : vector<8x1xf32> to vector<8x24xf32>
    %216 = arith.mulf %215, %214 : vector<8x24xf32>
    %cst_75 = arith.constant dense<0.000000e+00> : vector<16x24xf32>
    %217 = tpu.matmul %0, %216, %cst_75 {dimension_numbers = #tpu.dot_dimension_numbers<[1], [0], [0], [1], [0, 0, 1, 1], [], []>} : vector<16x8xf32>, vector<8x24xf32>, vector<16x24xf32> -> vector<16x24xf32>
    %218 = vector.broadcast %1 : vector<16x1xf32> to vector<16x24xf32>
    %219 = arith.mulf %218, %217 : vector<16x24xf32>
    %220 = vector.broadcast %1 : vector<16x1xf32> to vector<16x24xf32>
    %221 = arith.mulf %220, %219 : vector<16x24xf32>
    %cst_76 = arith.constant dense<0.000000e+00> : vector<8x24xf32>
    %222 = tpu.matmul %0, %221, %cst_76 {dimension_numbers = #tpu.dot_dimension_numbers<[0], [0], [1], [1], [0, 1, 1, 1], [], []>} : vector<16x8xf32>, vector<16x24xf32>, vector<8x24xf32> -> vector<8x24xf32>
    %223 = vector.broadcast %3 : vector<8x1xf32> to vector<8x24xf32>
    %224 = arith.mulf %223, %222 : vector<8x24xf32>
    %cst_77 = arith.constant dense<0.000000e+00> : vector<16x24xf32>
    %225 = tpu.matmul %0, %224, %cst_77 {dimension_numbers = #tpu.dot_dimension_numbers<[1], [0], [0], [1], [0, 0, 1, 1], [], []>} : vector<16x8xf32>, vector<8x24xf32>, vector<16x24xf32> -> vector<16x24xf32>
    %226 = vector.broadcast %1 : vector<16x1xf32> to vector<16x24xf32>
    %227 = arith.mulf %226, %225 : vector<16x24xf32>
    %228 = vector.broadcast %2 : vector<8x1xf32> to vector<8x24xf32>
    %229 = arith.mulf %228, %222 : vector<8x24xf32>
    %230 = arith.subf %203, %227 : vector<16x24xf32>
    %231 = math.absf %230 : vector<16x24xf32>
    %c0_78 = arith.constant 0 : index
    %c48 = arith.constant 48 : index
    %232 = vector.load %arg13[%c0_78, %c48] : memref<16x144xf32, #tpu.memory_space<vmem>>, vector<16x24xf32>
    tpu.vector_store %arg13[%c0_78, %c48], %231 {strides = array<i32>} : memref<16x144xf32, #tpu.memory_space<vmem>>, vector<16x24xf32>,
    %233 = arith.subf %205, %229 : vector<8x24xf32>
    %234 = math.absf %233 : vector<8x24xf32>
    %c0_79 = arith.constant 0 : index
    %c48_80 = arith.constant 48 : index
    %235 = vector.load %arg10[%c0_79, %c48_80] : memref<8x144xf32, #tpu.memory_space<vmem>>, vector<8x24xf32>
    tpu.vector_store %arg10[%c0_79, %c48_80], %234 {strides = array<i32>} : memref<8x144xf32, #tpu.memory_space<vmem>>, vector<8x24xf32>,
    %236 = vector.broadcast %1 : vector<16x1xf32> to vector<16x24xf32>
    %237 = arith.mulf %236, %227 : vector<16x24xf32>
    %cst_81 = arith.constant dense<0.000000e+00> : vector<8x24xf32>
    %238 = tpu.matmul %0, %237, %cst_81 {dimension_numbers = #tpu.dot_dimension_numbers<[0], [0], [1], [1], [0, 1, 1, 1], [], []>} : vector<16x8xf32>, vector<16x24xf32>, vector<8x24xf32> -> vector<8x24xf32>
    %239 = vector.broadcast %3 : vector<8x1xf32> to vector<8x24xf32>
    %240 = arith.mulf %239, %238 : vector<8x24xf32>
    %cst_82 = arith.constant dense<0.000000e+00> : vector<16x24xf32>
    %241 = tpu.matmul %0, %240, %cst_82 {dimension_numbers = #tpu.dot_dimension_numbers<[1], [0], [0], [1], [0, 0, 1, 1], [], []>} : vector<16x8xf32>, vector<8x24xf32>, vector<16x24xf32> -> vector<16x24xf32>
    %242 = vector.broadcast %1 : vector<16x1xf32> to vector<16x24xf32>
    %243 = arith.mulf %242, %241 : vector<16x24xf32>
    %244 = vector.broadcast %1 : vector<16x1xf32> to vector<16x24xf32>
    %245 = arith.mulf %244, %243 : vector<16x24xf32>
    %cst_83 = arith.constant dense<0.000000e+00> : vector<8x24xf32>
    %246 = tpu.matmul %0, %245, %cst_83 {dimension_numbers = #tpu.dot_dimension_numbers<[0], [0], [1], [1], [0, 1, 1, 1], [], []>} : vector<16x8xf32>, vector<16x24xf32>, vector<8x24xf32> -> vector<8x24xf32>
    %247 = vector.broadcast %3 : vector<8x1xf32> to vector<8x24xf32>
    %248 = arith.mulf %247, %246 : vector<8x24xf32>
    %cst_84 = arith.constant dense<0.000000e+00> : vector<16x24xf32>
    %249 = tpu.matmul %0, %248, %cst_84 {dimension_numbers = #tpu.dot_dimension_numbers<[1], [0], [0], [1], [0, 0, 1, 1], [], []>} : vector<16x8xf32>, vector<8x24xf32>, vector<16x24xf32> -> vector<16x24xf32>
    %250 = vector.broadcast %1 : vector<16x1xf32> to vector<16x24xf32>
    %251 = arith.mulf %250, %249 : vector<16x24xf32>
    %252 = vector.broadcast %1 : vector<16x1xf32> to vector<16x24xf32>
    %253 = arith.mulf %252, %251 : vector<16x24xf32>
    %cst_85 = arith.constant dense<0.000000e+00> : vector<8x24xf32>
    %254 = tpu.matmul %0, %253, %cst_85 {dimension_numbers = #tpu.dot_dimension_numbers<[0], [0], [1], [1], [0, 1, 1, 1], [], []>} : vector<16x8xf32>, vector<16x24xf32>, vector<8x24xf32> -> vector<8x24xf32>
    %255 = vector.broadcast %3 : vector<8x1xf32> to vector<8x24xf32>
    %256 = arith.mulf %255, %254 : vector<8x24xf32>
    %cst_86 = arith.constant dense<0.000000e+00> : vector<16x24xf32>
    %257 = tpu.matmul %0, %256, %cst_86 {dimension_numbers = #tpu.dot_dimension_numbers<[1], [0], [0], [1], [0, 0, 1, 1], [], []>} : vector<16x8xf32>, vector<8x24xf32>, vector<16x24xf32> -> vector<16x24xf32>
    %258 = vector.broadcast %1 : vector<16x1xf32> to vector<16x24xf32>
    %259 = arith.mulf %258, %257 : vector<16x24xf32>
    %260 = vector.broadcast %1 : vector<16x1xf32> to vector<16x24xf32>
    %261 = arith.mulf %260, %259 : vector<16x24xf32>
    %cst_87 = arith.constant dense<0.000000e+00> : vector<8x24xf32>
    %262 = tpu.matmul %0, %261, %cst_87 {dimension_numbers = #tpu.dot_dimension_numbers<[0], [0], [1], [1], [0, 1, 1, 1], [], []>} : vector<16x8xf32>, vector<16x24xf32>, vector<8x24xf32> -> vector<8x24xf32>
    %263 = vector.broadcast %3 : vector<8x1xf32> to vector<8x24xf32>
    %264 = arith.mulf %263, %262 : vector<8x24xf32>
    %cst_88 = arith.constant dense<0.000000e+00> : vector<16x24xf32>
    %265 = tpu.matmul %0, %264, %cst_88 {dimension_numbers = #tpu.dot_dimension_numbers<[1], [0], [0], [1], [0, 0, 1, 1], [], []>} : vector<16x8xf32>, vector<8x24xf32>, vector<16x24xf32> -> vector<16x24xf32>
    %266 = vector.broadcast %1 : vector<16x1xf32> to vector<16x24xf32>
    %267 = arith.mulf %266, %265 : vector<16x24xf32>
    %268 = vector.broadcast %2 : vector<8x1xf32> to vector<8x24xf32>
    %269 = arith.mulf %268, %262 : vector<8x24xf32>
    %270 = arith.subf %227, %267 : vector<16x24xf32>
    %271 = math.absf %270 : vector<16x24xf32>
    %c0_89 = arith.constant 0 : index
    %c72 = arith.constant 72 : index
    %272 = vector.load %arg13[%c0_89, %c72] : memref<16x144xf32, #tpu.memory_space<vmem>>, vector<16x24xf32>
    tpu.vector_store %arg13[%c0_89, %c72], %271 {strides = array<i32>} : memref<16x144xf32, #tpu.memory_space<vmem>>, vector<16x24xf32>,
    %273 = arith.subf %229, %269 : vector<8x24xf32>
    %274 = math.absf %273 : vector<8x24xf32>
    %c0_90 = arith.constant 0 : index
    %c72_91 = arith.constant 72 : index
    %275 = vector.load %arg10[%c0_90, %c72_91] : memref<8x144xf32, #tpu.memory_space<vmem>>, vector<8x24xf32>
    tpu.vector_store %arg10[%c0_90, %c72_91], %274 {strides = array<i32>} : memref<8x144xf32, #tpu.memory_space<vmem>>, vector<8x24xf32>,
    %276 = vector.broadcast %1 : vector<16x1xf32> to vector<16x24xf32>
    %277 = arith.mulf %276, %267 : vector<16x24xf32>
    %cst_92 = arith.constant dense<0.000000e+00> : vector<8x24xf32>
    %278 = tpu.matmul %0, %277, %cst_92 {dimension_numbers = #tpu.dot_dimension_numbers<[0], [0], [1], [1], [0, 1, 1, 1], [], []>} : vector<16x8xf32>, vector<16x24xf32>, vector<8x24xf32> -> vector<8x24xf32>
    %279 = vector.broadcast %3 : vector<8x1xf32> to vector<8x24xf32>
    %280 = arith.mulf %279, %278 : vector<8x24xf32>
    %cst_93 = arith.constant dense<0.000000e+00> : vector<16x24xf32>
    %281 = tpu.matmul %0, %280, %cst_93 {dimension_numbers = #tpu.dot_dimension_numbers<[1], [0], [0], [1], [0, 0, 1, 1], [], []>} : vector<16x8xf32>, vector<8x24xf32>, vector<16x24xf32> -> vector<16x24xf32>
    %282 = vector.broadcast %1 : vector<16x1xf32> to vector<16x24xf32>
    %283 = arith.mulf %282, %281 : vector<16x24xf32>
    %284 = vector.broadcast %1 : vector<16x1xf32> to vector<16x24xf32>
    %285 = arith.mulf %284, %283 : vector<16x24xf32>
    %cst_94 = arith.constant dense<0.000000e+00> : vector<8x24xf32>
    %286 = tpu.matmul %0, %285, %cst_94 {dimension_numbers = #tpu.dot_dimension_numbers<[0], [0], [1], [1], [0, 1, 1, 1], [], []>} : vector<16x8xf32>, vector<16x24xf32>, vector<8x24xf32> -> vector<8x24xf32>
    %287 = vector.broadcast %3 : vector<8x1xf32> to vector<8x24xf32>
    %288 = arith.mulf %287, %286 : vector<8x24xf32>
    %cst_95 = arith.constant dense<0.000000e+00> : vector<16x24xf32>
    %289 = tpu.matmul %0, %288, %cst_95 {dimension_numbers = #tpu.dot_dimension_numbers<[1], [0], [0], [1], [0, 0, 1, 1], [], []>} : vector<16x8xf32>, vector<8x24xf32>, vector<16x24xf32> -> vector<16x24xf32>
    %290 = vector.broadcast %1 : vector<16x1xf32> to vector<16x24xf32>
    %291 = arith.mulf %290, %289 : vector<16x24xf32>
    %292 = vector.broadcast %1 : vector<16x1xf32> to vector<16x24xf32>
    %293 = arith.mulf %292, %291 : vector<16x24xf32>
    %cst_96 = arith.constant dense<0.000000e+00> : vector<8x24xf32>
    %294 = tpu.matmul %0, %293, %cst_96 {dimension_numbers = #tpu.dot_dimension_numbers<[0], [0], [1], [1], [0, 1, 1, 1], [], []>} : vector<16x8xf32>, vector<16x24xf32>, vector<8x24xf32> -> vector<8x24xf32>
    %295 = vector.broadcast %3 : vector<8x1xf32> to vector<8x24xf32>
    %296 = arith.mulf %295, %294 : vector<8x24xf32>
    %cst_97 = arith.constant dense<0.000000e+00> : vector<16x24xf32>
    %297 = tpu.matmul %0, %296, %cst_97 {dimension_numbers = #tpu.dot_dimension_numbers<[1], [0], [0], [1], [0, 0, 1, 1], [], []>} : vector<16x8xf32>, vector<8x24xf32>, vector<16x24xf32> -> vector<16x24xf32>
    %298 = vector.broadcast %1 : vector<16x1xf32> to vector<16x24xf32>
    %299 = arith.mulf %298, %297 : vector<16x24xf32>
    %300 = vector.broadcast %1 : vector<16x1xf32> to vector<16x24xf32>
    %301 = arith.mulf %300, %299 : vector<16x24xf32>
    %cst_98 = arith.constant dense<0.000000e+00> : vector<8x24xf32>
    %302 = tpu.matmul %0, %301, %cst_98 {dimension_numbers = #tpu.dot_dimension_numbers<[0], [0], [1], [1], [0, 1, 1, 1], [], []>} : vector<16x8xf32>, vector<16x24xf32>, vector<8x24xf32> -> vector<8x24xf32>
    %303 = vector.broadcast %3 : vector<8x1xf32> to vector<8x24xf32>
    %304 = arith.mulf %303, %302 : vector<8x24xf32>
    %cst_99 = arith.constant dense<0.000000e+00> : vector<16x24xf32>
    %305 = tpu.matmul %0, %304, %cst_99 {dimension_numbers = #tpu.dot_dimension_numbers<[1], [0], [0], [1], [0, 0, 1, 1], [], []>} : vector<16x8xf32>, vector<8x24xf32>, vector<16x24xf32> -> vector<16x24xf32>
    %306 = vector.broadcast %1 : vector<16x1xf32> to vector<16x24xf32>
    %307 = arith.mulf %306, %305 : vector<16x24xf32>
    %308 = vector.broadcast %1 : vector<16x1xf32> to vector<16x24xf32>
    %309 = arith.mulf %308, %307 : vector<16x24xf32>
    %cst_100 = arith.constant dense<0.000000e+00> : vector<8x24xf32>
    %310 = tpu.matmul %0, %309, %cst_100 {dimension_numbers = #tpu.dot_dimension_numbers<[0], [0], [1], [1], [0, 1, 1, 1], [], []>} : vector<16x8xf32>, vector<16x24xf32>, vector<8x24xf32> -> vector<8x24xf32>
    %311 = vector.broadcast %3 : vector<8x1xf32> to vector<8x24xf32>
    %312 = arith.mulf %311, %310 : vector<8x24xf32>
    %cst_101 = arith.constant dense<0.000000e+00> : vector<16x24xf32>
    %313 = tpu.matmul %0, %312, %cst_101 {dimension_numbers = #tpu.dot_dimension_numbers<[1], [0], [0], [1], [0, 0, 1, 1], [], []>} : vector<16x8xf32>, vector<8x24xf32>, vector<16x24xf32> -> vector<16x24xf32>
    %314 = vector.broadcast %1 : vector<16x1xf32> to vector<16x24xf32>
    %315 = arith.mulf %314, %313 : vector<16x24xf32>
    %316 = vector.broadcast %1 : vector<16x1xf32> to vector<16x24xf32>
    %317 = arith.mulf %316, %315 : vector<16x24xf32>
    %cst_102 = arith.constant dense<0.000000e+00> : vector<8x24xf32>
    %318 = tpu.matmul %0, %317, %cst_102 {dimension_numbers = #tpu.dot_dimension_numbers<[0], [0], [1], [1], [0, 1, 1, 1], [], []>} : vector<16x8xf32>, vector<16x24xf32>, vector<8x24xf32> -> vector<8x24xf32>
    %319 = vector.broadcast %3 : vector<8x1xf32> to vector<8x24xf32>
    %320 = arith.mulf %319, %318 : vector<8x24xf32>
    %cst_103 = arith.constant dense<0.000000e+00> : vector<16x24xf32>
    %321 = tpu.matmul %0, %320, %cst_103 {dimension_numbers = #tpu.dot_dimension_numbers<[1], [0], [0], [1], [0, 0, 1, 1], [], []>} : vector<16x8xf32>, vector<8x24xf32>, vector<16x24xf32> -> vector<16x24xf32>
    %322 = vector.broadcast %1 : vector<16x1xf32> to vector<16x24xf32>
    %323 = arith.mulf %322, %321 : vector<16x24xf32>
    %324 = vector.broadcast %1 : vector<16x1xf32> to vector<16x24xf32>
    %325 = arith.mulf %324, %323 : vector<16x24xf32>
    %cst_104 = arith.constant dense<0.000000e+00> : vector<8x24xf32>
    %326 = tpu.matmul %0, %325, %cst_104 {dimension_numbers = #tpu.dot_dimension_numbers<[0], [0], [1], [1], [0, 1, 1, 1], [], []>} : vector<16x8xf32>, vector<16x24xf32>, vector<8x24xf32> -> vector<8x24xf32>
    %327 = vector.broadcast %3 : vector<8x1xf32> to vector<8x24xf32>
    %328 = arith.mulf %327, %326 : vector<8x24xf32>
    %cst_105 = arith.constant dense<0.000000e+00> : vector<16x24xf32>
    %329 = tpu.matmul %0, %328, %cst_105 {dimension_numbers = #tpu.dot_dimension_numbers<[1], [0], [0], [1], [0, 0, 1, 1], [], []>} : vector<16x8xf32>, vector<8x24xf32>, vector<16x24xf32> -> vector<16x24xf32>
    %330 = vector.broadcast %1 : vector<16x1xf32> to vector<16x24xf32>
    %331 = arith.mulf %330, %329 : vector<16x24xf32>
    %332 = vector.broadcast %1 : vector<16x1xf32> to vector<16x24xf32>
    %333 = arith.mulf %332, %331 : vector<16x24xf32>
    %cst_106 = arith.constant dense<0.000000e+00> : vector<8x24xf32>
    %334 = tpu.matmul %0, %333, %cst_106 {dimension_numbers = #tpu.dot_dimension_numbers<[0], [0], [1], [1], [0, 1, 1, 1], [], []>} : vector<16x8xf32>, vector<16x24xf32>, vector<8x24xf32> -> vector<8x24xf32>
    %335 = vector.broadcast %3 : vector<8x1xf32> to vector<8x24xf32>
    %336 = arith.mulf %335, %334 : vector<8x24xf32>
    %cst_107 = arith.constant dense<0.000000e+00> : vector<16x24xf32>
    %337 = tpu.matmul %0, %336, %cst_107 {dimension_numbers = #tpu.dot_dimension_numbers<[1], [0], [0], [1], [0, 0, 1, 1], [], []>} : vector<16x8xf32>, vector<8x24xf32>, vector<16x24xf32> -> vector<16x24xf32>
    %338 = vector.broadcast %1 : vector<16x1xf32> to vector<16x24xf32>
    %339 = arith.mulf %338, %337 : vector<16x24xf32>
    %340 = vector.broadcast %2 : vector<8x1xf32> to vector<8x24xf32>
    %341 = arith.mulf %340, %334 : vector<8x24xf32>
    %342 = arith.subf %267, %339 : vector<16x24xf32>
    %343 = math.absf %342 : vector<16x24xf32>
    %c0_108 = arith.constant 0 : index
    %c96 = arith.constant 96 : index
    %344 = vector.load %arg13[%c0_108, %c96] : memref<16x144xf32, #tpu.memory_space<vmem>>, vector<16x24xf32>
    tpu.vector_store %arg13[%c0_108, %c96], %343 {strides = array<i32>} : memref<16x144xf32, #tpu.memory_space<vmem>>, vector<16x24xf32>,
    %345 = arith.subf %269, %341 : vector<8x24xf32>
    %346 = math.absf %345 : vector<8x24xf32>
    %c0_109 = arith.constant 0 : index
    %c96_110 = arith.constant 96 : index
    %347 = vector.load %arg10[%c0_109, %c96_110] : memref<8x144xf32, #tpu.memory_space<vmem>>, vector<8x24xf32>
    tpu.vector_store %arg10[%c0_109, %c96_110], %346 {strides = array<i32>} : memref<8x144xf32, #tpu.memory_space<vmem>>, vector<8x24xf32>,
    %348 = math.absf %339 : vector<16x24xf32>
    %c0_111 = arith.constant 0 : index
    %c120 = arith.constant 120 : index
    %349 = vector.load %arg13[%c0_111, %c120] : memref<16x144xf32, #tpu.memory_space<vmem>>, vector<16x24xf32>
    tpu.vector_store %arg13[%c0_111, %c120], %348 {strides = array<i32>} : memref<16x144xf32, #tpu.memory_space<vmem>>, vector<16x24xf32>,
    %350 = math.absf %341 : vector<8x24xf32>
    %c0_112 = arith.constant 0 : index
    %c120_113 = arith.constant 120 : index
    %351 = vector.load %arg10[%c0_112, %c120_113] : memref<8x144xf32, #tpu.memory_space<vmem>>, vector<8x24xf32>
    tpu.vector_store %arg10[%c0_112, %c120_113], %350 {strides = array<i32>} : memref<8x144xf32, #tpu.memory_space<vmem>>, vector<8x24xf32>,
    %c0_114 = arith.constant 0 : index
    %c0_115 = arith.constant 0 : index
    %352 = vector.load %arg13[%c0_114, %c0_115] : memref<16x144xf32, #tpu.memory_space<vmem>>, vector<16x144xf32>
    %c0_116 = arith.constant 0 : index
    %c0_117 = arith.constant 0 : index
    %353 = vector.load %arg5[%c0_116, %c0_117] : memref<144x72xf32, #tpu.memory_space<vmem>>, vector<144x72xf32>
    %cst_118 = arith.constant dense<0.000000e+00> : vector<16x72xf32>
    %354 = tpu.matmul %352, %353, %cst_118 {dimension_numbers = #tpu.dot_dimension_numbers<[1], [0], [0], [1], [0, 0, 1, 1], [], []>} : vector<16x144xf32>, vector<144x72xf32>, vector<16x72xf32> -> vector<16x72xf32>
    %c0_119 = arith.constant 0 : index
    %c0_120 = arith.constant 0 : index
    %355 = vector.load %arg6[%c0_119, %c0_120] : memref<1x72xf32, #tpu.memory_space<vmem>>, vector<1x72xf32>
    %356 = vector.broadcast %355 : vector<1x72xf32> to vector<16x72xf32>
    %357 = arith.addf %354, %356 : vector<16x72xf32>
    %cst_121 = arith.constant 0.000000e+00 : f32
    %358 = vector.broadcast %cst_121 : f32 to vector<16x72xf32>
    %359 = arith.maximumf %357, %358 : vector<16x72xf32>
    %c0_122 = arith.constant 0 : index
    %c0_123 = arith.constant 0 : index
    %360 = vector.load %arg7[%c0_122, %c0_123] : memref<72x3xf32, #tpu.memory_space<vmem>>, vector<72x3xf32>
    %cst_124 = arith.constant dense<0.000000e+00> : vector<16x3xf32>
    %361 = tpu.matmul %359, %360, %cst_124 {dimension_numbers = #tpu.dot_dimension_numbers<[1], [0], [0], [1], [0, 0, 1, 1], [], []>} : vector<16x72xf32>, vector<72x3xf32>, vector<16x3xf32> -> vector<16x3xf32>
    %c0_125 = arith.constant 0 : index
    %c0_126 = arith.constant 0 : index
    %362 = vector.load %arg8[%c0_125, %c0_126] : memref<1x3xf32, #tpu.memory_space<vmem>>, vector<1x3xf32>
    %363 = vector.broadcast %362 : vector<1x3xf32> to vector<16x3xf32>
    %364 = arith.addf %361, %363 : vector<16x3xf32>
    %c0_127 = arith.constant 0 : index
    %c0_128 = arith.constant 0 : index
    %365 = vector.load %arg9[%c0_127, %c0_128] : memref<16x3xf32, #tpu.memory_space<vmem>>, vector<16x3xf32>
    tpu.vector_store %arg9[%c0_127, %c0_128], %364 {strides = array<i32>} : memref<16x3xf32, #tpu.memory_space<vmem>>, vector<16x3xf32>,
    return
  }
}

</mosaic_0001>

<llo_original>
// kernel: tpu_custom_call.1
$region0: #{tpu_custom_call.1}
  #allocation0 [shape = 'u32[]', space=smem, size = 0x4, offset = 0x4, fixed_abs, tag = 'smem constant byte address 0x4 - core index']
  #allocation1 [shape = 'u32[144,128]{1,0:T(1,128)}', space=vmem, size = 0x12000, scoped, tag = 'internal scratch']
  #allocation2 [shape = 'f32[16,24]{1,0:T(8,128)}', space=vmem, size = 0x2000, scoped, tag = 'scratch operand']
  #allocation3 [shape = 'f32[8,24]{1,0:T(8,128)}', space=vmem, size = 0x1000, scoped, tag = 'scratch operand']
  #allocation4 [shape = 'f32[16,144]{1,0:T(8,128)}', space=vmem, size = 0x4000, scoped, tag = 'scratch operand']
  %s0 = inlined_call_operand.vmem [shape: f32[16,4], index: 0, kind: input, shape index: {}]
  %s1 = inlined_call_operand.vmem [shape: f32[8,4], index: 1, kind: input, shape index: {}]
  %s2 = inlined_call_operand.vmem [shape: f32[16,8], index: 2, kind: input, shape index: {}]
  %s3 = inlined_call_operand.vmem [shape: f32[16,1], index: 3, kind: input, shape index: {}]
  %s4 = inlined_call_operand.vmem [shape: f32[8,1], index: 4, kind: input, shape index: {}]
  %s5 = inlined_call_operand.vmem [shape: f32[144,72], index: 5, kind: input, shape index: {}]
  %s6 = inlined_call_operand.vmem [shape: f32[1,72], index: 6, kind: input, shape index: {}]
  %s7 = inlined_call_operand.vmem [shape: f32[72,3], index: 7, kind: input, shape index: {}]
  %s8 = inlined_call_operand.vmem [shape: f32[1,3], index: 8, kind: input, shape index: {}]
  %s9 = inlined_call_operand.vmem [shape: f32[16,3], index: 9, kind: output, shape index: {0}]
  %s10 = inlined_call_operand.hbm [shape: f32[8,144], index: 10, kind: output, shape index: {1}]
  %11 = xla_tuple %s9, %s10
  %s12 = sld [smem:[#allocation0]]
  $region54: #{tpu_custom_call.1} parent=0
    _
  %s14 = ssub.s32 1, %s12
  %s15 = scalar_select 0, %s14, %s12
  $region1: #{tpu_custom_call.1} parent=0
    #allocation5 [shape = 'u8[8192]{0}', space=vmem, size = 0x2000, scoped, tag = 'output window, operand 1, single buffered']
    #allocation6 [shape = 's32[1]{0}', space=sflag, size = 0x4, scoped, tag = 'scoped memory for tpu_custom_call.1']
    %16 = vsyncpa [#allocation6], 0
    // Predicated region
    $region2: #{tpu_custom_call.1} parent=1 // pred_check
      _
    $region3: #{tpu_custom_call.1} parent=1 // pred_check_branch
      %18 = sbr.rel (0) target = $region5
    $region4: #{tpu_custom_call.1} parent=1 // pred_region
      _
    $region5: #{tpu_custom_call.1} parent=1 // pred_fallthru
      _
    // Predicated region
    $region6: #{tpu_custom_call.1} parent=1 // pred_check
      _
    $region7: #{tpu_custom_call.1} parent=1 // pred_check_branch
      %20 = sbr.rel (0) target = $region9
    $region8: #{tpu_custom_call.1} parent=1 // pred_region
      _
    $region9: #{tpu_custom_call.1} parent=1 // pred_fallthru
      _
    // Predicated region
    $region10: #{tpu_custom_call.1} parent=1 // pred_check
      _
    $region11: #{tpu_custom_call.1} parent=1 // pred_check_branch
      %22 = sbr.rel (0) target = $region13
    $region12: #{tpu_custom_call.1} parent=1 // pred_region
      _
    $region13: #{tpu_custom_call.1} parent=1 // pred_fallthru
      _
    // Predicated region
    $region14: #{tpu_custom_call.1} parent=1 // pred_check
      _
    $region15: #{tpu_custom_call.1} parent=1 // pred_check_branch
      %24 = sbr.rel (0) target = $region17
    $region16: #{tpu_custom_call.1} parent=1 // pred_region
      _
    $region17: #{tpu_custom_call.1} parent=1 // pred_fallthru
      _
    // Predicated region
    $region18: #{tpu_custom_call.1} parent=1 // pred_check
      _
    $region19: #{tpu_custom_call.1} parent=1 // pred_check_branch
      %26 = sbr.rel (0) target = $region21
    $region20: #{tpu_custom_call.1} parent=1 // pred_region
      _
    $region21: #{tpu_custom_call.1} parent=1 // pred_fallthru
      _
    // Predicated region
    $region22: #{tpu_custom_call.1} parent=1 // pred_check
      _
    $region23: #{tpu_custom_call.1} parent=1 // pred_check_branch
      %28 = sbr.rel (0) target = $region25
    $region24: #{tpu_custom_call.1} parent=1 // pred_region
      _
    $region25: #{tpu_custom_call.1} parent=1 // pred_fallthru
      _
    // Predicated region
    $region26: #{tpu_custom_call.1} parent=1 // pred_check
      _
    $region27: #{tpu_custom_call.1} parent=1 // pred_check_branch
      %30 = sbr.rel (0) target = $region29
    $region28: #{tpu_custom_call.1} parent=1 // pred_region
      _
    $region29: #{tpu_custom_call.1} parent=1 // pred_fallthru
      _
    // Predicated region
    $region30: #{tpu_custom_call.1} parent=1 // pred_check
      _
    $region31: #{tpu_custom_call.1} parent=1 // pred_check_branch
      %32 = sbr.rel (0) target = $region33
    $region32: #{tpu_custom_call.1} parent=1 // pred_region
      _
    $region33: #{tpu_custom_call.1} parent=1 // pred_fallthru
      _
    // Predicated region
    $region34: #{tpu_custom_call.1} parent=1 // pred_check
      _
    $region35: #{tpu_custom_call.1} parent=1 // pred_check_branch
      %34 = sbr.rel (0) target = $region37
    $region36: #{tpu_custom_call.1} parent=1 // pred_region
      _
    $region37: #{tpu_custom_call.1} parent=1 // pred_fallthru
      _
    %v35 = vld [vmem:[%s2] sm:$0xff]
    %v36 = vld [vmem:[%s2 + $0x8] sm:$0xff]
    %v37 = vld [vmem:[%s3] sm:$0xff]
    %v38 = vld [vmem:[%s3 + $0x8] sm:$0xff]
    %v39 = vld [vmem:[%s4] sm:$0xff]
    %v40 = vmul.f32 %v39, %v39
    %v41 = vld [vmem:[%s0] sm:$0xff]
    %v42 = vld [vmem:[%s0 + $0x8] sm:$0xff]
    %v43 = vld [vmem:[%s1] sm:$0xff]
    %45 = vset.pattern.permute.xlu0 0
    %46 = vperm.xlu0 %45, %v37
    %v47 = vpop.permute.xlu0 %46
    %50 = vset.pattern.permute.xlu0 0
    %51 = vperm.xlu0 %50, %v38
    %v52 = vpop.permute.xlu0 %51
    %v54 = vmul.f32 %v47, %v41
    %v55 = vmul.f32 %v52, %v42
    %56 = vxpose.xlu0.b32.start [1/16] %v35, 128
    %57 = vxpose.xlu0.b32.cont [2/16] %v36, 128
    %58 = vxpose.xlu0.b32.cont [3/16] 0.0, 128
    %59 = vxpose.xlu0.b32.cont [4/16] 0.0, 128
    %60 = vxpose.xlu0.b32.cont [5/16] 0.0, 128
    %61 = vxpose.xlu0.b32.cont [6/16] 0.0, 128
    %62 = vxpose.xlu0.b32.cont [7/16] 0.0, 128
    %63 = vxpose.xlu0.b32.cont [8/16] 0.0, 128
    %64 = vxpose.xlu0.b32.cont [9/16] 0.0, 128
    %65 = vxpose.xlu0.b32.cont [10/16] 0.0, 128
    %66 = vxpose.xlu0.b32.cont [11/16] 0.0, 128
    %67 = vxpose.xlu0.b32.cont [12/16] 0.0, 128
    %68 = vxpose.xlu0.b32.cont [13/16] 0.0, 128
    %69 = vxpose.xlu0.b32.cont [14/16] 0.0, 128
    %70 = vxpose.xlu0.b32.cont [15/16] 0.0, 128
    %71 = vxpose.xlu0.b32.end [16/16] 0.0, 128
    %v72 = vpop.trf.xlu0
    %v73 = vpop.trf.xlu0
    %v74 = vpop.trf.xlu0
    %v75 = vpop.trf.xlu0
    %v76 = vpop.trf.xlu0
    %v77 = vpop.trf.xlu0
    %v78 = vpop.trf.xlu0
    %v79 = vpop.trf.xlu0
    %v80 = vpop.trf.xlu0
    %v81 = vpop.trf.xlu0
    %v82 = vpop.trf.xlu0
    %v83 = vpop.trf.xlu0
    %v84 = vpop.trf.xlu0
    %v85 = vpop.trf.xlu0
    %v86 = vpop.trf.xlu0
    %v87 = vpop.trf.xlu0
    %vm88 = vcmask 130048
    %v90 = vsel %vm88, %v72, 0
    %92 = vmatprep.subr.mxu0 0.0
    %93 = vmatpush1.msra.mxu0 %v54
    %94 = vmatprep.subr.mxu0 0.0
    %95 = vmatpush1.msra.mxu0 %v55
    %96 = vmatprep.subr.mxu0 0.0
    %97 = vmatpush1.msra.mxu0 0.0
    %98 = vmatprep.subr.mxu0 0.0
    %99 = vmatpush1.msra.mxu0 0.0
    %100 = vmatprep.subr.mxu0 0.0
    %101 = vmatpush1.msra.mxu0 0.0
    %102 = vmatprep.subr.mxu0 0.0
    %103 = vmatpush1.msra.mxu0 0.0
    %104 = vmatprep.subr.mxu0 0.0
    %105 = vmatpush1.msra.mxu0 0.0
    %106 = vmatprep.subr.mxu0 0.0
    %107 = vmatpush1.msra.mxu0 0.0
    %108 = vmatprep.subr.mxu0 0.0
    %109 = vmatpush1.msra.mxu0 0.0
    %110 = vmatprep.subr.mxu0 0.0
    %111 = vmatpush1.msra.mxu0 0.0
    %112 = vmatprep.subr.mxu0 0.0
    %113 = vmatpush1.msra.mxu0 0.0
    %114 = vmatprep.subr.mxu0 0.0
    %115 = vmatpush1.msra.mxu0 0.0
    %116 = vmatprep.subr.mxu0 0.0
    %117 = vmatpush1.msra.mxu0 0.0
    %118 = vmatprep.subr.mxu0 0.0
    %119 = vmatpush1.msra.mxu0 0.0
    %120 = vmatprep.subr.mxu0 0.0
    %121 = vmatpush1.msra.mxu0 0.0
    %122 = vmatprep.subr.mxu0 0.0
    %123 = vmatpush1.msra.mxu0 0.0
    %124 = vmatprep.subr.mxu0 0.0
    %125 = vmatpush1.msra.mxu0 0.0
    %126 = vmatprep.subr.mxu0 0.0
    %127 = vmatpush1.msra.mxu0 0.0
    %128 = vmatprep.subr.mxu0 0.0
    %129 = vmatpush1.msra.mxu0 0.0
    %130 = vmatprep.subr.mxu0 0.0
    %131 = vmatpush1.msra.mxu0 0.0
    %132 = vmatprep.subr.mxu0 0.0
    %133 = vmatpush1.msra.mxu0 0.0
    %134 = vmatprep.subr.mxu0 0.0
    %135 = vmatpush1.msra.mxu0 0.0
    %136 = vmatprep.subr.mxu0 0.0
    %137 = vmatpush1.msra.mxu0 0.0
    %138 = vmatprep.subr.mxu0 0.0
    %139 = vmatpush1.msra.mxu0 0.0
    %140 = vmatprep.subr.mxu0 0.0
    %141 = vmatpush1.msra.mxu0 0.0
    %142 = vmatprep.subr.mxu0 0.0
    %143 = vmatpush1.msra.mxu0 0.0
    %144 = vmatprep.subr.mxu0 0.0
    %145 = vmatpush1.msra.mxu0 0.0
    %146 = vmatprep.subr.mxu0 0.0
    %147 = vmatpush1.msra.mxu0 0.0
    %148 = vmatprep.subr.mxu0 0.0
    %149 = vmatpush1.msra.mxu0 0.0
    %150 = vmatprep.subr.mxu0 0.0
    %151 = vmatpush1.msra.mxu0 0.0
    %152 = vmatprep.subr.mxu0 0.0
    %153 = vmatpush1.msra.mxu0 0.0
    %154 = vmatprep.subr.mxu0 0.0
    %155 = vmatpush1.msra.mxu0 0.0
    %156 = vmatprep.mubr.f32.mxu0 0.0
    %157 = vmatmul.mubr.f32.gmra.mrb[0].mxu0 %v90
    %v158 = vpop.f32.mrb[0].mxu0
    %v159 = vadd.f32 0.0, %v158
    %v160 = vpop.f32.mrb[0].mxu0
    %161 = vdwg.mxu0
    %163 = vset.pattern.permute.xlu0 0
    %164 = vperm.xlu0 %163, %v40
    %v165 = vpop.permute.xlu0 %164
    %v167 = vmul.f32 %v165, %v159
    %vm168 = vcmask 64512
    %v170 = vsel %vm168, %v35, 0
    %v173 = vsel %vm168, %v36, 0
    %175 = vmatprep.subr.mxu0 0.0
    %176 = vmatpush1.msra.mxu0 %v167
    %177 = vmatprep.subr.mxu0 0.0
    %178 = vmatpush1.msra.mxu0 0.0
    %179 = vmatprep.subr.mxu0 0.0
    %180 = vmatpush1.msra.mxu0 0.0
    %181 = vmatprep.subr.mxu0 0.0
    %182 = vmatpush1.msra.mxu0 0.0
    %183 = vmatprep.subr.mxu0 0.0
    %184 = vmatpush1.msra.mxu0 0.0
    %185 = vmatprep.subr.mxu0 0.0
    %186 = vmatpush1.msra.mxu0 0.0
    %187 = vmatprep.subr.mxu0 0.0
    %188 = vmatpush1.msra.mxu0 0.0
    %189 = vmatprep.subr.mxu0 0.0
    %190 = vmatpush1.msra.mxu0 0.0
    %191 = vmatprep.subr.mxu0 0.0
    %192 = vmatpush1.msra.mxu0 0.0
    %193 = vmatprep.subr.mxu0 0.0
    %194 = vmatpush1.msra.mxu0 0.0
    %195 = vmatprep.subr.mxu0 0.0
    %196 = vmatpush1.msra.mxu0 0.0
    %197 = vmatprep.subr.mxu0 0.0
    %198 = vmatpush1.msra.mxu0 0.0
    %199 = vmatprep.subr.mxu0 0.0
    %200 = vmatpush1.msra.mxu0 0.0
    %201 = vmatprep.subr.mxu0 0.0
    %202 = vmatpush1.msra.mxu0 0.0
    %203 = vmatprep.subr.mxu0 0.0
    %204 = vmatpush1.msra.mxu0 0.0
    %205 = vmatprep.subr.mxu0 0.0
    %206 = vmatpush1.msra.mxu0 0.0
    %207 = vmatprep.subr.mxu0 0.0
    %208 = vmatpush1.msra.mxu0 0.0
    %209 = vmatprep.subr.mxu0 0.0
    %210 = vmatpush1.msra.mxu0 0.0
    %211 = vmatprep.subr.mxu0 0.0
    %212 = vmatpush1.msra.mxu0 0.0
    %213 = vmatprep.subr.mxu0 0.0
    %214 = vmatpush1.msra.mxu0 0.0
    %215 = vmatprep.subr.mxu0 0.0
    %216 = vmatpush1.msra.mxu0 0.0
    %217 = vmatprep.subr.mxu0 0.0
    %218 = vmatpush1.msra.mxu0 0.0
    %219 = vmatprep.subr.mxu0 0.0
    %220 = vmatpush1.msra.mxu0 0.0
    %221 = vmatprep.subr.mxu0 0.0
    %222 = vmatpush1.msra.mxu0 0.0
    %223 = vmatprep.subr.mxu0 0.0
    %224 = vmatpush1.msra.mxu0 0.0
    %225 = vmatprep.subr.mxu0 0.0
    %226 = vmatpush1.msra.mxu0 0.0
    %227 = vmatprep.subr.mxu0 0.0
    %228 = vmatpush1.msra.mxu0 0.0
    %229 = vmatprep.subr.mxu0 0.0
    %230 = vmatpush1.msra.mxu0 0.0
    %231 = vmatprep.subr.mxu0 0.0
    %232 = vmatpush1.msra.mxu0 0.0
    %233 = vmatprep.subr.mxu0 0.0
    %234 = vmatpush1.msra.mxu0 0.0
    %235 = vmatprep.subr.mxu0 0.0
    %236 = vmatpush1.msra.mxu0 0.0
    %237 = vmatprep.subr.mxu0 0.0
    %238 = vmatpush1.msra.mxu0 0.0
    %239 = vmatprep.mubr.f32.mxu0 0.0
    %240 = vmatmul.mubr.f32.gmra.mrb[0].mxu0 %v170
    %v241 = vpop.f32.mrb[0].mxu0
    %v242 = vadd.f32 0.0, %v241
    %v243 = vpop.f32.mrb[0].mxu0
    %244 = vmatprep.mubr.f32.mxu0 0.0
    %245 = vmatmul.mubr.f32.gmra.mrb[0].mxu0 %v173
    %v246 = vpop.f32.mrb[0].mxu0
    %v247 = vadd.f32 0.0, %v246
    %v248 = vpop.f32.mrb[0].mxu0
    %249 = vdwg.mxu0
    %v250 = vmul.f32 %v47, %v242
    %v251 = vmul.f32 %v52, %v247
    %253 = vset.pattern.permute.xlu0 0
    %254 = vperm.xlu0 %253, %v39
    %v255 = vpop.permute.xlu0 %254
    %v257 = vmul.f32 %v255, %v159
    %v258 = vsub.f32 %v41, %v250
    %v259 = vsub.f32 %v42, %v251
    %v260 = vand.u32 2147483647, %v258
    %v261 = vand.u32 2147483647, %v259
    %vm262 = vcmask 31744
    %263 = vst.msk [vmem:[#allocation2] sm:$0xff] %vm262, %v260
    %264 = vst.msk [vmem:[#allocation2 + $0x8] sm:$0xff] %vm262, %v261
    %v265 = vsub.f32 %v43, %v257
    %v266 = vand.u32 2147483647, %v265
    %267 = vst.msk [vmem:[#allocation3] sm:$0xff] %vm262, %v266
    %v268 = vmul.f32 %v47, %v250
    %v269 = vmul.f32 %v52, %v251
    %270 = vmatprep.subr.mxu0 0.0
    %271 = vmatpush1.msra.mxu0 %v268
    %272 = vmatprep.subr.mxu0 0.0
    %273 = vmatpush1.msra.mxu0 %v269
    %274 = vmatprep.subr.mxu0 0.0
    %275 = vmatpush1.msra.mxu0 0.0
    %276 = vmatprep.subr.mxu0 0.0
    %277 = vmatpush1.msra.mxu0 0.0
    %278 = vmatprep.subr.mxu0 0.0
    %279 = vmatpush1.msra.mxu0 0.0
    %280 = vmatprep.subr.mxu0 0.0
    %281 = vmatpush1.msra.mxu0 0.0
    %282 = vmatprep.subr.mxu0 0.0
    %283 = vmatpush1.msra.mxu0 0.0
    %284 = vmatprep.subr.mxu0 0.0
    %285 = vmatpush1.msra.mxu0 0.0
    %286 = vmatprep.subr.mxu0 0.0
    %287 = vmatpush1.msra.mxu0 0.0
    %288 = vmatprep.subr.mxu0 0.0
    %289 = vmatpush1.msra.mxu0 0.0
    %290 = vmatprep.subr.mxu0 0.0
    %291 = vmatpush1.msra.mxu0 0.0
    %292 = vmatprep.subr.mxu0 0.0
    %293 = vmatpush1.msra.mxu0 0.0
    %294 = vmatprep.subr.mxu0 0.0
    %295 = vmatpush1.msra.mxu0 0.0
    %296 = vmatprep.subr.mxu0 0.0
    %297 = vmatpush1.msra.mxu0 0.0
    %298 = vmatprep.subr.mxu0 0.0
    %299 = vmatpush1.msra.mxu0 0.0
    %300 = vmatprep.subr.mxu0 0.0
    %301 = vmatpush1.msra.mxu0 0.0
    %302 = vmatprep.subr.mxu0 0.0
    %303 = vmatpush1.msra.mxu0 0.0
    %304 = vmatprep.subr.mxu0 0.0
    %305 = vmatpush1.msra.mxu0 0.0
    %306 = vmatprep.subr.mxu0 0.0
    %307 = vmatpush1.msra.mxu0 0.0
    %308 = vmatprep.subr.mxu0 0.0
    %309 = vmatpush1.msra.mxu0 0.0
    %310 = vmatprep.subr.mxu0 0.0
    %311 = vmatpush1.msra.mxu0 0.0
    %312 = vmatprep.subr.mxu0 0.0
    %313 = vmatpush1.msra.mxu0 0.0
    %314 = vmatprep.subr.mxu0 0.0
    %315 = vmatpush1.msra.mxu0 0.0
    %316 = vmatprep.subr.mxu0 0.0
    %317 = vmatpush1.msra.mxu0 0.0
    %318 = vmatprep.subr.mxu0 0.0
    %319 = vmatpush1.msra.mxu0 0.0
    %320 = vmatprep.subr.mxu0 0.0
    %321 = vmatpush1.msra.mxu0 0.0
    %322 = vmatprep.subr.mxu0 0.0
    %323 = vmatpush1.msra.mxu0 0.0
    %324 = vmatprep.subr.mxu0 0.0
    %325 = vmatpush1.msra.mxu0 0.0
    %326 = vmatprep.subr.mxu0 0.0
    %327 = vmatpush1.msra.mxu0 0.0
    %328 = vmatprep.subr.mxu0 0.0
    %329 = vmatpush1.msra.mxu0 0.0
    %330 = vmatprep.subr.mxu0 0.0
    %331 = vmatpush1.msra.mxu0 0.0
    %332 = vmatprep.subr.mxu0 0.0
    %333 = vmatpush1.msra.mxu0 0.0
    %334 = vmatprep.mubr.f32.mxu0 0.0
    %335 = vmatmul.mubr.f32.gmra.mrb[0].mxu0 %v90
    %v336 = vpop.f32.mrb[0].mxu0
    %v337 = vadd.f32 0.0, %v336
    %v338 = vpop.f32.mrb[0].mxu0
    %339 = vdwg.mxu0
    %v340 = vmul.f32 %v165, %v337
    %341 = vmatprep.subr.mxu0 0.0
    %342 = vmatpush1.msra.mxu0 %v340
    %343 = vmatprep.subr.mxu0 0.0
    %344 = vmatpush1.msra.mxu0 0.0
    %345 = vmatprep.subr.mxu0 0.0
    %346 = vmatpush1.msra.mxu0 0.0
    %347 = vmatprep.subr.mxu0 0.0
    %348 = vmatpush1.msra.mxu0 0.0
    %349 = vmatprep.subr.mxu0 0.0
    %350 = vmatpush1.msra.mxu0 0.0
    %351 = vmatprep.subr.mxu0 0.0
    %352 = vmatpush1.msra.mxu0 0.0
    %353 = vmatprep.subr.mxu0 0.0
    %354 = vmatpush1.msra.mxu0 0.0
    %355 = vmatprep.subr.mxu0 0.0
    %356 = vmatpush1.msra.mxu0 0.0
    %357 = vmatprep.subr.mxu0 0.0
    %358 = vmatpush1.msra.mxu0 0.0
    %359 = vmatprep.subr.mxu0 0.0
    %360 = vmatpush1.msra.mxu0 0.0
    %361 = vmatprep.subr.mxu0 0.0
    %362 = vmatpush1.msra.mxu0 0.0
    %363 = vmatprep.subr.mxu0 0.0
    %364 = vmatpush1.msra.mxu0 0.0
    %365 = vmatprep.subr.mxu0 0.0
    %366 = vmatpush1.msra.mxu0 0.0
    %367 = vmatprep.subr.mxu0 0.0
    %368 = vmatpush1.msra.mxu0 0.0
    %369 = vmatprep.subr.mxu0 0.0
    %370 = vmatpush1.msra.mxu0 0.0
    %371 = vmatprep.subr.mxu0 0.0
    %372 = vmatpush1.msra.mxu0 0.0
    %373 = vmatprep.subr.mxu0 0.0
    %374 = vmatpush1.msra.mxu0 0.0
    %375 = vmatprep.subr.mxu0 0.0
    %376 = vmatpush1.msra.mxu0 0.0
    %377 = vmatprep.subr.mxu0 0.0
    %378 = vmatpush1.msra.mxu0 0.0
    %379 = vmatprep.subr.mxu0 0.0
    %380 = vmatpush1.msra.mxu0 0.0
    %381 = vmatprep.subr.mxu0 0.0
    %382 = vmatpush1.msra.mxu0 0.0
    %383 = vmatprep.subr.mxu0 0.0
    %384 = vmatpush1.msra.mxu0 0.0
    %385 = vmatprep.subr.mxu0 0.0
    %386 = vmatpush1.msra.mxu0 0.0
    %387 = vmatprep.subr.mxu0 0.0
    %388 = vmatpush1.msra.mxu0 0.0
    %389 = vmatprep.subr.mxu0 0.0
    %390 = vmatpush1.msra.mxu0 0.0
    %391 = vmatprep.subr.mxu0 0.0
    %392 = vmatpush1.msra.mxu0 0.0
    %393 = vmatprep.subr.mxu0 0.0
    %394 = vmatpush1.msra.mxu0 0.0
    %395 = vmatprep.subr.mxu0 0.0
    %396 = vmatpush1.msra.mxu0 0.0
    %397 = vmatprep.subr.mxu0 0.0
    %398 = vmatpush1.msra.mxu0 0.0
    %399 = vmatprep.subr.mxu0 0.0
    %400 = vmatpush1.msra.mxu0 0.0
    %401 = vmatprep.subr.mxu0 0.0
    %402 = vmatpush1.msra.mxu0 0.0
    %403 = vmatprep.subr.mxu0 0.0
    %404 = vmatpush1.msra.mxu0 0.0
    %405 = vmatprep.mubr.f32.mxu0 0.0
    %406 = vmatmul.mubr.f32.gmra.mrb[0].mxu0 %v170
    %v407 = vpop.f32.mrb[0].mxu0
    %v408 = vadd.f32 0.0, %v407
    %v409 = vpop.f32.mrb[0].mxu0
    %410 = vmatprep.mubr.f32.mxu0 0.0
    %411 = vmatmul.mubr.f32.gmra.mrb[0].mxu0 %v173
    %v412 = vpop.f32.mrb[0].mxu0
    %v413 = vadd.f32 0.0, %v412
    %v414 = vpop.f32.mrb[0].mxu0
    %415 = vdwg.mxu0
    %v416 = vmul.f32 %v47, %v408
    %v417 = vmul.f32 %v52, %v413
    %v418 = vmul.f32 %v255, %v337
    %v419 = vsub.f32 %v250, %v416
    %v420 = vsub.f32 %v251, %v417
    %v421 = vand.u32 2147483647, %v419
    %v422 = vand.u32 2147483647, %v420
    %425 = vrot.lane.b32.xlu0 %v421, 4
    %v426 = vpop.permute.xlu0 %425
    %427 = vrot.lane.b32.xlu0 %v422, 4
    %v428 = vpop.permute.xlu0 %427
    %vm431 = vcmask 64544
    %432 = vst.msk [vmem:[#allocation2] sm:$0xff] %vm431, %v426
    %433 = vst.msk [vmem:[#allocation2 + $0x8] sm:$0xff] %vm431, %v428
    %v434 = vsub.f32 %v257, %v418
    %v435 = vand.u32 2147483647, %v434
    %437 = vrot.lane.b32.xlu0 %v435, 4
    %v438 = vpop.permute.xlu0 %437
    %440 = vst.msk [vmem:[#allocation3] sm:$0xff] %vm431, %v438
    %v441 = vmul.f32 %v47, %v416
    %v442 = vmul.f32 %v52, %v417
    %443 = vmatprep.subr.mxu0 0.0
    %444 = vmatpush1.msra.mxu0 %v441
    %445 = vmatprep.subr.mxu0 0.0
    %446 = vmatpush1.msra.mxu0 %v442
    %447 = vmatprep.subr.mxu0 0.0
    %448 = vmatpush1.msra.mxu0 0.0
    %449 = vmatprep.subr.mxu0 0.0
    %450 = vmatpush1.msra.mxu0 0.0
    %451 = vmatprep.subr.mxu0 0.0
    %452 = vmatpush1.msra.mxu0 0.0
    %453 = vmatprep.subr.mxu0 0.0
    %454 = vmatpush1.msra.mxu0 0.0
    %455 = vmatprep.subr.mxu0 0.0
    %456 = vmatpush1.msra.mxu0 0.0
    %457 = vmatprep.subr.mxu0 0.0
    %458 = vmatpush1.msra.mxu0 0.0
    %459 = vmatprep.subr.mxu0 0.0
    %460 = vmatpush1.msra.mxu0 0.0
    %461 = vmatprep.subr.mxu0 0.0
    %462 = vmatpush1.msra.mxu0 0.0
    %463 = vmatprep.subr.mxu0 0.0
    %464 = vmatpush1.msra.mxu0 0.0
    %465 = vmatprep.subr.mxu0 0.0
    %466 = vmatpush1.msra.mxu0 0.0
    %467 = vmatprep.subr.mxu0 0.0
    %468 = vmatpush1.msra.mxu0 0.0
    %469 = vmatprep.subr.mxu0 0.0
    %470 = vmatpush1.msra.mxu0 0.0
    %471 = vmatprep.subr.mxu0 0.0
    %472 = vmatpush1.msra.mxu0 0.0
    %473 = vmatprep.subr.mxu0 0.0
    %474 = vmatpush1.msra.mxu0 0.0
    %475 = vmatprep.subr.mxu0 0.0
    %476 = vmatpush1.msra.mxu0 0.0
    %477 = vmatprep.subr.mxu0 0.0
    %478 = vmatpush1.msra.mxu0 0.0
    %479 = vmatprep.subr.mxu0 0.0
    %480 = vmatpush1.msra.mxu0 0.0
    %481 = vmatprep.subr.mxu0 0.0
    %482 = vmatpush1.msra.mxu0 0.0
    %483 = vmatprep.subr.mxu0 0.0
    %484 = vmatpush1.msra.mxu0 0.0
    %485 = vmatprep.subr.mxu0 0.0
    %486 = vmatpush1.msra.mxu0 0.0
    %487 = vmatprep.subr.mxu0 0.0
    %488 = vmatpush1.msra.mxu0 0.0
    %489 = vmatprep.subr.mxu0 0.0
    %490 = vmatpush1.msra.mxu0 0.0
    %491 = vmatprep.subr.mxu0 0.0
    %492 = vmatpush1.msra.mxu0 0.0
    %493 = vmatprep.subr.mxu0 0.0
    %494 = vmatpush1.msra.mxu0 0.0
    %495 = vmatprep.subr.mxu0 0.0
    %496 = vmatpush1.msra.mxu0 0.0
    %497 = vmatprep.subr.mxu0 0.0
    %498 = vmatpush1.msra.mxu0 0.0
    %499 = vmatprep.subr.mxu0 0.0
    %500 = vmatpush1.msra.mxu0 0.0
    %501 = vmatprep.subr.mxu0 0.0
    %502 = vmatpush1.msra.mxu0 0.0
    %503 = vmatprep.subr.mxu0 0.0
    %504 = vmatpush1.msra.mxu0 0.0
    %505 = vmatprep.subr.mxu0 0.0
    %506 = vmatpush1.msra.mxu0 0.0
    %507 = vmatprep.mubr.f32.mxu0 0.0
    %508 = vmatmul.mubr.f32.gmra.mrb[0].mxu0 %v90
    %v509 = vpop.f32.mrb[0].mxu0
    %v510 = vadd.f32 0.0, %v509
    %v511 = vpop.f32.mrb[0].mxu0
    %512 = vdwg.mxu0
    %v513 = vmul.f32 %v165, %v510
    %514 = vmatprep.subr.mxu0 0.0
    %515 = vmatpush1.msra.mxu0 %v513
    %516 = vmatprep.subr.mxu0 0.0
    %517 = vmatpush1.msra.mxu0 0.0
    %518 = vmatprep.subr.mxu0 0.0
    %519 = vmatpush1.msra.mxu0 0.0
    %520 = vmatprep.subr.mxu0 0.0
    %521 = vmatpush1.msra.mxu0 0.0
    %522 = vmatprep.subr.mxu0 0.0
    %523 = vmatpush1.msra.mxu0 0.0
    %524 = vmatprep.subr.mxu0 0.0
    %525 = vmatpush1.msra.mxu0 0.0
    %526 = vmatprep.subr.mxu0 0.0
    %527 = vmatpush1.msra.mxu0 0.0
    %528 = vmatprep.subr.mxu0 0.0
    %529 = vmatpush1.msra.mxu0 0.0
    %530 = vmatprep.subr.mxu0 0.0
    %531 = vmatpush1.msra.mxu0 0.0
    %532 = vmatprep.subr.mxu0 0.0
    %533 = vmatpush1.msra.mxu0 0.0
    %534 = vmatprep.subr.mxu0 0.0
    %535 = vmatpush1.msra.mxu0 0.0
    %536 = vmatprep.subr.mxu0 0.0
    %537 = vmatpush1.msra.mxu0 0.0
    %538 = vmatprep.subr.mxu0 0.0
    %539 = vmatpush1.msra.mxu0 0.0
    %540 = vmatprep.subr.mxu0 0.0
    %541 = vmatpush1.msra.mxu0 0.0
    %542 = vmatprep.subr.mxu0 0.0
    %543 = vmatpush1.msra.mxu0 0.0
    %544 = vmatprep.subr.mxu0 0.0
    %545 = vmatpush1.msra.mxu0 0.0
    %546 = vmatprep.subr.mxu0 0.0
    %547 = vmatpush1.msra.mxu0 0.0
    %548 = vmatprep.subr.mxu0 0.0
    %549 = vmatpush1.msra.mxu0 0.0
    %550 = vmatprep.subr.mxu0 0.0
    %551 = vmatpush1.msra.mxu0 0.0
    %552 = vmatprep.subr.mxu0 0.0
    %553 = vmatpush1.msra.mxu0 0.0
    %554 = vmatprep.subr.mxu0 0.0
    %555 = vmatpush1.msra.mxu0 0.0
    %556 = vmatprep.subr.mxu0 0.0
    %557 = vmatpush1.msra.mxu0 0.0
    %558 = vmatprep.subr.mxu0 0.0
    %559 = vmatpush1.msra.mxu0 0.0
    %560 = vmatprep.subr.mxu0 0.0
    %561 = vmatpush1.msra.mxu0 0.0
    %562 = vmatprep.subr.mxu0 0.0
    %563 = vmatpush1.msra.mxu0 0.0
    %564 = vmatprep.subr.mxu0 0.0
    %565 = vmatpush1.msra.mxu0 0.0
    %566 = vmatprep.subr.mxu0 0.0
    %567 = vmatpush1.msra.mxu0 0.0
    %568 = vmatprep.subr.mxu0 0.0
    %569 = vmatpush1.msra.mxu0 0.0
    %570 = vmatprep.subr.mxu0 0.0
    %571 = vmatpush1.msra.mxu0 0.0
    %572 = vmatprep.subr.mxu0 0.0
    %573 = vmatpush1.msra.mxu0 0.0
    %574 = vmatprep.subr.mxu0 0.0
    %575 = vmatpush1.msra.mxu0 0.0
    %576 = vmatprep.subr.mxu0 0.0
    %577 = vmatpush1.msra.mxu0 0.0
    %578 = vmatprep.mubr.f32.mxu0 0.0
    %579 = vmatmul.mubr.f32.gmra.mrb[0].mxu0 %v170
    %v580 = vpop.f32.mrb[0].mxu0
    %v581 = vadd.f32 0.0, %v580
    %v582 = vpop.f32.mrb[0].mxu0
    %583 = vmatprep.mubr.f32.mxu0 0.0
    %584 = vmatmul.mubr.f32.gmra.mrb[0].mxu0 %v173
    %v585 = vpop.f32.mrb[0].mxu0
    %v586 = vadd.f32 0.0, %v585
    %v587 = vpop.f32.mrb[0].mxu0
    %588 = vdwg.mxu0
    %v589 = vmul.f32 %v47, %v581
    %v590 = vmul.f32 %v52, %v586
    %v591 = vmul.f32 %v47, %v589
    %v592 = vmul.f32 %v52, %v590
    %593 = vmatprep.subr.mxu0 0.0
    %594 = vmatpush1.msra.mxu0 %v591
    %595 = vmatprep.subr.mxu0 0.0
    %596 = vmatpush1.msra.mxu0 %v592
    %597 = vmatprep.subr.mxu0 0.0
    %598 = vmatpush1.msra.mxu0 0.0
    %599 = vmatprep.subr.mxu0 0.0
    %600 = vmatpush1.msra.mxu0 0.0
    %601 = vmatprep.subr.mxu0 0.0
    %602 = vmatpush1.msra.mxu0 0.0
    %603 = vmatprep.subr.mxu0 0.0
    %604 = vmatpush1.msra.mxu0 0.0
    %605 = vmatprep.subr.mxu0 0.0
    %606 = vmatpush1.msra.mxu0 0.0
    %607 = vmatprep.subr.mxu0 0.0
    %608 = vmatpush1.msra.mxu0 0.0
    %609 = vmatprep.subr.mxu0 0.0
    %610 = vmatpush1.msra.mxu0 0.0
    %611 = vmatprep.subr.mxu0 0.0
    %612 = vmatpush1.msra.mxu0 0.0
    %613 = vmatprep.subr.mxu0 0.0
    %614 = vmatpush1.msra.mxu0 0.0
    %615 = vmatprep.subr.mxu0 0.0
    %616 = vmatpush1.msra.mxu0 0.0
    %617 = vmatprep.subr.mxu0 0.0
    %618 = vmatpush1.msra.mxu0 0.0
    %619 = vmatprep.subr.mxu0 0.0
    %620 = vmatpush1.msra.mxu0 0.0
    %621 = vmatprep.subr.mxu0 0.0
    %622 = vmatpush1.msra.mxu0 0.0
    %623 = vmatprep.subr.mxu0 0.0
    %624 = vmatpush1.msra.mxu0 0.0
    %625 = vmatprep.subr.mxu0 0.0
    %626 = vmatpush1.msra.mxu0 0.0
    %627 = vmatprep.subr.mxu0 0.0
    %628 = vmatpush1.msra.mxu0 0.0
    %629 = vmatprep.subr.mxu0 0.0
    %630 = vmatpush1.msra.mxu0 0.0
    %631 = vmatprep.subr.mxu0 0.0
    %632 = vmatpush1.msra.mxu0 0.0
    %633 = vmatprep.subr.mxu0 0.0
    %634 = vmatpush1.msra.mxu0 0.0
    %635 = vmatprep.subr.mxu0 0.0
    %636 = vmatpush1.msra.mxu0 0.0
    %637 = vmatprep.subr.mxu0 0.0
    %638 = vmatpush1.msra.mxu0 0.0
    %639 = vmatprep.subr.mxu0 0.0
    %640 = vmatpush1.msra.mxu0 0.0
    %641 = vmatprep.subr.mxu0 0.0
    %642 = vmatpush1.msra.mxu0 0.0
    %643 = vmatprep.subr.mxu0 0.0
    %644 = vmatpush1.msra.mxu0 0.0
    %645 = vmatprep.subr.mxu0 0.0
    %646 = vmatpush1.msra.mxu0 0.0
    %647 = vmatprep.subr.mxu0 0.0
    %648 = vmatpush1.msra.mxu0 0.0
    %649 = vmatprep.subr.mxu0 0.0
    %650 = vmatpush1.msra.mxu0 0.0
    %651 = vmatprep.subr.mxu0 0.0
    %652 = vmatpush1.msra.mxu0 0.0
    %653 = vmatprep.subr.mxu0 0.0
    %654 = vmatpush1.msra.mxu0 0.0
    %655 = vmatprep.subr.mxu0 0.0
    %656 = vmatpush1.msra.mxu0 0.0
    %657 = vmatprep.mubr.f32.mxu0 0.0
    %658 = vmatmul.mubr.f32.gmra.mrb[0].mxu0 %v90
    %v659 = vpop.f32.mrb[0].mxu0
    %v660 = vadd.f32 0.0, %v659
    %v661 = vpop.f32.mrb[0].mxu0
    %662 = vdwg.mxu0
    %v663 = vmul.f32 %v165, %v660
    %664 = vmatprep.subr.mxu0 0.0
    %665 = vmatpush1.msra.mxu0 %v663
    %666 = vmatprep.subr.mxu0 0.0
    %667 = vmatpush1.msra.mxu0 0.0
    %668 = vmatprep.subr.mxu0 0.0
    %669 = vmatpush1.msra.mxu0 0.0
    %670 = vmatprep.subr.mxu0 0.0
    %671 = vmatpush1.msra.mxu0 0.0
    %672 = vmatprep.subr.mxu0 0.0
    %673 = vmatpush1.msra.mxu0 0.0
    %674 = vmatprep.subr.mxu0 0.0
    %675 = vmatpush1.msra.mxu0 0.0
    %676 = vmatprep.subr.mxu0 0.0
    %677 = vmatpush1.msra.mxu0 0.0
    %678 = vmatprep.subr.mxu0 0.0
    %679 = vmatpush1.msra.mxu0 0.0
    %680 = vmatprep.subr.mxu0 0.0
    %681 = vmatpush1.msra.mxu0 0.0
    %682 = vmatprep.subr.mxu0 0.0
    %683 = vmatpush1.msra.mxu0 0.0
    %684 = vmatprep.subr.mxu0 0.0
    %685 = vmatpush1.msra.mxu0 0.0
    %686 = vmatprep.subr.mxu0 0.0
    %687 = vmatpush1.msra.mxu0 0.0
    %688 = vmatprep.subr.mxu0 0.0
    %689 = vmatpush1.msra.mxu0 0.0
    %690 = vmatprep.subr.mxu0 0.0
    %691 = vmatpush1.msra.mxu0 0.0
    %692 = vmatprep.subr.mxu0 0.0
    %693 = vmatpush1.msra.mxu0 0.0
    %694 = vmatprep.subr.mxu0 0.0
    %695 = vmatpush1.msra.mxu0 0.0
    %696 = vmatprep.subr.mxu0 0.0
    %697 = vmatpush1.msra.mxu0 0.0
    %698 = vmatprep.subr.mxu0 0.0
    %699 = vmatpush1.msra.mxu0 0.0
    %700 = vmatprep.subr.mxu0 0.0
    %701 = vmatpush1.msra.mxu0 0.0
    %702 = vmatprep.subr.mxu0 0.0
    %703 = vmatpush1.msra.mxu0 0.0
    %704 = vmatprep.subr.mxu0 0.0
    %705 = vmatpush1.msra.mxu0 0.0
    %706 = vmatprep.subr.mxu0 0.0
    %707 = vmatpush1.msra.mxu0 0.0
    %708 = vmatprep.subr.mxu0 0.0
    %709 = vmatpush1.msra.mxu0 0.0
    %710 = vmatprep.subr.mxu0 0.0
    %711 = vmatpush1.msra.mxu0 0.0
    %712 = vmatprep.subr.mxu0 0.0
    %713 = vmatpush1.msra.mxu0 0.0
    %714 = vmatprep.subr.mxu0 0.0
    %715 = vmatpush1.msra.mxu0 0.0
    %716 = vmatprep.subr.mxu0 0.0
    %717 = vmatpush1.msra.mxu0 0.0
    %718 = vmatprep.subr.mxu0 0.0
    %719 = vmatpush1.msra.mxu0 0.0
    %720 = vmatprep.subr.mxu0 0.0
    %721 = vmatpush1.msra.mxu0 0.0
    %722 = vmatprep.subr.mxu0 0.0
    %723 = vmatpush1.msra.mxu0 0.0
    %724 = vmatprep.subr.mxu0 0.0
    %725 = vmatpush1.msra.mxu0 0.0
    %726 = vmatprep.subr.mxu0 0.0
    %727 = vmatpush1.msra.mxu0 0.0
    %728 = vmatprep.mubr.f32.mxu0 0.0
    %729 = vmatmul.mubr.f32.gmra.mrb[0].mxu0 %v170
    %v730 = vpop.f32.mrb[0].mxu0
    %v731 = vadd.f32 0.0, %v730
    %v732 = vpop.f32.mrb[0].mxu0
    %733 = vmatprep.mubr.f32.mxu0 0.0
    %734 = vmatmul.mubr.f32.gmra.mrb[0].mxu0 %v173
    %v735 = vpop.f32.mrb[0].mxu0
    %v736 = vadd.f32 0.0, %v735
    %v737 = vpop.f32.mrb[0].mxu0
    %738 = vdwg.mxu0
    %v739 = vmul.f32 %v47, %v731
    %v740 = vmul.f32 %v52, %v736
    %v741 = vmul.f32 %v255, %v660
    %v742 = vsub.f32 %v416, %v739
    %v743 = vsub.f32 %v417, %v740
    %v744 = vand.u32 2147483647, %v742
    %v745 = vand.u32 2147483647, %v743
    %748 = vrot.lane.b32.xlu0 %v744, 8
    %v749 = vpop.permute.xlu0 %748
    %750 = vrot.lane.b32.xlu0 %v745, 8
    %v751 = vpop.permute.xlu0 %750
    %vm754 = vcmask 97344
    %755 = vst.msk [vmem:[#allocation2] sm:$0xff] %vm754, %v749
    %756 = vst.msk [vmem:[#allocation2 + $0x8] sm:$0xff] %vm754, %v751
    %v757 = vsub.f32 %v418, %v741
    %v758 = vand.u32 2147483647, %v757
    %760 = vrot.lane.b32.xlu0 %v758, 8
    %v761 = vpop.permute.xlu0 %760
    %763 = vst.msk [vmem:[#allocation3] sm:$0xff] %vm754, %v761
    %v764 = vmul.f32 %v47, %v739
    %v765 = vmul.f32 %v52, %v740
    %766 = vmatprep.subr.mxu0 0.0
    %767 = vmatpush1.msra.mxu0 %v764
    %768 = vmatprep.subr.mxu0 0.0
    %769 = vmatpush1.msra.mxu0 %v765
    %770 = vmatprep.subr.mxu0 0.0
    %771 = vmatpush1.msra.mxu0 0.0
    %772 = vmatprep.subr.mxu0 0.0
    %773 = vmatpush1.msra.mxu0 0.0
    %774 = vmatprep.subr.mxu0 0.0
    %775 = vmatpush1.msra.mxu0 0.0
    %776 = vmatprep.subr.mxu0 0.0
    %777 = vmatpush1.msra.mxu0 0.0
    %778 = vmatprep.subr.mxu0 0.0
    %779 = vmatpush1.msra.mxu0 0.0
    %780 = vmatprep.subr.mxu0 0.0
    %781 = vmatpush1.msra.mxu0 0.0
    %782 = vmatprep.subr.mxu0 0.0
    %783 = vmatpush1.msra.mxu0 0.0
    %784 = vmatprep.subr.mxu0 0.0
    %785 = vmatpush1.msra.mxu0 0.0
    %786 = vmatprep.subr.mxu0 0.0
    %787 = vmatpush1.msra.mxu0 0.0
    %788 = vmatprep.subr.mxu0 0.0
    %789 = vmatpush1.msra.mxu0 0.0
    %790 = vmatprep.subr.mxu0 0.0
    %791 = vmatpush1.msra.mxu0 0.0
    %792 = vmatprep.subr.mxu0 0.0
    %793 = vmatpush1.msra.mxu0 0.0
    %794 = vmatprep.subr.mxu0 0.0
    %795 = vmatpush1.msra.mxu0 0.0
    %796 = vmatprep.subr.mxu0 0.0
    %797 = vmatpush1.msra.mxu0 0.0
    %798 = vmatprep.subr.mxu0 0.0
    %799 = vmatpush1.msra.mxu0 0.0
    %800 = vmatprep.subr.mxu0 0.0
    %801 = vmatpush1.msra.mxu0 0.0
    %802 = vmatprep.subr.mxu0 0.0
    %803 = vmatpush1.msra.mxu0 0.0
    %804 = vmatprep.subr.mxu0 0.0
    %805 = vmatpush1.msra.mxu0 0.0
    %806 = vmatprep.subr.mxu0 0.0
    %807 = vmatpush1.msra.mxu0 0.0
    %808 = vmatprep.subr.mxu0 0.0
    %809 = vmatpush1.msra.mxu0 0.0
    %810 = vmatprep.subr.mxu0 0.0
    %811 = vmatpush1.msra.mxu0 0.0
    %812 = vmatprep.subr.mxu0 0.0
    %813 = vmatpush1.msra.mxu0 0.0
    %814 = vmatprep.subr.mxu0 0.0
    %815 = vmatpush1.msra.mxu0 0.0
    %816 = vmatprep.subr.mxu0 0.0
    %817 = vmatpush1.msra.mxu0 0.0
    %818 = vmatprep.subr.mxu0 0.0
    %819 = vmatpush1.msra.mxu0 0.0
    %820 = vmatprep.subr.mxu0 0.0
    %821 = vmatpush1.msra.mxu0 0.0
    %822 = vmatprep.subr.mxu0 0.0
    %823 = vmatpush1.msra.mxu0 0.0
    %824 = vmatprep.subr.mxu0 0.0
    %825 = vmatpush1.msra.mxu0 0.0
    %826 = vmatprep.subr.mxu0 0.0
    %827 = vmatpush1.msra.mxu0 0.0
    %828 = vmatprep.subr.mxu0 0.0
    %829 = vmatpush1.msra.mxu0 0.0
    %830 = vmatprep.mubr.f32.mxu0 0.0
    %831 = vmatmul.mubr.f32.gmra.mrb[0].mxu0 %v90
    %v832 = vpop.f32.mrb[0].mxu0
    %v833 = vadd.f32 0.0, %v832
    %v834 = vpop.f32.mrb[0].mxu0
    %835 = vdwg.mxu0
    %v836 = vmul.f32 %v165, %v833
    %837 = vmatprep.subr.mxu0 0.0
    %838 = vmatpush1.msra.mxu0 %v836
    %839 = vmatprep.subr.mxu0 0.0
    %840 = vmatpush1.msra.mxu0 0.0
    %841 = vmatprep.subr.mxu0 0.0
    %842 = vmatpush1.msra.mxu0 0.0
    %843 = vmatprep.subr.mxu0 0.0
    %844 = vmatpush1.msra.mxu0 0.0
    %845 = vmatprep.subr.mxu0 0.0
    %846 = vmatpush1.msra.mxu0 0.0
    %847 = vmatprep.subr.mxu0 0.0
    %848 = vmatpush1.msra.mxu0 0.0
    %849 = vmatprep.subr.mxu0 0.0
    %850 = vmatpush1.msra.mxu0 0.0
    %851 = vmatprep.subr.mxu0 0.0
    %852 = vmatpush1.msra.mxu0 0.0
    %853 = vmatprep.subr.mxu0 0.0
    %854 = vmatpush1.msra.mxu0 0.0
    %855 = vmatprep.subr.mxu0 0.0
    %856 = vmatpush1.msra.mxu0 0.0
    %857 = vmatprep.subr.mxu0 0.0
    %858 = vmatpush1.msra.mxu0 0.0
    %859 = vmatprep.subr.mxu0 0.0
    %860 = vmatpush1.msra.mxu0 0.0
    %861 = vmatprep.subr.mxu0 0.0
    %862 = vmatpush1.msra.mxu0 0.0
    %863 = vmatprep.subr.mxu0 0.0
    %864 = vmatpush1.msra.mxu0 0.0
    %865 = vmatprep.subr.mxu0 0.0
    %866 = vmatpush1.msra.mxu0 0.0
    %867 = vmatprep.subr.mxu0 0.0
    %868 = vmatpush1.msra.mxu0 0.0
    %869 = vmatprep.subr.mxu0 0.0
    %870 = vmatpush1.msra.mxu0 0.0
    %871 = vmatprep.subr.mxu0 0.0
    %872 = vmatpush1.msra.mxu0 0.0
    %873 = vmatprep.subr.mxu0 0.0
    %874 = vmatpush1.msra.mxu0 0.0
    %875 = vmatprep.subr.mxu0 0.0
    %876 = vmatpush1.msra.mxu0 0.0
    %877 = vmatprep.subr.mxu0 0.0
    %878 = vmatpush1.msra.mxu0 0.0
    %879 = vmatprep.subr.mxu0 0.0
    %880 = vmatpush1.msra.mxu0 0.0
    %881 = vmatprep.subr.mxu0 0.0
    %882 = vmatpush1.msra.mxu0 0.0
    %883 = vmatprep.subr.mxu0 0.0
    %884 = vmatpush1.msra.mxu0 0.0
    %885 = vmatprep.subr.mxu0 0.0
    %886 = vmatpush1.msra.mxu0 0.0
    %887 = vmatprep.subr.mxu0 0.0
    %888 = vmatpush1.msra.mxu0 0.0
    %889 = vmatprep.subr.mxu0 0.0
    %890 = vmatpush1.msra.mxu0 0.0
    %891 = vmatprep.subr.mxu0 0.0
    %892 = vmatpush1.msra.mxu0 0.0
    %893 = vmatprep.subr.mxu0 0.0
    %894 = vmatpush1.msra.mxu0 0.0
    %895 = vmatprep.subr.mxu0 0.0
    %896 = vmatpush1.msra.mxu0 0.0
    %897 = vmatprep.subr.mxu0 0.0
    %898 = vmatpush1.msra.mxu0 0.0
    %899 = vmatprep.subr.mxu0 0.0
    %900 = vmatpush1.msra.mxu0 0.0
    %901 = vmatprep.mubr.f32.mxu0 0.0
    %902 = vmatmul.mubr.f32.gmra.mrb[0].mxu0 %v170
    %v903 = vpop.f32.mrb[0].mxu0
    %v904 = vadd.f32 0.0, %v903
    %v905 = vpop.f32.mrb[0].mxu0
    %906 = vmatprep.mubr.f32.mxu0 0.0
    %907 = vmatmul.mubr.f32.gmra.mrb[0].mxu0 %v173
    %v908 = vpop.f32.mrb[0].mxu0
    %v909 = vadd.f32 0.0, %v908
    %v910 = vpop.f32.mrb[0].mxu0
    %911 = vdwg.mxu0
    %v912 = vmul.f32 %v47, %v904
    %v913 = vmul.f32 %v52, %v909
    %v914 = vmul.f32 %v47, %v912
    %v915 = vmul.f32 %v52, %v913
    %916 = vmatprep.subr.mxu0 0.0
    %917 = vmatpush1.msra.mxu0 %v914
    %918 = vmatprep.subr.mxu0 0.0
    %919 = vmatpush1.msra.mxu0 %v915
    %920 = vmatprep.subr.mxu0 0.0
    %921 = vmatpush1.msra.mxu0 0.0
    %922 = vmatprep.subr.mxu0 0.0
    %923 = vmatpush1.msra.mxu0 0.0
    %924 = vmatprep.subr.mxu0 0.0
    %925 = vmatpush1.msra.mxu0 0.0
    %926 = vmatprep.subr.mxu0 0.0
    %927 = vmatpush1.msra.mxu0 0.0
    %928 = vmatprep.subr.mxu0 0.0
    %929 = vmatpush1.msra.mxu0 0.0
    %930 = vmatprep.subr.mxu0 0.0
    %931 = vmatpush1.msra.mxu0 0.0
    %932 = vmatprep.subr.mxu0 0.0
    %933 = vmatpush1.msra.mxu0 0.0
    %934 = vmatprep.subr.mxu0 0.0
    %935 = vmatpush1.msra.mxu0 0.0
    %936 = vmatprep.subr.mxu0 0.0
    %937 = vmatpush1.msra.mxu0 0.0
    %938 = vmatprep.subr.mxu0 0.0
    %939 = vmatpush1.msra.mxu0 0.0
    %940 = vmatprep.subr.mxu0 0.0
    %941 = vmatpush1.msra.mxu0 0.0
    %942 = vmatprep.subr.mxu0 0.0
    %943 = vmatpush1.msra.mxu0 0.0
    %944 = vmatprep.subr.mxu0 0.0
    %945 = vmatpush1.msra.mxu0 0.0
    %946 = vmatprep.subr.mxu0 0.0
    %947 = vmatpush1.msra.mxu0 0.0
    %948 = vmatprep.subr.mxu0 0.0
    %949 = vmatpush1.msra.mxu0 0.0
    %950 = vmatprep.subr.mxu0 0.0
    %951 = vmatpush1.msra.mxu0 0.0
    %952 = vmatprep.subr.mxu0 0.0
    %953 = vmatpush1.msra.mxu0 0.0
    %954 = vmatprep.subr.mxu0 0.0
    %955 = vmatpush1.msra.mxu0 0.0
    %956 = vmatprep.subr.mxu0 0.0
    %957 = vmatpush1.msra.mxu0 0.0
    %958 = vmatprep.subr.mxu0 0.0
    %959 = vmatpush1.msra.mxu0 0.0
    %960 = vmatprep.subr.mxu0 0.0
    %961 = vmatpush1.msra.mxu0 0.0
    %962 = vmatprep.subr.mxu0 0.0
    %963 = vmatpush1.msra.mxu0 0.0
    %964 = vmatprep.subr.mxu0 0.0
    %965 = vmatpush1.msra.mxu0 0.0
    %966 = vmatprep.subr.mxu0 0.0
    %967 = vmatpush1.msra.mxu0 0.0
    %968 = vmatprep.subr.mxu0 0.0
    %969 = vmatpush1.msra.mxu0 0.0
    %970 = vmatprep.subr.mxu0 0.0
    %971 = vmatpush1.msra.mxu0 0.0
    %972 = vmatprep.subr.mxu0 0.0
    %973 = vmatpush1.msra.mxu0 0.0
    %974 = vmatprep.subr.mxu0 0.0
    %975 = vmatpush1.msra.mxu0 0.0
    %976 = vmatprep.subr.mxu0 0.0
    %977 = vmatpush1.msra.mxu0 0.0
    %978 = vmatprep.subr.mxu0 0.0
    %979 = vmatpush1.msra.mxu0 0.0
    %980 = vmatprep.mubr.f32.mxu0 0.0
    %981 = vmatmul.mubr.f32.gmra.mrb[0].mxu0 %v90
    %v982 = vpop.f32.mrb[0].mxu0
    %v983 = vadd.f32 0.0, %v982
    %v984 = vpop.f32.mrb[0].mxu0
    %985 = vdwg.mxu0
    %v986 = vmul.f32 %v165, %v983
    %987 = vmatprep.subr.mxu0 0.0
    %988 = vmatpush1.msra.mxu0 %v986
    %989 = vmatprep.subr.mxu0 0.0
    %990 = vmatpush1.msra.mxu0 0.0
    %991 = vmatprep.subr.mxu0 0.0
    %992 = vmatpush1.msra.mxu0 0.0
    %993 = vmatprep.subr.mxu0 0.0
    %994 = vmatpush1.msra.mxu0 0.0
    %995 = vmatprep.subr.mxu0 0.0
    %996 = vmatpush1.msra.mxu0 0.0
    %997 = vmatprep.subr.mxu0 0.0
    %998 = vmatpush1.msra.mxu0 0.0
    %999 = vmatprep.subr.mxu0 0.0
    %1000 = vmatpush1.msra.mxu0 0.0
    %1001 = vmatprep.subr.mxu0 0.0
    %1002 = vmatpush1.msra.mxu0 0.0
    %1003 = vmatprep.subr.mxu0 0.0
    %1004 = vmatpush1.msra.mxu0 0.0
    %1005 = vmatprep.subr.mxu0 0.0
    %1006 = vmatpush1.msra.mxu0 0.0
    %1007 = vmatprep.subr.mxu0 0.0
    %1008 = vmatpush1.msra.mxu0 0.0
    %1009 = vmatprep.subr.mxu0 0.0
    %1010 = vmatpush1.msra.mxu0 0.0
    %1011 = vmatprep.subr.mxu0 0.0
    %1012 = vmatpush1.msra.mxu0 0.0
    %1013 = vmatprep.subr.mxu0 0.0
    %1014 = vmatpush1.msra.mxu0 0.0
    %1015 = vmatprep.subr.mxu0 0.0
    %1016 = vmatpush1.msra.mxu0 0.0
    %1017 = vmatprep.subr.mxu0 0.0
    %1018 = vmatpush1.msra.mxu0 0.0
    %1019 = vmatprep.subr.mxu0 0.0
    %1020 = vmatpush1.msra.mxu0 0.0
    %1021 = vmatprep.subr.mxu0 0.0
    %1022 = vmatpush1.msra.mxu0 0.0
    %1023 = vmatprep.subr.mxu0 0.0
    %1024 = vmatpush1.msra.mxu0 0.0
    %1025 = vmatprep.subr.mxu0 0.0
    %1026 = vmatpush1.msra.mxu0 0.0
    %1027 = vmatprep.subr.mxu0 0.0
    %1028 = vmatpush1.msra.mxu0 0.0
    %1029 = vmatprep.subr.mxu0 0.0
    %1030 = vmatpush1.msra.mxu0 0.0
    %1031 = vmatprep.subr.mxu0 0.0
    %1032 = vmatpush1.msra.mxu0 0.0
    %1033 = vmatprep.subr.mxu0 0.0
    %1034 = vmatpush1.msra.mxu0 0.0
    %1035 = vmatprep.subr.mxu0 0.0
    %1036 = vmatpush1.msra.mxu0 0.0
    %1037 = vmatprep.subr.mxu0 0.0
    %1038 = vmatpush1.msra.mxu0 0.0
    %1039 = vmatprep.subr.mxu0 0.0
    %1040 = vmatpush1.msra.mxu0 0.0
    %1041 = vmatprep.subr.mxu0 0.0
    %1042 = vmatpush1.msra.mxu0 0.0
    %1043 = vmatprep.subr.mxu0 0.0
    %1044 = vmatpush1.msra.mxu0 0.0
    %1045 = vmatprep.subr.mxu0 0.0
    %1046 = vmatpush1.msra.mxu0 0.0
    %1047 = vmatprep.subr.mxu0 0.0
    %1048 = vmatpush1.msra.mxu0 0.0
    %1049 = vmatprep.subr.mxu0 0.0
    %1050 = vmatpush1.msra.mxu0 0.0
    %1051 = vmatprep.mubr.f32.mxu0 0.0
    %1052 = vmatmul.mubr.f32.gmra.mrb[0].mxu0 %v170
    %v1053 = vpop.f32.mrb[0].mxu0
    %v1054 = vadd.f32 0.0, %v1053
    %v1055 = vpop.f32.mrb[0].mxu0
    %1056 = vmatprep.mubr.f32.mxu0 0.0
    %1057 = vmatmul.mubr.f32.gmra.mrb[0].mxu0 %v173
    %v1058 = vpop.f32.mrb[0].mxu0
    %v1059 = vadd.f32 0.0, %v1058
    %v1060 = vpop.f32.mrb[0].mxu0
    %1061 = vdwg.mxu0
    %v1062 = vmul.f32 %v47, %v1054
    %v1063 = vmul.f32 %v52, %v1059
    %v1064 = vmul.f32 %v47, %v1062
    %v1065 = vmul.f32 %v52, %v1063
    %1066 = vmatprep.subr.mxu0 0.0
    %1067 = vmatpush1.msra.mxu0 %v1064
    %1068 = vmatprep.subr.mxu0 0.0
    %1069 = vmatpush1.msra.mxu0 %v1065
    %1070 = vmatprep.subr.mxu0 0.0
    %1071 = vmatpush1.msra.mxu0 0.0
    %1072 = vmatprep.subr.mxu0 0.0
    %1073 = vmatpush1.msra.mxu0 0.0
    %1074 = vmatprep.subr.mxu0 0.0
    %1075 = vmatpush1.msra.mxu0 0.0
    %1076 = vmatprep.subr.mxu0 0.0
    %1077 = vmatpush1.msra.mxu0 0.0
    %1078 = vmatprep.subr.mxu0 0.0
    %1079 = vmatpush1.msra.mxu0 0.0
    %1080 = vmatprep.subr.mxu0 0.0
    %1081 = vmatpush1.msra.mxu0 0.0
    %1082 = vmatprep.subr.mxu0 0.0
    %1083 = vmatpush1.msra.mxu0 0.0
    %1084 = vmatprep.subr.mxu0 0.0
    %1085 = vmatpush1.msra.mxu0 0.0
    %1086 = vmatprep.subr.mxu0 0.0
    %1087 = vmatpush1.msra.mxu0 0.0
    %1088 = vmatprep.subr.mxu0 0.0
    %1089 = vmatpush1.msra.mxu0 0.0
    %1090 = vmatprep.subr.mxu0 0.0
    %1091 = vmatpush1.msra.mxu0 0.0
    %1092 = vmatprep.subr.mxu0 0.0
    %1093 = vmatpush1.msra.mxu0 0.0
    %1094 = vmatprep.subr.mxu0 0.0
    %1095 = vmatpush1.msra.mxu0 0.0
    %1096 = vmatprep.subr.mxu0 0.0
    %1097 = vmatpush1.msra.mxu0 0.0
    %1098 = vmatprep.subr.mxu0 0.0
    %1099 = vmatpush1.msra.mxu0 0.0
    %1100 = vmatprep.subr.mxu0 0.0
    %1101 = vmatpush1.msra.mxu0 0.0
    %1102 = vmatprep.subr.mxu0 0.0
    %1103 = vmatpush1.msra.mxu0 0.0
    %1104 = vmatprep.subr.mxu0 0.0
    %1105 = vmatpush1.msra.mxu0 0.0
    %1106 = vmatprep.subr.mxu0 0.0
    %1107 = vmatpush1.msra.mxu0 0.0
    %1108 = vmatprep.subr.mxu0 0.0
    %1109 = vmatpush1.msra.mxu0 0.0
    %1110 = vmatprep.subr.mxu0 0.0
    %1111 = vmatpush1.msra.mxu0 0.0
    %1112 = vmatprep.subr.mxu0 0.0
    %1113 = vmatpush1.msra.mxu0 0.0
    %1114 = vmatprep.subr.mxu0 0.0
    %1115 = vmatpush1.msra.mxu0 0.0
    %1116 = vmatprep.subr.mxu0 0.0
    %1117 = vmatpush1.msra.mxu0 0.0
    %1118 = vmatprep.subr.mxu0 0.0
    %1119 = vmatpush1.msra.mxu0 0.0
    %1120 = vmatprep.subr.mxu0 0.0
    %1121 = vmatpush1.msra.mxu0 0.0
    %1122 = vmatprep.subr.mxu0 0.0
    %1123 = vmatpush1.msra.mxu0 0.0
    %1124 = vmatprep.subr.mxu0 0.0
    %1125 = vmatpush1.msra.mxu0 0.0
    %1126 = vmatprep.subr.mxu0 0.0
    %1127 = vmatpush1.msra.mxu0 0.0
    %1128 = vmatprep.subr.mxu0 0.0
    %1129 = vmatpush1.msra.mxu0 0.0
    %1130 = vmatprep.mubr.f32.mxu0 0.0
    %1131 = vmatmul.mubr.f32.gmra.mrb[0].mxu0 %v90
    %v1132 = vpop.f32.mrb[0].mxu0
    %v1133 = vadd.f32 0.0, %v1132
    %v1134 = vpop.f32.mrb[0].mxu0
    %1135 = vdwg.mxu0
    %v1136 = vmul.f32 %v165, %v1133
    %1137 = vmatprep.subr.mxu0 0.0
    %1138 = vmatpush1.msra.mxu0 %v1136
    %1139 = vmatprep.subr.mxu0 0.0
    %1140 = vmatpush1.msra.mxu0 0.0
    %1141 = vmatprep.subr.mxu0 0.0
    %1142 = vmatpush1.msra.mxu0 0.0
    %1143 = vmatprep.subr.mxu0 0.0
    %1144 = vmatpush1.msra.mxu0 0.0
    %1145 = vmatprep.subr.mxu0 0.0
    %1146 = vmatpush1.msra.mxu0 0.0
    %1147 = vmatprep.subr.mxu0 0.0
    %1148 = vmatpush1.msra.mxu0 0.0
    %1149 = vmatprep.subr.mxu0 0.0
    %1150 = vmatpush1.msra.mxu0 0.0
    %1151 = vmatprep.subr.mxu0 0.0
    %1152 = vmatpush1.msra.mxu0 0.0
    %1153 = vmatprep.subr.mxu0 0.0
    %1154 = vmatpush1.msra.mxu0 0.0
    %1155 = vmatprep.subr.mxu0 0.0
    %1156 = vmatpush1.msra.mxu0 0.0
    %1157 = vmatprep.subr.mxu0 0.0
    %1158 = vmatpush1.msra.mxu0 0.0
    %1159 = vmatprep.subr.mxu0 0.0
    %1160 = vmatpush1.msra.mxu0 0.0
    %1161 = vmatprep.subr.mxu0 0.0
    %1162 = vmatpush1.msra.mxu0 0.0
    %1163 = vmatprep.subr.mxu0 0.0
    %1164 = vmatpush1.msra.mxu0 0.0
    %1165 = vmatprep.subr.mxu0 0.0
    %1166 = vmatpush1.msra.mxu0 0.0
    %1167 = vmatprep.subr.mxu0 0.0
    %1168 = vmatpush1.msra.mxu0 0.0
    %1169 = vmatprep.subr.mxu0 0.0
    %1170 = vmatpush1.msra.mxu0 0.0
    %1171 = vmatprep.subr.mxu0 0.0
    %1172 = vmatpush1.msra.mxu0 0.0
    %1173 = vmatprep.subr.mxu0 0.0
    %1174 = vmatpush1.msra.mxu0 0.0
    %1175 = vmatprep.subr.mxu0 0.0
    %1176 = vmatpush1.msra.mxu0 0.0
    %1177 = vmatprep.subr.mxu0 0.0
    %1178 = vmatpush1.msra.mxu0 0.0
    %1179 = vmatprep.subr.mxu0 0.0
    %1180 = vmatpush1.msra.mxu0 0.0
    %1181 = vmatprep.subr.mxu0 0.0
    %1182 = vmatpush1.msra.mxu0 0.0
    %1183 = vmatprep.subr.mxu0 0.0
    %1184 = vmatpush1.msra.mxu0 0.0
    %1185 = vmatprep.subr.mxu0 0.0
    %1186 = vmatpush1.msra.mxu0 0.0
    %1187 = vmatprep.subr.mxu0 0.0
    %1188 = vmatpush1.msra.mxu0 0.0
    %1189 = vmatprep.subr.mxu0 0.0
    %1190 = vmatpush1.msra.mxu0 0.0
    %1191 = vmatprep.subr.mxu0 0.0
    %1192 = vmatpush1.msra.mxu0 0.0
    %1193 = vmatprep.subr.mxu0 0.0
    %1194 = vmatpush1.msra.mxu0 0.0
    %1195 = vmatprep.subr.mxu0 0.0
    %1196 = vmatpush1.msra.mxu0 0.0
    %1197 = vmatprep.subr.mxu0 0.0
    %1198 = vmatpush1.msra.mxu0 0.0
    %1199 = vmatprep.subr.mxu0 0.0
    %1200 = vmatpush1.msra.mxu0 0.0
    %1201 = vmatprep.mubr.f32.mxu0 0.0
    %1202 = vmatmul.mubr.f32.gmra.mrb[0].mxu0 %v170
    %v1203 = vpop.f32.mrb[0].mxu0
    %v1204 = vadd.f32 0.0, %v1203
    %v1205 = vpop.f32.mrb[0].mxu0
    %1206 = vmatprep.mubr.f32.mxu0 0.0
    %1207 = vmatmul.mubr.f32.gmra.mrb[0].mxu0 %v173
    %v1208 = vpop.f32.mrb[0].mxu0
    %v1209 = vadd.f32 0.0, %v1208
    %v1210 = vpop.f32.mrb[0].mxu0
    %1211 = vdwg.mxu0
    %v1212 = vmul.f32 %v47, %v1204
    %v1213 = vmul.f32 %v52, %v1209
    %v1214 = vmul.f32 %v47, %v1212
    %v1215 = vmul.f32 %v52, %v1213
    %1216 = vmatprep.subr.mxu0 0.0
    %1217 = vmatpush1.msra.mxu0 %v1214
    %1218 = vmatprep.subr.mxu0 0.0
    %1219 = vmatpush1.msra.mxu0 %v1215
    %1220 = vmatprep.subr.mxu0 0.0
    %1221 = vmatpush1.msra.mxu0 0.0
    %1222 = vmatprep.subr.mxu0 0.0
    %1223 = vmatpush1.msra.mxu0 0.0
    %1224 = vmatprep.subr.mxu0 0.0
    %1225 = vmatpush1.msra.mxu0 0.0
    %1226 = vmatprep.subr.mxu0 0.0
    %1227 = vmatpush1.msra.mxu0 0.0
    %1228 = vmatprep.subr.mxu0 0.0
    %1229 = vmatpush1.msra.mxu0 0.0
    %1230 = vmatprep.subr.mxu0 0.0
    %1231 = vmatpush1.msra.mxu0 0.0
    %1232 = vmatprep.subr.mxu0 0.0
    %1233 = vmatpush1.msra.mxu0 0.0
    %1234 = vmatprep.subr.mxu0 0.0
    %1235 = vmatpush1.msra.mxu0 0.0
    %1236 = vmatprep.subr.mxu0 0.0
    %1237 = vmatpush1.msra.mxu0 0.0
    %1238 = vmatprep.subr.mxu0 0.0
    %1239 = vmatpush1.msra.mxu0 0.0
    %1240 = vmatprep.subr.mxu0 0.0
    %1241 = vmatpush1.msra.mxu0 0.0
    %1242 = vmatprep.subr.mxu0 0.0
    %1243 = vmatpush1.msra.mxu0 0.0
    %1244 = vmatprep.subr.mxu0 0.0
    %1245 = vmatpush1.msra.mxu0 0.0
    %1246 = vmatprep.subr.mxu0 0.0
    %1247 = vmatpush1.msra.mxu0 0.0
    %1248 = vmatprep.subr.mxu0 0.0
    %1249 = vmatpush1.msra.mxu0 0.0
    %1250 = vmatprep.subr.mxu0 0.0
    %1251 = vmatpush1.msra.mxu0 0.0
    %1252 = vmatprep.subr.mxu0 0.0
    %1253 = vmatpush1.msra.mxu0 0.0
    %1254 = vmatprep.subr.mxu0 0.0
    %1255 = vmatpush1.msra.mxu0 0.0
    %1256 = vmatprep.subr.mxu0 0.0
    %1257 = vmatpush1.msra.mxu0 0.0
    %1258 = vmatprep.subr.mxu0 0.0
    %1259 = vmatpush1.msra.mxu0 0.0
    %1260 = vmatprep.subr.mxu0 0.0
    %1261 = vmatpush1.msra.mxu0 0.0
    %1262 = vmatprep.subr.mxu0 0.0
    %1263 = vmatpush1.msra.mxu0 0.0
    %1264 = vmatprep.subr.mxu0 0.0
    %1265 = vmatpush1.msra.mxu0 0.0
    %1266 = vmatprep.subr.mxu0 0.0
    %1267 = vmatpush1.msra.mxu0 0.0
    %1268 = vmatprep.subr.mxu0 0.0
    %1269 = vmatpush1.msra.mxu0 0.0
    %1270 = vmatprep.subr.mxu0 0.0
    %1271 = vmatpush1.msra.mxu0 0.0
    %1272 = vmatprep.subr.mxu0 0.0
    %1273 = vmatpush1.msra.mxu0 0.0
    %1274 = vmatprep.subr.mxu0 0.0
    %1275 = vmatpush1.msra.mxu0 0.0
    %1276 = vmatprep.subr.mxu0 0.0
    %1277 = vmatpush1.msra.mxu0 0.0
    %1278 = vmatprep.subr.mxu0 0.0
    %1279 = vmatpush1.msra.mxu0 0.0
    %1280 = vmatprep.mubr.f32.mxu0 0.0
    %1281 = vmatmul.mubr.f32.gmra.mrb[0].mxu0 %v90
    %v1282 = vpop.f32.mrb[0].mxu0
    %v1283 = vadd.f32 0.0, %v1282
    %v1284 = vpop.f32.mrb[0].mxu0
    %1285 = vdwg.mxu0
    %v1286 = vmul.f32 %v165, %v1283
    %1287 = vmatprep.subr.mxu0 0.0
    %1288 = vmatpush1.msra.mxu0 %v1286
    %1289 = vmatprep.subr.mxu0 0.0
    %1290 = vmatpush1.msra.mxu0 0.0
    %1291 = vmatprep.subr.mxu0 0.0
    %1292 = vmatpush1.msra.mxu0 0.0
    %1293 = vmatprep.subr.mxu0 0.0
    %1294 = vmatpush1.msra.mxu0 0.0
    %1295 = vmatprep.subr.mxu0 0.0
    %1296 = vmatpush1.msra.mxu0 0.0
    %1297 = vmatprep.subr.mxu0 0.0
    %1298 = vmatpush1.msra.mxu0 0.0
    %1299 = vmatprep.subr.mxu0 0.0
    %1300 = vmatpush1.msra.mxu0 0.0
    %1301 = vmatprep.subr.mxu0 0.0
    %1302 = vmatpush1.msra.mxu0 0.0
    %1303 = vmatprep.subr.mxu0 0.0
    %1304 = vmatpush1.msra.mxu0 0.0
    %1305 = vmatprep.subr.mxu0 0.0
    %1306 = vmatpush1.msra.mxu0 0.0
    %1307 = vmatprep.subr.mxu0 0.0
    %1308 = vmatpush1.msra.mxu0 0.0
    %1309 = vmatprep.subr.mxu0 0.0
    %1310 = vmatpush1.msra.mxu0 0.0
    %1311 = vmatprep.subr.mxu0 0.0
    %1312 = vmatpush1.msra.mxu0 0.0
    %1313 = vmatprep.subr.mxu0 0.0
    %1314 = vmatpush1.msra.mxu0 0.0
    %1315 = vmatprep.subr.mxu0 0.0
    %1316 = vmatpush1.msra.mxu0 0.0
    %1317 = vmatprep.subr.mxu0 0.0
    %1318 = vmatpush1.msra.mxu0 0.0
    %1319 = vmatprep.subr.mxu0 0.0
    %1320 = vmatpush1.msra.mxu0 0.0
    %1321 = vmatprep.subr.mxu0 0.0
    %1322 = vmatpush1.msra.mxu0 0.0
    %1323 = vmatprep.subr.mxu0 0.0
    %1324 = vmatpush1.msra.mxu0 0.0
    %1325 = vmatprep.subr.mxu0 0.0
    %1326 = vmatpush1.msra.mxu0 0.0
    %1327 = vmatprep.subr.mxu0 0.0
    %1328 = vmatpush1.msra.mxu0 0.0
    %1329 = vmatprep.subr.mxu0 0.0
    %1330 = vmatpush1.msra.mxu0 0.0
    %1331 = vmatprep.subr.mxu0 0.0
    %1332 = vmatpush1.msra.mxu0 0.0
    %1333 = vmatprep.subr.mxu0 0.0
    %1334 = vmatpush1.msra.mxu0 0.0
    %1335 = vmatprep.subr.mxu0 0.0
    %1336 = vmatpush1.msra.mxu0 0.0
    %1337 = vmatprep.subr.mxu0 0.0
    %1338 = vmatpush1.msra.mxu0 0.0
    %1339 = vmatprep.subr.mxu0 0.0
    %1340 = vmatpush1.msra.mxu0 0.0
    %1341 = vmatprep.subr.mxu0 0.0
    %1342 = vmatpush1.msra.mxu0 0.0
    %1343 = vmatprep.subr.mxu0 0.0
    %1344 = vmatpush1.msra.mxu0 0.0
    %1345 = vmatprep.subr.mxu0 0.0
    %1346 = vmatpush1.msra.mxu0 0.0
    %1347 = vmatprep.subr.mxu0 0.0
    %1348 = vmatpush1.msra.mxu0 0.0
    %1349 = vmatprep.subr.mxu0 0.0
    %1350 = vmatpush1.msra.mxu0 0.0
    %1351 = vmatprep.mubr.f32.mxu0 0.0
    %1352 = vmatmul.mubr.f32.gmra.mrb[0].mxu0 %v170
    %v1353 = vpop.f32.mrb[0].mxu0
    %v1354 = vadd.f32 0.0, %v1353
    %v1355 = vpop.f32.mrb[0].mxu0
    %1356 = vmatprep.mubr.f32.mxu0 0.0
    %1357 = vmatmul.mubr.f32.gmra.mrb[0].mxu0 %v173
    %v1358 = vpop.f32.mrb[0].mxu0
    %v1359 = vadd.f32 0.0, %v1358
    %v1360 = vpop.f32.mrb[0].mxu0
    %1361 = vdwg.mxu0
    %v1362 = vmul.f32 %v47, %v1354
    %v1363 = vmul.f32 %v52, %v1359
    %v1364 = vmul.f32 %v255, %v1283
    %v1365 = vsub.f32 %v739, %v1362
    %v1366 = vsub.f32 %v740, %v1363
    %v1367 = vand.u32 2147483647, %v1365
    %v1368 = vand.u32 2147483647, %v1366
    %1371 = vrot.lane.b32.xlu0 %v1367, 12
    %v1372 = vpop.permute.xlu0 %1371
    %1373 = vrot.lane.b32.xlu0 %v1368, 12
    %v1374 = vpop.permute.xlu0 %1373
    %vm1377 = vcmask 130144
    %1378 = vst.msk [vmem:[#allocation2] sm:$0xff] %vm1377, %v1372
    %1379 = vst.msk [vmem:[#allocation2 + $0x8] sm:$0xff] %vm1377, %v1374
    %v1380 = vsub.f32 %v741, %v1364
    %v1381 = vand.u32 2147483647, %v1380
    %1383 = vrot.lane.b32.xlu0 %v1381, 12
    %v1384 = vpop.permute.xlu0 %1383
    %1386 = vst.msk [vmem:[#allocation3] sm:$0xff] %vm1377, %v1384
    %v1387 = vmul.f32 %v47, %v1362
    %v1388 = vmul.f32 %v52, %v1363
    %1389 = vmatprep.subr.mxu0 0.0
    %1390 = vmatpush1.msra.mxu0 %v1387
    %1391 = vmatprep.subr.mxu0 0.0
    %1392 = vmatpush1.msra.mxu0 %v1388
    %1393 = vmatprep.subr.mxu0 0.0
    %1394 = vmatpush1.msra.mxu0 0.0
    %1395 = vmatprep.subr.mxu0 0.0
    %1396 = vmatpush1.msra.mxu0 0.0
    %1397 = vmatprep.subr.mxu0 0.0
    %1398 = vmatpush1.msra.mxu0 0.0
    %1399 = vmatprep.subr.mxu0 0.0
    %1400 = vmatpush1.msra.mxu0 0.0
    %1401 = vmatprep.subr.mxu0 0.0
    %1402 = vmatpush1.msra.mxu0 0.0
    %1403 = vmatprep.subr.mxu0 0.0
    %1404 = vmatpush1.msra.mxu0 0.0
    %1405 = vmatprep.subr.mxu0 0.0
    %1406 = vmatpush1.msra.mxu0 0.0
    %1407 = vmatprep.subr.mxu0 0.0
    %1408 = vmatpush1.msra.mxu0 0.0
    %1409 = vmatprep.subr.mxu0 0.0
    %1410 = vmatpush1.msra.mxu0 0.0
    %1411 = vmatprep.subr.mxu0 0.0
    %1412 = vmatpush1.msra.mxu0 0.0
    %1413 = vmatprep.subr.mxu0 0.0
    %1414 = vmatpush1.msra.mxu0 0.0
    %1415 = vmatprep.subr.mxu0 0.0
    %1416 = vmatpush1.msra.mxu0 0.0
    %1417 = vmatprep.subr.mxu0 0.0
    %1418 = vmatpush1.msra.mxu0 0.0
    %1419 = vmatprep.subr.mxu0 0.0
    %1420 = vmatpush1.msra.mxu0 0.0
    %1421 = vmatprep.subr.mxu0 0.0
    %1422 = vmatpush1.msra.mxu0 0.0
    %1423 = vmatprep.subr.mxu0 0.0
    %1424 = vmatpush1.msra.mxu0 0.0
    %1425 = vmatprep.subr.mxu0 0.0
    %1426 = vmatpush1.msra.mxu0 0.0
    %1427 = vmatprep.subr.mxu0 0.0
    %1428 = vmatpush1.msra.mxu0 0.0
    %1429 = vmatprep.subr.mxu0 0.0
    %1430 = vmatpush1.msra.mxu0 0.0
    %1431 = vmatprep.subr.mxu0 0.0
    %1432 = vmatpush1.msra.mxu0 0.0
    %1433 = vmatprep.subr.mxu0 0.0
    %1434 = vmatpush1.msra.mxu0 0.0
    %1435 = vmatprep.subr.mxu0 0.0
    %1436 = vmatpush1.msra.mxu0 0.0
    %1437 = vmatprep.subr.mxu0 0.0
    %1438 = vmatpush1.msra.mxu0 0.0
    %1439 = vmatprep.subr.mxu0 0.0
    %1440 = vmatpush1.msra.mxu0 0.0
    %1441 = vmatprep.subr.mxu0 0.0
    %1442 = vmatpush1.msra.mxu0 0.0
    %1443 = vmatprep.subr.mxu0 0.0
    %1444 = vmatpush1.msra.mxu0 0.0
    %1445 = vmatprep.subr.mxu0 0.0
    %1446 = vmatpush1.msra.mxu0 0.0
    %1447 = vmatprep.subr.mxu0 0.0
    %1448 = vmatpush1.msra.mxu0 0.0
    %1449 = vmatprep.subr.mxu0 0.0
    %1450 = vmatpush1.msra.mxu0 0.0
    %1451 = vmatprep.subr.mxu0 0.0
    %1452 = vmatpush1.msra.mxu0 0.0
    %1453 = vmatprep.mubr.f32.mxu0 0.0
    %1454 = vmatmul.mubr.f32.gmra.mrb[0].mxu0 %v90
    %v1455 = vpop.f32.mrb[0].mxu0
    %v1456 = vadd.f32 0.0, %v1455
    %v1457 = vpop.f32.mrb[0].mxu0
    %1458 = vdwg.mxu0
    %v1459 = vmul.f32 %v165, %v1456
    %1460 = vmatprep.subr.mxu0 0.0
    %1461 = vmatpush1.msra.mxu0 %v1459
    %1462 = vmatprep.subr.mxu0 0.0
    %1463 = vmatpush1.msra.mxu0 0.0
    %1464 = vmatprep.subr.mxu0 0.0
    %1465 = vmatpush1.msra.mxu0 0.0
    %1466 = vmatprep.subr.mxu0 0.0
    %1467 = vmatpush1.msra.mxu0 0.0
    %1468 = vmatprep.subr.mxu0 0.0
    %1469 = vmatpush1.msra.mxu0 0.0
    %1470 = vmatprep.subr.mxu0 0.0
    %1471 = vmatpush1.msra.mxu0 0.0
    %1472 = vmatprep.subr.mxu0 0.0
    %1473 = vmatpush1.msra.mxu0 0.0
    %1474 = vmatprep.subr.mxu0 0.0
    %1475 = vmatpush1.msra.mxu0 0.0
    %1476 = vmatprep.subr.mxu0 0.0
    %1477 = vmatpush1.msra.mxu0 0.0
    %1478 = vmatprep.subr.mxu0 0.0
    %1479 = vmatpush1.msra.mxu0 0.0
    %1480 = vmatprep.subr.mxu0 0.0
    %1481 = vmatpush1.msra.mxu0 0.0
    %1482 = vmatprep.subr.mxu0 0.0
    %1483 = vmatpush1.msra.mxu0 0.0
    %1484 = vmatprep.subr.mxu0 0.0
    %1485 = vmatpush1.msra.mxu0 0.0
    %1486 = vmatprep.subr.mxu0 0.0
    %1487 = vmatpush1.msra.mxu0 0.0
    %1488 = vmatprep.subr.mxu0 0.0
    %1489 = vmatpush1.msra.mxu0 0.0
    %1490 = vmatprep.subr.mxu0 0.0
    %1491 = vmatpush1.msra.mxu0 0.0
    %1492 = vmatprep.subr.mxu0 0.0
    %1493 = vmatpush1.msra.mxu0 0.0
    %1494 = vmatprep.subr.mxu0 0.0
    %1495 = vmatpush1.msra.mxu0 0.0
    %1496 = vmatprep.subr.mxu0 0.0
    %1497 = vmatpush1.msra.mxu0 0.0
    %1498 = vmatprep.subr.mxu0 0.0
    %1499 = vmatpush1.msra.mxu0 0.0
    %1500 = vmatprep.subr.mxu0 0.0
    %1501 = vmatpush1.msra.mxu0 0.0
    %1502 = vmatprep.subr.mxu0 0.0
    %1503 = vmatpush1.msra.mxu0 0.0
    %1504 = vmatprep.subr.mxu0 0.0
    %1505 = vmatpush1.msra.mxu0 0.0
    %1506 = vmatprep.subr.mxu0 0.0
    %1507 = vmatpush1.msra.mxu0 0.0
    %1508 = vmatprep.subr.mxu0 0.0
    %1509 = vmatpush1.msra.mxu0 0.0
    %1510 = vmatprep.subr.mxu0 0.0
    %1511 = vmatpush1.msra.mxu0 0.0
    %1512 = vmatprep.subr.mxu0 0.0
    %1513 = vmatpush1.msra.mxu0 0.0
    %1514 = vmatprep.subr.mxu0 0.0
    %1515 = vmatpush1.msra.mxu0 0.0
    %1516 = vmatprep.subr.mxu0 0.0
    %1517 = vmatpush1.msra.mxu0 0.0
    %1518 = vmatprep.subr.mxu0 0.0
    %1519 = vmatpush1.msra.mxu0 0.0
    %1520 = vmatprep.subr.mxu0 0.0
    %1521 = vmatpush1.msra.mxu0 0.0
    %1522 = vmatprep.subr.mxu0 0.0
    %1523 = vmatpush1.msra.mxu0 0.0
    %1524 = vmatprep.mubr.f32.mxu0 0.0
    %1525 = vmatmul.mubr.f32.gmra.mrb[0].mxu0 %v170
    %v1526 = vpop.f32.mrb[0].mxu0
    %v1527 = vadd.f32 0.0, %v1526
    %v1528 = vpop.f32.mrb[0].mxu0
    %1529 = vmatprep.mubr.f32.mxu0 0.0
    %1530 = vmatmul.mubr.f32.gmra.mrb[0].mxu0 %v173
    %v1531 = vpop.f32.mrb[0].mxu0
    %v1532 = vadd.f32 0.0, %v1531
    %v1533 = vpop.f32.mrb[0].mxu0
    %1534 = vdwg.mxu0
    %v1535 = vmul.f32 %v47, %v1527
    %v1536 = vmul.f32 %v52, %v1532
    %v1537 = vmul.f32 %v47, %v1535
    %v1538 = vmul.f32 %v52, %v1536
    %1539 = vmatprep.subr.mxu0 0.0
    %1540 = vmatpush1.msra.mxu0 %v1537
    %1541 = vmatprep.subr.mxu0 0.0
    %1542 = vmatpush1.msra.mxu0 %v1538
    %1543 = vmatprep.subr.mxu0 0.0
    %1544 = vmatpush1.msra.mxu0 0.0
    %1545 = vmatprep.subr.mxu0 0.0
    %1546 = vmatpush1.msra.mxu0 0.0
    %1547 = vmatprep.subr.mxu0 0.0
    %1548 = vmatpush1.msra.mxu0 0.0
    %1549 = vmatprep.subr.mxu0 0.0
    %1550 = vmatpush1.msra.mxu0 0.0
    %1551 = vmatprep.subr.mxu0 0.0
    %1552 = vmatpush1.msra.mxu0 0.0
    %1553 = vmatprep.subr.mxu0 0.0
    %1554 = vmatpush1.msra.mxu0 0.0
    %1555 = vmatprep.subr.mxu0 0.0
    %1556 = vmatpush1.msra.mxu0 0.0
    %1557 = vmatprep.subr.mxu0 0.0
    %1558 = vmatpush1.msra.mxu0 0.0
    %1559 = vmatprep.subr.mxu0 0.0
    %1560 = vmatpush1.msra.mxu0 0.0
    %1561 = vmatprep.subr.mxu0 0.0
    %1562 = vmatpush1.msra.mxu0 0.0
    %1563 = vmatprep.subr.mxu0 0.0
    %1564 = vmatpush1.msra.mxu0 0.0
    %1565 = vmatprep.subr.mxu0 0.0
    %1566 = vmatpush1.msra.mxu0 0.0
    %1567 = vmatprep.subr.mxu0 0.0
    %1568 = vmatpush1.msra.mxu0 0.0
    %1569 = vmatprep.subr.mxu0 0.0
    %1570 = vmatpush1.msra.mxu0 0.0
    %1571 = vmatprep.subr.mxu0 0.0
    %1572 = vmatpush1.msra.mxu0 0.0
    %1573 = vmatprep.subr.mxu0 0.0
    %1574 = vmatpush1.msra.mxu0 0.0
    %1575 = vmatprep.subr.mxu0 0.0
    %1576 = vmatpush1.msra.mxu0 0.0
    %1577 = vmatprep.subr.mxu0 0.0
    %1578 = vmatpush1.msra.mxu0 0.0
    %1579 = vmatprep.subr.mxu0 0.0
    %1580 = vmatpush1.msra.mxu0 0.0
    %1581 = vmatprep.subr.mxu0 0.0
    %1582 = vmatpush1.msra.mxu0 0.0
    %1583 = vmatprep.subr.mxu0 0.0
    %1584 = vmatpush1.msra.mxu0 0.0
    %1585 = vmatprep.subr.mxu0 0.0
    %1586 = vmatpush1.msra.mxu0 0.0
    %1587 = vmatprep.subr.mxu0 0.0
    %1588 = vmatpush1.msra.mxu0 0.0
    %1589 = vmatprep.subr.mxu0 0.0
    %1590 = vmatpush1.msra.mxu0 0.0
    %1591 = vmatprep.subr.mxu0 0.0
    %1592 = vmatpush1.msra.mxu0 0.0
    %1593 = vmatprep.subr.mxu0 0.0
    %1594 = vmatpush1.msra.mxu0 0.0
    %1595 = vmatprep.subr.mxu0 0.0
    %1596 = vmatpush1.msra.mxu0 0.0
    %1597 = vmatprep.subr.mxu0 0.0
    %1598 = vmatpush1.msra.mxu0 0.0
    %1599 = vmatprep.subr.mxu0 0.0
    %1600 = vmatpush1.msra.mxu0 0.0
    %1601 = vmatprep.subr.mxu0 0.0
    %1602 = vmatpush1.msra.mxu0 0.0
    %1603 = vmatprep.mubr.f32.mxu0 0.0
    %1604 = vmatmul.mubr.f32.gmra.mrb[0].mxu0 %v90
    %v1605 = vpop.f32.mrb[0].mxu0
    %v1606 = vadd.f32 0.0, %v1605
    %v1607 = vpop.f32.mrb[0].mxu0
    %1608 = vdwg.mxu0
    %v1609 = vmul.f32 %v165, %v1606
    %1610 = vmatprep.subr.mxu0 0.0
    %1611 = vmatpush1.msra.mxu0 %v1609
    %1612 = vmatprep.subr.mxu0 0.0
    %1613 = vmatpush1.msra.mxu0 0.0
    %1614 = vmatprep.subr.mxu0 0.0
    %1615 = vmatpush1.msra.mxu0 0.0
    %1616 = vmatprep.subr.mxu0 0.0
    %1617 = vmatpush1.msra.mxu0 0.0
    %1618 = vmatprep.subr.mxu0 0.0
    %1619 = vmatpush1.msra.mxu0 0.0
    %1620 = vmatprep.subr.mxu0 0.0
    %1621 = vmatpush1.msra.mxu0 0.0
    %1622 = vmatprep.subr.mxu0 0.0
    %1623 = vmatpush1.msra.mxu0 0.0
    %1624 = vmatprep.subr.mxu0 0.0
    %1625 = vmatpush1.msra.mxu0 0.0
    %1626 = vmatprep.subr.mxu0 0.0
    %1627 = vmatpush1.msra.mxu0 0.0
    %1628 = vmatprep.subr.mxu0 0.0
    %1629 = vmatpush1.msra.mxu0 0.0
    %1630 = vmatprep.subr.mxu0 0.0
    %1631 = vmatpush1.msra.mxu0 0.0
    %1632 = vmatprep.subr.mxu0 0.0
    %1633 = vmatpush1.msra.mxu0 0.0
    %1634 = vmatprep.subr.mxu0 0.0
    %1635 = vmatpush1.msra.mxu0 0.0
    %1636 = vmatprep.subr.mxu0 0.0
    %1637 = vmatpush1.msra.mxu0 0.0
    %1638 = vmatprep.subr.mxu0 0.0
    %1639 = vmatpush1.msra.mxu0 0.0
    %1640 = vmatprep.subr.mxu0 0.0
    %1641 = vmatpush1.msra.mxu0 0.0
    %1642 = vmatprep.subr.mxu0 0.0
    %1643 = vmatpush1.msra.mxu0 0.0
    %1644 = vmatprep.subr.mxu0 0.0
    %1645 = vmatpush1.msra.mxu0 0.0
    %1646 = vmatprep.subr.mxu0 0.0
    %1647 = vmatpush1.msra.mxu0 0.0
    %1648 = vmatprep.subr.mxu0 0.0
    %1649 = vmatpush1.msra.mxu0 0.0
    %1650 = vmatprep.subr.mxu0 0.0
    %1651 = vmatpush1.msra.mxu0 0.0
    %1652 = vmatprep.subr.mxu0 0.0
    %1653 = vmatpush1.msra.mxu0 0.0
    %1654 = vmatprep.subr.mxu0 0.0
    %1655 = vmatpush1.msra.mxu0 0.0
    %1656 = vmatprep.subr.mxu0 0.0
    %1657 = vmatpush1.msra.mxu0 0.0
    %1658 = vmatprep.subr.mxu0 0.0
    %1659 = vmatpush1.msra.mxu0 0.0
    %1660 = vmatprep.subr.mxu0 0.0
    %1661 = vmatpush1.msra.mxu0 0.0
    %1662 = vmatprep.subr.mxu0 0.0
    %1663 = vmatpush1.msra.mxu0 0.0
    %1664 = vmatprep.subr.mxu0 0.0
    %1665 = vmatpush1.msra.mxu0 0.0
    %1666 = vmatprep.subr.mxu0 0.0
    %1667 = vmatpush1.msra.mxu0 0.0
    %1668 = vmatprep.subr.mxu0 0.0
    %1669 = vmatpush1.msra.mxu0 0.0
    %1670 = vmatprep.subr.mxu0 0.0
    %1671 = vmatpush1.msra.mxu0 0.0
    %1672 = vmatprep.subr.mxu0 0.0
    %1673 = vmatpush1.msra.mxu0 0.0
    %1674 = vmatprep.mubr.f32.mxu0 0.0
    %1675 = vmatmul.mubr.f32.gmra.mrb[0].mxu0 %v170
    %v1676 = vpop.f32.mrb[0].mxu0
    %v1677 = vadd.f32 0.0, %v1676
    %v1678 = vpop.f32.mrb[0].mxu0
    %1679 = vmatprep.mubr.f32.mxu0 0.0
    %1680 = vmatmul.mubr.f32.gmra.mrb[0].mxu0 %v173
    %v1681 = vpop.f32.mrb[0].mxu0
    %v1682 = vadd.f32 0.0, %v1681
    %v1683 = vpop.f32.mrb[0].mxu0
    %1684 = vdwg.mxu0
    %v1685 = vmul.f32 %v47, %v1677
    %v1686 = vmul.f32 %v52, %v1682
    %v1687 = vmul.f32 %v47, %v1685
    %v1688 = vmul.f32 %v52, %v1686
    %1689 = vmatprep.subr.mxu0 0.0
    %1690 = vmatpush1.msra.mxu0 %v1687
    %1691 = vmatprep.subr.mxu0 0.0
    %1692 = vmatpush1.msra.mxu0 %v1688
    %1693 = vmatprep.subr.mxu0 0.0
    %1694 = vmatpush1.msra.mxu0 0.0
    %1695 = vmatprep.subr.mxu0 0.0
    %1696 = vmatpush1.msra.mxu0 0.0
    %1697 = vmatprep.subr.mxu0 0.0
    %1698 = vmatpush1.msra.mxu0 0.0
    %1699 = vmatprep.subr.mxu0 0.0
    %1700 = vmatpush1.msra.mxu0 0.0
    %1701 = vmatprep.subr.mxu0 0.0
    %1702 = vmatpush1.msra.mxu0 0.0
    %1703 = vmatprep.subr.mxu0 0.0
    %1704 = vmatpush1.msra.mxu0 0.0
    %1705 = vmatprep.subr.mxu0 0.0
    %1706 = vmatpush1.msra.mxu0 0.0
    %1707 = vmatprep.subr.mxu0 0.0
    %1708 = vmatpush1.msra.mxu0 0.0
    %1709 = vmatprep.subr.mxu0 0.0
    %1710 = vmatpush1.msra.mxu0 0.0
    %1711 = vmatprep.subr.mxu0 0.0
    %1712 = vmatpush1.msra.mxu0 0.0
    %1713 = vmatprep.subr.mxu0 0.0
    %1714 = vmatpush1.msra.mxu0 0.0
    %1715 = vmatprep.subr.mxu0 0.0
    %1716 = vmatpush1.msra.mxu0 0.0
    %1717 = vmatprep.subr.mxu0 0.0
    %1718 = vmatpush1.msra.mxu0 0.0
    %1719 = vmatprep.subr.mxu0 0.0
    %1720 = vmatpush1.msra.mxu0 0.0
    %1721 = vmatprep.subr.mxu0 0.0
    %1722 = vmatpush1.msra.mxu0 0.0
    %1723 = vmatprep.subr.mxu0 0.0
    %1724 = vmatpush1.msra.mxu0 0.0
    %1725 = vmatprep.subr.mxu0 0.0
    %1726 = vmatpush1.msra.mxu0 0.0
    %1727 = vmatprep.subr.mxu0 0.0
    %1728 = vmatpush1.msra.mxu0 0.0
    %1729 = vmatprep.subr.mxu0 0.0
    %1730 = vmatpush1.msra.mxu0 0.0
    %1731 = vmatprep.subr.mxu0 0.0
    %1732 = vmatpush1.msra.mxu0 0.0
    %1733 = vmatprep.subr.mxu0 0.0
    %1734 = vmatpush1.msra.mxu0 0.0
    %1735 = vmatprep.subr.mxu0 0.0
    %1736 = vmatpush1.msra.mxu0 0.0
    %1737 = vmatprep.subr.mxu0 0.0
    %1738 = vmatpush1.msra.mxu0 0.0
    %1739 = vmatprep.subr.mxu0 0.0
    %1740 = vmatpush1.msra.mxu0 0.0
    %1741 = vmatprep.subr.mxu0 0.0
    %1742 = vmatpush1.msra.mxu0 0.0
    %1743 = vmatprep.subr.mxu0 0.0
    %1744 = vmatpush1.msra.mxu0 0.0
    %1745 = vmatprep.subr.mxu0 0.0
    %1746 = vmatpush1.msra.mxu0 0.0
    %1747 = vmatprep.subr.mxu0 0.0
    %1748 = vmatpush1.msra.mxu0 0.0
    %1749 = vmatprep.subr.mxu0 0.0
    %1750 = vmatpush1.msra.mxu0 0.0
    %1751 = vmatprep.subr.mxu0 0.0
    %1752 = vmatpush1.msra.mxu0 0.0
    %1753 = vmatprep.mubr.f32.mxu0 0.0
    %1754 = vmatmul.mubr.f32.gmra.mrb[0].mxu0 %v90
    %v1755 = vpop.f32.mrb[0].mxu0
    %v1756 = vadd.f32 0.0, %v1755
    %v1757 = vpop.f32.mrb[0].mxu0
    %1758 = vdwg.mxu0
    %v1759 = vmul.f32 %v165, %v1756
    %1760 = vmatprep.subr.mxu0 0.0
    %1761 = vmatpush1.msra.mxu0 %v1759
    %1762 = vmatprep.subr.mxu0 0.0
    %1763 = vmatpush1.msra.mxu0 0.0
    %1764 = vmatprep.subr.mxu0 0.0
    %1765 = vmatpush1.msra.mxu0 0.0
    %1766 = vmatprep.subr.mxu0 0.0
    %1767 = vmatpush1.msra.mxu0 0.0
    %1768 = vmatprep.subr.mxu0 0.0
    %1769 = vmatpush1.msra.mxu0 0.0
    %1770 = vmatprep.subr.mxu0 0.0
    %1771 = vmatpush1.msra.mxu0 0.0
    %1772 = vmatprep.subr.mxu0 0.0
    %1773 = vmatpush1.msra.mxu0 0.0
    %1774 = vmatprep.subr.mxu0 0.0
    %1775 = vmatpush1.msra.mxu0 0.0
    %1776 = vmatprep.subr.mxu0 0.0
    %1777 = vmatpush1.msra.mxu0 0.0
    %1778 = vmatprep.subr.mxu0 0.0
    %1779 = vmatpush1.msra.mxu0 0.0
    %1780 = vmatprep.subr.mxu0 0.0
    %1781 = vmatpush1.msra.mxu0 0.0
    %1782 = vmatprep.subr.mxu0 0.0
    %1783 = vmatpush1.msra.mxu0 0.0
    %1784 = vmatprep.subr.mxu0 0.0
    %1785 = vmatpush1.msra.mxu0 0.0
    %1786 = vmatprep.subr.mxu0 0.0
    %1787 = vmatpush1.msra.mxu0 0.0
    %1788 = vmatprep.subr.mxu0 0.0
    %1789 = vmatpush1.msra.mxu0 0.0
    %1790 = vmatprep.subr.mxu0 0.0
    %1791 = vmatpush1.msra.mxu0 0.0
    %1792 = vmatprep.subr.mxu0 0.0
    %1793 = vmatpush1.msra.mxu0 0.0
    %1794 = vmatprep.subr.mxu0 0.0
    %1795 = vmatpush1.msra.mxu0 0.0
    %1796 = vmatprep.subr.mxu0 0.0
    %1797 = vmatpush1.msra.mxu0 0.0
    %1798 = vmatprep.subr.mxu0 0.0
    %1799 = vmatpush1.msra.mxu0 0.0
    %1800 = vmatprep.subr.mxu0 0.0
    %1801 = vmatpush1.msra.mxu0 0.0
    %1802 = vmatprep.subr.mxu0 0.0
    %1803 = vmatpush1.msra.mxu0 0.0
    %1804 = vmatprep.subr.mxu0 0.0
    %1805 = vmatpush1.msra.mxu0 0.0
    %1806 = vmatprep.subr.mxu0 0.0
    %1807 = vmatpush1.msra.mxu0 0.0
    %1808 = vmatprep.subr.mxu0 0.0
    %1809 = vmatpush1.msra.mxu0 0.0
    %1810 = vmatprep.subr.mxu0 0.0
    %1811 = vmatpush1.msra.mxu0 0.0
    %1812 = vmatprep.subr.mxu0 0.0
    %1813 = vmatpush1.msra.mxu0 0.0
    %1814 = vmatprep.subr.mxu0 0.0
    %1815 = vmatpush1.msra.mxu0 0.0
    %1816 = vmatprep.subr.mxu0 0.0
    %1817 = vmatpush1.msra.mxu0 0.0
    %1818 = vmatprep.subr.mxu0 0.0
    %1819 = vmatpush1.msra.mxu0 0.0
    %1820 = vmatprep.subr.mxu0 0.0
    %1821 = vmatpush1.msra.mxu0 0.0
    %1822 = vmatprep.subr.mxu0 0.0
    %1823 = vmatpush1.msra.mxu0 0.0
    %1824 = vmatprep.mubr.f32.mxu0 0.0
    %1825 = vmatmul.mubr.f32.gmra.mrb[0].mxu0 %v170
    %v1826 = vpop.f32.mrb[0].mxu0
    %v1827 = vadd.f32 0.0, %v1826
    %v1828 = vpop.f32.mrb[0].mxu0
    %1829 = vmatprep.mubr.f32.mxu0 0.0
    %1830 = vmatmul.mubr.f32.gmra.mrb[0].mxu0 %v173
    %v1831 = vpop.f32.mrb[0].mxu0
    %v1832 = vadd.f32 0.0, %v1831
    %v1833 = vpop.f32.mrb[0].mxu0
    %1834 = vdwg.mxu0
    %v1835 = vmul.f32 %v47, %v1827
    %v1836 = vmul.f32 %v52, %v1832
    %v1837 = vmul.f32 %v47, %v1835
    %v1838 = vmul.f32 %v52, %v1836
    %1839 = vmatprep.subr.mxu0 0.0
    %1840 = vmatpush1.msra.mxu0 %v1837
    %1841 = vmatprep.subr.mxu0 0.0
    %1842 = vmatpush1.msra.mxu0 %v1838
    %1843 = vmatprep.subr.mxu0 0.0
    %1844 = vmatpush1.msra.mxu0 0.0
    %1845 = vmatprep.subr.mxu0 0.0
    %1846 = vmatpush1.msra.mxu0 0.0
    %1847 = vmatprep.subr.mxu0 0.0
    %1848 = vmatpush1.msra.mxu0 0.0
    %1849 = vmatprep.subr.mxu0 0.0
    %1850 = vmatpush1.msra.mxu0 0.0
    %1851 = vmatprep.subr.mxu0 0.0
    %1852 = vmatpush1.msra.mxu0 0.0
    %1853 = vmatprep.subr.mxu0 0.0
    %1854 = vmatpush1.msra.mxu0 0.0
    %1855 = vmatprep.subr.mxu0 0.0
    %1856 = vmatpush1.msra.mxu0 0.0
    %1857 = vmatprep.subr.mxu0 0.0
    %1858 = vmatpush1.msra.mxu0 0.0
    %1859 = vmatprep.subr.mxu0 0.0
    %1860 = vmatpush1.msra.mxu0 0.0
    %1861 = vmatprep.subr.mxu0 0.0
    %1862 = vmatpush1.msra.mxu0 0.0
    %1863 = vmatprep.subr.mxu0 0.0
    %1864 = vmatpush1.msra.mxu0 0.0
    %1865 = vmatprep.subr.mxu0 0.0
    %1866 = vmatpush1.msra.mxu0 0.0
    %1867 = vmatprep.subr.mxu0 0.0
    %1868 = vmatpush1.msra.mxu0 0.0
    %1869 = vmatprep.subr.mxu0 0.0
    %1870 = vmatpush1.msra.mxu0 0.0
    %1871 = vmatprep.subr.mxu0 0.0
    %1872 = vmatpush1.msra.mxu0 0.0
    %1873 = vmatprep.subr.mxu0 0.0
    %1874 = vmatpush1.msra.mxu0 0.0
    %1875 = vmatprep.subr.mxu0 0.0
    %1876 = vmatpush1.msra.mxu0 0.0
    %1877 = vmatprep.subr.mxu0 0.0
    %1878 = vmatpush1.msra.mxu0 0.0
    %1879 = vmatprep.subr.mxu0 0.0
    %1880 = vmatpush1.msra.mxu0 0.0
    %1881 = vmatprep.subr.mxu0 0.0
    %1882 = vmatpush1.msra.mxu0 0.0
    %1883 = vmatprep.subr.mxu0 0.0
    %1884 = vmatpush1.msra.mxu0 0.0
    %1885 = vmatprep.subr.mxu0 0.0
    %1886 = vmatpush1.msra.mxu0 0.0
    %1887 = vmatprep.subr.mxu0 0.0
    %1888 = vmatpush1.msra.mxu0 0.0
    %1889 = vmatprep.subr.mxu0 0.0
    %1890 = vmatpush1.msra.mxu0 0.0
    %1891 = vmatprep.subr.mxu0 0.0
    %1892 = vmatpush1.msra.mxu0 0.0
    %1893 = vmatprep.subr.mxu0 0.0
    %1894 = vmatpush1.msra.mxu0 0.0
    %1895 = vmatprep.subr.mxu0 0.0
    %1896 = vmatpush1.msra.mxu0 0.0
    %1897 = vmatprep.subr.mxu0 0.0
    %1898 = vmatpush1.msra.mxu0 0.0
    %1899 = vmatprep.subr.mxu0 0.0
    %1900 = vmatpush1.msra.mxu0 0.0
    %1901 = vmatprep.subr.mxu0 0.0
    %1902 = vmatpush1.msra.mxu0 0.0
    %1903 = vmatprep.mubr.f32.mxu0 0.0
    %1904 = vmatmul.mubr.f32.gmra.mrb[0].mxu0 %v90
    %v1905 = vpop.f32.mrb[0].mxu0
    %v1906 = vadd.f32 0.0, %v1905
    %v1907 = vpop.f32.mrb[0].mxu0
    %1908 = vdwg.mxu0
    %v1909 = vmul.f32 %v165, %v1906
    %1910 = vmatprep.subr.mxu0 0.0
    %1911 = vmatpush1.msra.mxu0 %v1909
    %1912 = vmatprep.subr.mxu0 0.0
    %1913 = vmatpush1.msra.mxu0 0.0
    %1914 = vmatprep.subr.mxu0 0.0
    %1915 = vmatpush1.msra.mxu0 0.0
    %1916 = vmatprep.subr.mxu0 0.0
    %1917 = vmatpush1.msra.mxu0 0.0
    %1918 = vmatprep.subr.mxu0 0.0
    %1919 = vmatpush1.msra.mxu0 0.0
    %1920 = vmatprep.subr.mxu0 0.0
    %1921 = vmatpush1.msra.mxu0 0.0
    %1922 = vmatprep.subr.mxu0 0.0
    %1923 = vmatpush1.msra.mxu0 0.0
    %1924 = vmatprep.subr.mxu0 0.0
    %1925 = vmatpush1.msra.mxu0 0.0
    %1926 = vmatprep.subr.mxu0 0.0
    %1927 = vmatpush1.msra.mxu0 0.0
    %1928 = vmatprep.subr.mxu0 0.0
    %1929 = vmatpush1.msra.mxu0 0.0
    %1930 = vmatprep.subr.mxu0 0.0
    %1931 = vmatpush1.msra.mxu0 0.0
    %1932 = vmatprep.subr.mxu0 0.0
    %1933 = vmatpush1.msra.mxu0 0.0
    %1934 = vmatprep.subr.mxu0 0.0
    %1935 = vmatpush1.msra.mxu0 0.0
    %1936 = vmatprep.subr.mxu0 0.0
    %1937 = vmatpush1.msra.mxu0 0.0
    %1938 = vmatprep.subr.mxu0 0.0
    %1939 = vmatpush1.msra.mxu0 0.0
    %1940 = vmatprep.subr.mxu0 0.0
    %1941 = vmatpush1.msra.mxu0 0.0
    %1942 = vmatprep.subr.mxu0 0.0
    %1943 = vmatpush1.msra.mxu0 0.0
    %1944 = vmatprep.subr.mxu0 0.0
    %1945 = vmatpush1.msra.mxu0 0.0
    %1946 = vmatprep.subr.mxu0 0.0
    %1947 = vmatpush1.msra.mxu0 0.0
    %1948 = vmatprep.subr.mxu0 0.0
    %1949 = vmatpush1.msra.mxu0 0.0
    %1950 = vmatprep.subr.mxu0 0.0
    %1951 = vmatpush1.msra.mxu0 0.0
    %1952 = vmatprep.subr.mxu0 0.0
    %1953 = vmatpush1.msra.mxu0 0.0
    %1954 = vmatprep.subr.mxu0 0.0
    %1955 = vmatpush1.msra.mxu0 0.0
    %1956 = vmatprep.subr.mxu0 0.0
    %1957 = vmatpush1.msra.mxu0 0.0
    %1958 = vmatprep.subr.mxu0 0.0
    %1959 = vmatpush1.msra.mxu0 0.0
    %1960 = vmatprep.subr.mxu0 0.0
    %1961 = vmatpush1.msra.mxu0 0.0
    %1962 = vmatprep.subr.mxu0 0.0
    %1963 = vmatpush1.msra.mxu0 0.0
    %1964 = vmatprep.subr.mxu0 0.0
    %1965 = vmatpush1.msra.mxu0 0.0
    %1966 = vmatprep.subr.mxu0 0.0
    %1967 = vmatpush1.msra.mxu0 0.0
    %1968 = vmatprep.subr.mxu0 0.0
    %1969 = vmatpush1.msra.mxu0 0.0
    %1970 = vmatprep.subr.mxu0 0.0
    %1971 = vmatpush1.msra.mxu0 0.0
    %1972 = vmatprep.subr.mxu0 0.0
    %1973 = vmatpush1.msra.mxu0 0.0
    %1974 = vmatprep.mubr.f32.mxu0 0.0
    %1975 = vmatmul.mubr.f32.gmra.mrb[0].mxu0 %v170
    %v1976 = vpop.f32.mrb[0].mxu0
    %v1977 = vadd.f32 0.0, %v1976
    %v1978 = vpop.f32.mrb[0].mxu0
    %1979 = vmatprep.mubr.f32.mxu0 0.0
    %1980 = vmatmul.mubr.f32.gmra.mrb[0].mxu0 %v173
    %v1981 = vpop.f32.mrb[0].mxu0
    %v1982 = vadd.f32 0.0, %v1981
    %v1983 = vpop.f32.mrb[0].mxu0
    %1984 = vdwg.mxu0
    %v1985 = vmul.f32 %v47, %v1977
    %v1986 = vmul.f32 %v52, %v1982
    %v1987 = vmul.f32 %v47, %v1985
    %v1988 = vmul.f32 %v52, %v1986
    %1989 = vmatprep.subr.mxu0 0.0
    %1990 = vmatpush1.msra.mxu0 %v1987
    %1991 = vmatprep.subr.mxu0 0.0
    %1992 = vmatpush1.msra.mxu0 %v1988
    %1993 = vmatprep.subr.mxu0 0.0
    %1994 = vmatpush1.msra.mxu0 0.0
    %1995 = vmatprep.subr.mxu0 0.0
    %1996 = vmatpush1.msra.mxu0 0.0
    %1997 = vmatprep.subr.mxu0 0.0
    %1998 = vmatpush1.msra.mxu0 0.0
    %1999 = vmatprep.subr.mxu0 0.0
    %2000 = vmatpush1.msra.mxu0 0.0
    %2001 = vmatprep.subr.mxu0 0.0
    %2002 = vmatpush1.msra.mxu0 0.0
    %2003 = vmatprep.subr.mxu0 0.0
    %2004 = vmatpush1.msra.mxu0 0.0
    %2005 = vmatprep.subr.mxu0 0.0
    %2006 = vmatpush1.msra.mxu0 0.0
    %2007 = vmatprep.subr.mxu0 0.0
    %2008 = vmatpush1.msra.mxu0 0.0
    %2009 = vmatprep.subr.mxu0 0.0
    %2010 = vmatpush1.msra.mxu0 0.0
    %2011 = vmatprep.subr.mxu0 0.0
    %2012 = vmatpush1.msra.mxu0 0.0
    %2013 = vmatprep.subr.mxu0 0.0
    %2014 = vmatpush1.msra.mxu0 0.0
    %2015 = vmatprep.subr.mxu0 0.0
    %2016 = vmatpush1.msra.mxu0 0.0
    %2017 = vmatprep.subr.mxu0 0.0
    %2018 = vmatpush1.msra.mxu0 0.0
    %2019 = vmatprep.subr.mxu0 0.0
    %2020 = vmatpush1.msra.mxu0 0.0
    %2021 = vmatprep.subr.mxu0 0.0
    %2022 = vmatpush1.msra.mxu0 0.0
    %2023 = vmatprep.subr.mxu0 0.0
    %2024 = vmatpush1.msra.mxu0 0.0
    %2025 = vmatprep.subr.mxu0 0.0
    %2026 = vmatpush1.msra.mxu0 0.0
    %2027 = vmatprep.subr.mxu0 0.0
    %2028 = vmatpush1.msra.mxu0 0.0
    %2029 = vmatprep.subr.mxu0 0.0
    %2030 = vmatpush1.msra.mxu0 0.0
    %2031 = vmatprep.subr.mxu0 0.0
    %2032 = vmatpush1.msra.mxu0 0.0
    %2033 = vmatprep.subr.mxu0 0.0
    %2034 = vmatpush1.msra.mxu0 0.0
    %2035 = vmatprep.subr.mxu0 0.0
    %2036 = vmatpush1.msra.mxu0 0.0
    %2037 = vmatprep.subr.mxu0 0.0
    %2038 = vmatpush1.msra.mxu0 0.0
    %2039 = vmatprep.subr.mxu0 0.0
    %2040 = vmatpush1.msra.mxu0 0.0
    %2041 = vmatprep.subr.mxu0 0.0
    %2042 = vmatpush1.msra.mxu0 0.0
    %2043 = vmatprep.subr.mxu0 0.0
    %2044 = vmatpush1.msra.mxu0 0.0
    %2045 = vmatprep.subr.mxu0 0.0
    %2046 = vmatpush1.msra.mxu0 0.0
    %2047 = vmatprep.subr.mxu0 0.0
    %2048 = vmatpush1.msra.mxu0 0.0
    %2049 = vmatprep.subr.mxu0 0.0
    %2050 = vmatpush1.msra.mxu0 0.0
    %2051 = vmatprep.subr.mxu0 0.0
    %2052 = vmatpush1.msra.mxu0 0.0
    %2053 = vmatprep.mubr.f32.mxu0 0.0
    %2054 = vmatmul.mubr.f32.gmra.mrb[0].mxu0 %v90
    %v2055 = vpop.f32.mrb[0].mxu0
    %v2056 = vadd.f32 0.0, %v2055
    %v2057 = vpop.f32.mrb[0].mxu0
    %2058 = vdwg.mxu0
    %v2059 = vmul.f32 %v165, %v2056
    %2060 = vmatprep.subr.mxu0 0.0
    %2061 = vmatpush1.msra.mxu0 %v2059
    %2062 = vmatprep.subr.mxu0 0.0
    %2063 = vmatpush1.msra.mxu0 0.0
    %2064 = vmatprep.subr.mxu0 0.0
    %2065 = vmatpush1.msra.mxu0 0.0
    %2066 = vmatprep.subr.mxu0 0.0
    %2067 = vmatpush1.msra.mxu0 0.0
    %2068 = vmatprep.subr.mxu0 0.0
    %2069 = vmatpush1.msra.mxu0 0.0
    %2070 = vmatprep.subr.mxu0 0.0
    %2071 = vmatpush1.msra.mxu0 0.0
    %2072 = vmatprep.subr.mxu0 0.0
    %2073 = vmatpush1.msra.mxu0 0.0
    %2074 = vmatprep.subr.mxu0 0.0
    %2075 = vmatpush1.msra.mxu0 0.0
    %2076 = vmatprep.subr.mxu0 0.0
    %2077 = vmatpush1.msra.mxu0 0.0
    %2078 = vmatprep.subr.mxu0 0.0
    %2079 = vmatpush1.msra.mxu0 0.0
    %2080 = vmatprep.subr.mxu0 0.0
    %2081 = vmatpush1.msra.mxu0 0.0
    %2082 = vmatprep.subr.mxu0 0.0
    %2083 = vmatpush1.msra.mxu0 0.0
    %2084 = vmatprep.subr.mxu0 0.0
    %2085 = vmatpush1.msra.mxu0 0.0
    %2086 = vmatprep.subr.mxu0 0.0
    %2087 = vmatpush1.msra.mxu0 0.0
    %2088 = vmatprep.subr.mxu0 0.0
    %2089 = vmatpush1.msra.mxu0 0.0
    %2090 = vmatprep.subr.mxu0 0.0
    %2091 = vmatpush1.msra.mxu0 0.0
    %2092 = vmatprep.subr.mxu0 0.0
    %2093 = vmatpush1.msra.mxu0 0.0
    %2094 = vmatprep.subr.mxu0 0.0
    %2095 = vmatpush1.msra.mxu0 0.0
    %2096 = vmatprep.subr.mxu0 0.0
    %2097 = vmatpush1.msra.mxu0 0.0
    %2098 = vmatprep.subr.mxu0 0.0
    %2099 = vmatpush1.msra.mxu0 0.0
    %2100 = vmatprep.subr.mxu0 0.0
    %2101 = vmatpush1.msra.mxu0 0.0
    %2102 = vmatprep.subr.mxu0 0.0
    %2103 = vmatpush1.msra.mxu0 0.0
    %2104 = vmatprep.subr.mxu0 0.0
    %2105 = vmatpush1.msra.mxu0 0.0
    %2106 = vmatprep.subr.mxu0 0.0
    %2107 = vmatpush1.msra.mxu0 0.0
    %2108 = vmatprep.subr.mxu0 0.0
    %2109 = vmatpush1.msra.mxu0 0.0
    %2110 = vmatprep.subr.mxu0 0.0
    %2111 = vmatpush1.msra.mxu0 0.0
    %2112 = vmatprep.subr.mxu0 0.0
    %2113 = vmatpush1.msra.mxu0 0.0
    %2114 = vmatprep.subr.mxu0 0.0
    %2115 = vmatpush1.msra.mxu0 0.0
    %2116 = vmatprep.subr.mxu0 0.0
    %2117 = vmatpush1.msra.mxu0 0.0
    %2118 = vmatprep.subr.mxu0 0.0
    %2119 = vmatpush1.msra.mxu0 0.0
    %2120 = vmatprep.subr.mxu0 0.0
    %2121 = vmatpush1.msra.mxu0 0.0
    %2122 = vmatprep.subr.mxu0 0.0
    %2123 = vmatpush1.msra.mxu0 0.0
    %2124 = vmatprep.mubr.f32.mxu0 0.0
    %2125 = vmatmul.mubr.f32.gmra.mrb[0].mxu0 %v170
    %v2126 = vpop.f32.mrb[0].mxu0
    %v2127 = vadd.f32 0.0, %v2126
    %v2128 = vpop.f32.mrb[0].mxu0
    %2129 = vmatprep.mubr.f32.mxu0 0.0
    %2130 = vmatmul.mubr.f32.gmra.mrb[0].mxu0 %v173
    %v2131 = vpop.f32.mrb[0].mxu0
    %v2132 = vadd.f32 0.0, %v2131
    %v2133 = vpop.f32.mrb[0].mxu0
    %2134 = vdwg.mxu0
    %v2135 = vmul.f32 %v47, %v2127
    %v2136 = vmul.f32 %v52, %v2132
    %v2137 = vmul.f32 %v47, %v2135
    %v2138 = vmul.f32 %v52, %v2136
    %2139 = vmatprep.subr.mxu0 0.0
    %2140 = vmatpush1.msra.mxu0 %v2137
    %2141 = vmatprep.subr.mxu0 0.0
    %2142 = vmatpush1.msra.mxu0 %v2138
    %2143 = vmatprep.subr.mxu0 0.0
    %2144 = vmatpush1.msra.mxu0 0.0
    %2145 = vmatprep.subr.mxu0 0.0
    %2146 = vmatpush1.msra.mxu0 0.0
    %2147 = vmatprep.subr.mxu0 0.0
    %2148 = vmatpush1.msra.mxu0 0.0
    %2149 = vmatprep.subr.mxu0 0.0
    %2150 = vmatpush1.msra.mxu0 0.0
    %2151 = vmatprep.subr.mxu0 0.0
    %2152 = vmatpush1.msra.mxu0 0.0
    %2153 = vmatprep.subr.mxu0 0.0
    %2154 = vmatpush1.msra.mxu0 0.0
    %2155 = vmatprep.subr.mxu0 0.0
    %2156 = vmatpush1.msra.mxu0 0.0
    %2157 = vmatprep.subr.mxu0 0.0
    %2158 = vmatpush1.msra.mxu0 0.0
    %2159 = vmatprep.subr.mxu0 0.0
    %2160 = vmatpush1.msra.mxu0 0.0
    %2161 = vmatprep.subr.mxu0 0.0
    %2162 = vmatpush1.msra.mxu0 0.0
    %2163 = vmatprep.subr.mxu0 0.0
    %2164 = vmatpush1.msra.mxu0 0.0
    %2165 = vmatprep.subr.mxu0 0.0
    %2166 = vmatpush1.msra.mxu0 0.0
    %2167 = vmatprep.subr.mxu0 0.0
    %2168 = vmatpush1.msra.mxu0 0.0
    %2169 = vmatprep.subr.mxu0 0.0
    %2170 = vmatpush1.msra.mxu0 0.0
    %2171 = vmatprep.subr.mxu0 0.0
    %2172 = vmatpush1.msra.mxu0 0.0
    %2173 = vmatprep.subr.mxu0 0.0
    %2174 = vmatpush1.msra.mxu0 0.0
    %2175 = vmatprep.subr.mxu0 0.0
    %2176 = vmatpush1.msra.mxu0 0.0
    %2177 = vmatprep.subr.mxu0 0.0
    %2178 = vmatpush1.msra.mxu0 0.0
    %2179 = vmatprep.subr.mxu0 0.0
    %2180 = vmatpush1.msra.mxu0 0.0
    %2181 = vmatprep.subr.mxu0 0.0
    %2182 = vmatpush1.msra.mxu0 0.0
    %2183 = vmatprep.subr.mxu0 0.0
    %2184 = vmatpush1.msra.mxu0 0.0
    %2185 = vmatprep.subr.mxu0 0.0
    %2186 = vmatpush1.msra.mxu0 0.0
    %2187 = vmatprep.subr.mxu0 0.0
    %2188 = vmatpush1.msra.mxu0 0.0
    %2189 = vmatprep.subr.mxu0 0.0
    %2190 = vmatpush1.msra.mxu0 0.0
    %2191 = vmatprep.subr.mxu0 0.0
    %2192 = vmatpush1.msra.mxu0 0.0
    %2193 = vmatprep.subr.mxu0 0.0
    %2194 = vmatpush1.msra.mxu0 0.0
    %2195 = vmatprep.subr.mxu0 0.0
    %2196 = vmatpush1.msra.mxu0 0.0
    %2197 = vmatprep.subr.mxu0 0.0
    %2198 = vmatpush1.msra.mxu0 0.0
    %2199 = vmatprep.subr.mxu0 0.0
    %2200 = vmatpush1.msra.mxu0 0.0
    %2201 = vmatprep.subr.mxu0 0.0
    %2202 = vmatpush1.msra.mxu0 0.0
    %2203 = vmatprep.mubr.f32.mxu0 0.0
    %2204 = vmatmul.mubr.f32.gmra.mrb[0].mxu0 %v90
    %v2205 = vpop.f32.mrb[0].mxu0
    %v2206 = vadd.f32 0.0, %v2205
    %v2207 = vpop.f32.mrb[0].mxu0
    %2208 = vdwg.mxu0
    %v2209 = vmul.f32 %v165, %v2206
    %2210 = vmatprep.subr.mxu0 0.0
    %2211 = vmatpush1.msra.mxu0 %v2209
    %2212 = vmatprep.subr.mxu0 0.0
    %2213 = vmatpush1.msra.mxu0 0.0
    %2214 = vmatprep.subr.mxu0 0.0
    %2215 = vmatpush1.msra.mxu0 0.0
    %2216 = vmatprep.subr.mxu0 0.0
    %2217 = vmatpush1.msra.mxu0 0.0
    %2218 = vmatprep.subr.mxu0 0.0
    %2219 = vmatpush1.msra.mxu0 0.0
    %2220 = vmatprep.subr.mxu0 0.0
    %2221 = vmatpush1.msra.mxu0 0.0
    %2222 = vmatprep.subr.mxu0 0.0
    %2223 = vmatpush1.msra.mxu0 0.0
    %2224 = vmatprep.subr.mxu0 0.0
    %2225 = vmatpush1.msra.mxu0 0.0
    %2226 = vmatprep.subr.mxu0 0.0
    %2227 = vmatpush1.msra.mxu0 0.0
    %2228 = vmatprep.subr.mxu0 0.0
    %2229 = vmatpush1.msra.mxu0 0.0
    %2230 = vmatprep.subr.mxu0 0.0
    %2231 = vmatpush1.msra.mxu0 0.0
    %2232 = vmatprep.subr.mxu0 0.0
    %2233 = vmatpush1.msra.mxu0 0.0
    %2234 = vmatprep.subr.mxu0 0.0
    %2235 = vmatpush1.msra.mxu0 0.0
    %2236 = vmatprep.subr.mxu0 0.0
    %2237 = vmatpush1.msra.mxu0 0.0
    %2238 = vmatprep.subr.mxu0 0.0
    %2239 = vmatpush1.msra.mxu0 0.0
    %2240 = vmatprep.subr.mxu0 0.0
    %2241 = vmatpush1.msra.mxu0 0.0
    %2242 = vmatprep.subr.mxu0 0.0
    %2243 = vmatpush1.msra.mxu0 0.0
    %2244 = vmatprep.subr.mxu0 0.0
    %2245 = vmatpush1.msra.mxu0 0.0
    %2246 = vmatprep.subr.mxu0 0.0
    %2247 = vmatpush1.msra.mxu0 0.0
    %2248 = vmatprep.subr.mxu0 0.0
    %2249 = vmatpush1.msra.mxu0 0.0
    %2250 = vmatprep.subr.mxu0 0.0
    %2251 = vmatpush1.msra.mxu0 0.0
    %2252 = vmatprep.subr.mxu0 0.0
    %2253 = vmatpush1.msra.mxu0 0.0
    %2254 = vmatprep.subr.mxu0 0.0
    %2255 = vmatpush1.msra.mxu0 0.0
    %2256 = vmatprep.subr.mxu0 0.0
    %2257 = vmatpush1.msra.mxu0 0.0
    %2258 = vmatprep.subr.mxu0 0.0
    %2259 = vmatpush1.msra.mxu0 0.0
    %2260 = vmatprep.subr.mxu0 0.0
    %2261 = vmatpush1.msra.mxu0 0.0
    %2262 = vmatprep.subr.mxu0 0.0
    %2263 = vmatpush1.msra.mxu0 0.0
    %2264 = vmatprep.subr.mxu0 0.0
    %2265 = vmatpush1.msra.mxu0 0.0
    %2266 = vmatprep.subr.mxu0 0.0
    %2267 = vmatpush1.msra.mxu0 0.0
    %2268 = vmatprep.subr.mxu0 0.0
    %2269 = vmatpush1.msra.mxu0 0.0
    %2270 = vmatprep.subr.mxu0 0.0
    %2271 = vmatpush1.msra.mxu0 0.0
    %2272 = vmatprep.subr.mxu0 0.0
    %2273 = vmatpush1.msra.mxu0 0.0
    %2274 = vmatprep.mubr.f32.mxu0 0.0
    %2275 = vmatmul.mubr.f32.gmra.mrb[0].mxu0 %v170
    %v2276 = vpop.f32.mrb[0].mxu0
    %v2277 = vadd.f32 0.0, %v2276
    %v2278 = vpop.f32.mrb[0].mxu0
    %2279 = vmatprep.mubr.f32.mxu0 0.0
    %2280 = vmatmul.mubr.f32.gmra.mrb[0].mxu0 %v173
    %v2281 = vpop.f32.mrb[0].mxu0
    %v2282 = vadd.f32 0.0, %v2281
    %v2283 = vpop.f32.mrb[0].mxu0
    %2284 = vdwg.mxu0
    %v2285 = vmul.f32 %v47, %v2277
    %v2286 = vmul.f32 %v52, %v2282
    %v2287 = vmul.f32 %v47, %v2285
    %v2288 = vmul.f32 %v52, %v2286
    %2289 = vmatprep.subr.mxu0 0.0
    %2290 = vmatpush1.msra.mxu0 %v2287
    %2291 = vmatprep.subr.mxu0 0.0
    %2292 = vmatpush1.msra.mxu0 %v2288
    %2293 = vmatprep.subr.mxu0 0.0
    %2294 = vmatpush1.msra.mxu0 0.0
    %2295 = vmatprep.subr.mxu0 0.0
    %2296 = vmatpush1.msra.mxu0 0.0
    %2297 = vmatprep.subr.mxu0 0.0
    %2298 = vmatpush1.msra.mxu0 0.0
    %2299 = vmatprep.subr.mxu0 0.0
    %2300 = vmatpush1.msra.mxu0 0.0
    %2301 = vmatprep.subr.mxu0 0.0
    %2302 = vmatpush1.msra.mxu0 0.0
    %2303 = vmatprep.subr.mxu0 0.0
    %2304 = vmatpush1.msra.mxu0 0.0
    %2305 = vmatprep.subr.mxu0 0.0
    %2306 = vmatpush1.msra.mxu0 0.0
    %2307 = vmatprep.subr.mxu0 0.0
    %2308 = vmatpush1.msra.mxu0 0.0
    %2309 = vmatprep.subr.mxu0 0.0
    %2310 = vmatpush1.msra.mxu0 0.0
    %2311 = vmatprep.subr.mxu0 0.0
    %2312 = vmatpush1.msra.mxu0 0.0
    %2313 = vmatprep.subr.mxu0 0.0
    %2314 = vmatpush1.msra.mxu0 0.0
    %2315 = vmatprep.subr.mxu0 0.0
    %2316 = vmatpush1.msra.mxu0 0.0
    %2317 = vmatprep.subr.mxu0 0.0
    %2318 = vmatpush1.msra.mxu0 0.0
    %2319 = vmatprep.subr.mxu0 0.0
    %2320 = vmatpush1.msra.mxu0 0.0
    %2321 = vmatprep.subr.mxu0 0.0
    %2322 = vmatpush1.msra.mxu0 0.0
    %2323 = vmatprep.subr.mxu0 0.0
    %2324 = vmatpush1.msra.mxu0 0.0
    %2325 = vmatprep.subr.mxu0 0.0
    %2326 = vmatpush1.msra.mxu0 0.0
    %2327 = vmatprep.subr.mxu0 0.0
    %2328 = vmatpush1.msra.mxu0 0.0
    %2329 = vmatprep.subr.mxu0 0.0
    %2330 = vmatpush1.msra.mxu0 0.0
    %2331 = vmatprep.subr.mxu0 0.0
    %2332 = vmatpush1.msra.mxu0 0.0
    %2333 = vmatprep.subr.mxu0 0.0
    %2334 = vmatpush1.msra.mxu0 0.0
    %2335 = vmatprep.subr.mxu0 0.0
    %2336 = vmatpush1.msra.mxu0 0.0
    %2337 = vmatprep.subr.mxu0 0.0
    %2338 = vmatpush1.msra.mxu0 0.0
    %2339 = vmatprep.subr.mxu0 0.0
    %2340 = vmatpush1.msra.mxu0 0.0
    %2341 = vmatprep.subr.mxu0 0.0
    %2342 = vmatpush1.msra.mxu0 0.0
    %2343 = vmatprep.subr.mxu0 0.0
    %2344 = vmatpush1.msra.mxu0 0.0
    %2345 = vmatprep.subr.mxu0 0.0
    %2346 = vmatpush1.msra.mxu0 0.0
    %2347 = vmatprep.subr.mxu0 0.0
    %2348 = vmatpush1.msra.mxu0 0.0
    %2349 = vmatprep.subr.mxu0 0.0
    %2350 = vmatpush1.msra.mxu0 0.0
    %2351 = vmatprep.subr.mxu0 0.0
    %2352 = vmatpush1.msra.mxu0 0.0
    %2353 = vmatprep.mubr.f32.mxu0 0.0
    %2354 = vmatmul.mubr.f32.gmra.mrb[0].mxu0 %v90
    %v2355 = vpop.f32.mrb[0].mxu0
    %v2356 = vadd.f32 0.0, %v2355
    %v2357 = vpop.f32.mrb[0].mxu0
    %2358 = vdwg.mxu0
    %v2359 = vmul.f32 %v165, %v2356
    %2360 = vmatprep.subr.mxu0 0.0
    %2361 = vmatpush1.msra.mxu0 %v2359
    %2362 = vmatprep.subr.mxu0 0.0
    %2363 = vmatpush1.msra.mxu0 0.0
    %2364 = vmatprep.subr.mxu0 0.0
    %2365 = vmatpush1.msra.mxu0 0.0
    %2366 = vmatprep.subr.mxu0 0.0
    %2367 = vmatpush1.msra.mxu0 0.0
    %2368 = vmatprep.subr.mxu0 0.0
    %2369 = vmatpush1.msra.mxu0 0.0
    %2370 = vmatprep.subr.mxu0 0.0
    %2371 = vmatpush1.msra.mxu0 0.0
    %2372 = vmatprep.subr.mxu0 0.0
    %2373 = vmatpush1.msra.mxu0 0.0
    %2374 = vmatprep.subr.mxu0 0.0
    %2375 = vmatpush1.msra.mxu0 0.0
    %2376 = vmatprep.subr.mxu0 0.0
    %2377 = vmatpush1.msra.mxu0 0.0
    %2378 = vmatprep.subr.mxu0 0.0
    %2379 = vmatpush1.msra.mxu0 0.0
    %2380 = vmatprep.subr.mxu0 0.0
    %2381 = vmatpush1.msra.mxu0 0.0
    %2382 = vmatprep.subr.mxu0 0.0
    %2383 = vmatpush1.msra.mxu0 0.0
    %2384 = vmatprep.subr.mxu0 0.0
    %2385 = vmatpush1.msra.mxu0 0.0
    %2386 = vmatprep.subr.mxu0 0.0
    %2387 = vmatpush1.msra.mxu0 0.0
    %2388 = vmatprep.subr.mxu0 0.0
    %2389 = vmatpush1.msra.mxu0 0.0
    %2390 = vmatprep.subr.mxu0 0.0
    %2391 = vmatpush1.msra.mxu0 0.0
    %2392 = vmatprep.subr.mxu0 0.0
    %2393 = vmatpush1.msra.mxu0 0.0
    %2394 = vmatprep.subr.mxu0 0.0
    %2395 = vmatpush1.msra.mxu0 0.0
    %2396 = vmatprep.subr.mxu0 0.0
    %2397 = vmatpush1.msra.mxu0 0.0
    %2398 = vmatprep.subr.mxu0 0.0
    %2399 = vmatpush1.msra.mxu0 0.0
    %2400 = vmatprep.subr.mxu0 0.0
    %2401 = vmatpush1.msra.mxu0 0.0
    %2402 = vmatprep.subr.mxu0 0.0
    %2403 = vmatpush1.msra.mxu0 0.0
    %2404 = vmatprep.subr.mxu0 0.0
    %2405 = vmatpush1.msra.mxu0 0.0
    %2406 = vmatprep.subr.mxu0 0.0
    %2407 = vmatpush1.msra.mxu0 0.0
    %2408 = vmatprep.subr.mxu0 0.0
    %2409 = vmatpush1.msra.mxu0 0.0
    %2410 = vmatprep.subr.mxu0 0.0
    %2411 = vmatpush1.msra.mxu0 0.0
    %2412 = vmatprep.subr.mxu0 0.0
    %2413 = vmatpush1.msra.mxu0 0.0
    %2414 = vmatprep.subr.mxu0 0.0
    %2415 = vmatpush1.msra.mxu0 0.0
    %2416 = vmatprep.subr.mxu0 0.0
    %2417 = vmatpush1.msra.mxu0 0.0
    %2418 = vmatprep.subr.mxu0 0.0
    %2419 = vmatpush1.msra.mxu0 0.0
    %2420 = vmatprep.subr.mxu0 0.0
    %2421 = vmatpush1.msra.mxu0 0.0
    %2422 = vmatprep.subr.mxu0 0.0
    %2423 = vmatpush1.msra.mxu0 0.0
    %2424 = vmatprep.mubr.f32.mxu0 0.0
    %2425 = vmatmul.mubr.f32.gmra.mrb[0].mxu0 %v170
    %v2426 = vpop.f32.mrb[0].mxu0
    %v2427 = vadd.f32 0.0, %v2426
    %v2428 = vpop.f32.mrb[0].mxu0
    %2429 = vmatprep.mubr.f32.mxu0 0.0
    %2430 = vmatmul.mubr.f32.gmra.mrb[0].mxu0 %v173
    %v2431 = vpop.f32.mrb[0].mxu0
    %v2432 = vadd.f32 0.0, %v2431
    %v2433 = vpop.f32.mrb[0].mxu0
    %2434 = vdwg.mxu0
    %v2435 = vmul.f32 %v47, %v2427
    %v2436 = vmul.f32 %v52, %v2432
    %v2437 = vmul.f32 %v47, %v2435
    %v2438 = vmul.f32 %v52, %v2436
    %2439 = vmatprep.subr.mxu0 0.0
    %2440 = vmatpush1.msra.mxu0 %v2437
    %2441 = vmatprep.subr.mxu0 0.0
    %2442 = vmatpush1.msra.mxu0 %v2438
    %2443 = vmatprep.subr.mxu0 0.0
    %2444 = vmatpush1.msra.mxu0 0.0
    %2445 = vmatprep.subr.mxu0 0.0
    %2446 = vmatpush1.msra.mxu0 0.0
    %2447 = vmatprep.subr.mxu0 0.0
    %2448 = vmatpush1.msra.mxu0 0.0
    %2449 = vmatprep.subr.mxu0 0.0
    %2450 = vmatpush1.msra.mxu0 0.0
    %2451 = vmatprep.subr.mxu0 0.0
    %2452 = vmatpush1.msra.mxu0 0.0
    %2453 = vmatprep.subr.mxu0 0.0
    %2454 = vmatpush1.msra.mxu0 0.0
    %2455 = vmatprep.subr.mxu0 0.0
    %2456 = vmatpush1.msra.mxu0 0.0
    %2457 = vmatprep.subr.mxu0 0.0
    %2458 = vmatpush1.msra.mxu0 0.0
    %2459 = vmatprep.subr.mxu0 0.0
    %2460 = vmatpush1.msra.mxu0 0.0
    %2461 = vmatprep.subr.mxu0 0.0
    %2462 = vmatpush1.msra.mxu0 0.0
    %2463 = vmatprep.subr.mxu0 0.0
    %2464 = vmatpush1.msra.mxu0 0.0
    %2465 = vmatprep.subr.mxu0 0.0
    %2466 = vmatpush1.msra.mxu0 0.0
    %2467 = vmatprep.subr.mxu0 0.0
    %2468 = vmatpush1.msra.mxu0 0.0
    %2469 = vmatprep.subr.mxu0 0.0
    %2470 = vmatpush1.msra.mxu0 0.0
    %2471 = vmatprep.subr.mxu0 0.0
    %2472 = vmatpush1.msra.mxu0 0.0
    %2473 = vmatprep.subr.mxu0 0.0
    %2474 = vmatpush1.msra.mxu0 0.0
    %2475 = vmatprep.subr.mxu0 0.0
    %2476 = vmatpush1.msra.mxu0 0.0
    %2477 = vmatprep.subr.mxu0 0.0
    %2478 = vmatpush1.msra.mxu0 0.0
    %2479 = vmatprep.subr.mxu0 0.0
    %2480 = vmatpush1.msra.mxu0 0.0
    %2481 = vmatprep.subr.mxu0 0.0
    %2482 = vmatpush1.msra.mxu0 0.0
    %2483 = vmatprep.subr.mxu0 0.0
    %2484 = vmatpush1.msra.mxu0 0.0
    %2485 = vmatprep.subr.mxu0 0.0
    %2486 = vmatpush1.msra.mxu0 0.0
    %2487 = vmatprep.subr.mxu0 0.0
    %2488 = vmatpush1.msra.mxu0 0.0
    %2489 = vmatprep.subr.mxu0 0.0
    %2490 = vmatpush1.msra.mxu0 0.0
    %2491 = vmatprep.subr.mxu0 0.0
    %2492 = vmatpush1.msra.mxu0 0.0
    %2493 = vmatprep.subr.mxu0 0.0
    %2494 = vmatpush1.msra.mxu0 0.0
    %2495 = vmatprep.subr.mxu0 0.0
    %2496 = vmatpush1.msra.mxu0 0.0
    %2497 = vmatprep.subr.mxu0 0.0
    %2498 = vmatpush1.msra.mxu0 0.0
    %2499 = vmatprep.subr.mxu0 0.0
    %2500 = vmatpush1.msra.mxu0 0.0
    %2501 = vmatprep.subr.mxu0 0.0
    %2502 = vmatpush1.msra.mxu0 0.0
    %2503 = vmatprep.mubr.f32.mxu0 0.0
    %2504 = vmatmul.mubr.f32.gmra.mrb[0].mxu0 %v90
    %v2505 = vpop.f32.mrb[0].mxu0
    %v2506 = vadd.f32 0.0, %v2505
    %v2507 = vpop.f32.mrb[0].mxu0
    %2508 = vdwg.mxu0
    %v2509 = vmul.f32 %v165, %v2506
    %2510 = vmatprep.subr.mxu0 0.0
    %2511 = vmatpush1.msra.mxu0 %v2509
    %2512 = vmatprep.subr.mxu0 0.0
    %2513 = vmatpush1.msra.mxu0 0.0
    %2514 = vmatprep.subr.mxu0 0.0
    %2515 = vmatpush1.msra.mxu0 0.0
    %2516 = vmatprep.subr.mxu0 0.0
    %2517 = vmatpush1.msra.mxu0 0.0
    %2518 = vmatprep.subr.mxu0 0.0
    %2519 = vmatpush1.msra.mxu0 0.0
    %2520 = vmatprep.subr.mxu0 0.0
    %2521 = vmatpush1.msra.mxu0 0.0
    %2522 = vmatprep.subr.mxu0 0.0
    %2523 = vmatpush1.msra.mxu0 0.0
    %2524 = vmatprep.subr.mxu0 0.0
    %2525 = vmatpush1.msra.mxu0 0.0
    %2526 = vmatprep.subr.mxu0 0.0
    %2527 = vmatpush1.msra.mxu0 0.0
    %2528 = vmatprep.subr.mxu0 0.0
    %2529 = vmatpush1.msra.mxu0 0.0
    %2530 = vmatprep.subr.mxu0 0.0
    %2531 = vmatpush1.msra.mxu0 0.0
    %2532 = vmatprep.subr.mxu0 0.0
    %2533 = vmatpush1.msra.mxu0 0.0
    %2534 = vmatprep.subr.mxu0 0.0
    %2535 = vmatpush1.msra.mxu0 0.0
    %2536 = vmatprep.subr.mxu0 0.0
    %2537 = vmatpush1.msra.mxu0 0.0
    %2538 = vmatprep.subr.mxu0 0.0
    %2539 = vmatpush1.msra.mxu0 0.0
    %2540 = vmatprep.subr.mxu0 0.0
    %2541 = vmatpush1.msra.mxu0 0.0
    %2542 = vmatprep.subr.mxu0 0.0
    %2543 = vmatpush1.msra.mxu0 0.0
    %2544 = vmatprep.subr.mxu0 0.0
    %2545 = vmatpush1.msra.mxu0 0.0
    %2546 = vmatprep.subr.mxu0 0.0
    %2547 = vmatpush1.msra.mxu0 0.0
    %2548 = vmatprep.subr.mxu0 0.0
    %2549 = vmatpush1.msra.mxu0 0.0
    %2550 = vmatprep.subr.mxu0 0.0
    %2551 = vmatpush1.msra.mxu0 0.0
    %2552 = vmatprep.subr.mxu0 0.0
    %2553 = vmatpush1.msra.mxu0 0.0
    %2554 = vmatprep.subr.mxu0 0.0
    %2555 = vmatpush1.msra.mxu0 0.0
    %2556 = vmatprep.subr.mxu0 0.0
    %2557 = vmatpush1.msra.mxu0 0.0
    %2558 = vmatprep.subr.mxu0 0.0
    %2559 = vmatpush1.msra.mxu0 0.0
    %2560 = vmatprep.subr.mxu0 0.0
    %2561 = vmatpush1.msra.mxu0 0.0
    %2562 = vmatprep.subr.mxu0 0.0
    %2563 = vmatpush1.msra.mxu0 0.0
    %2564 = vmatprep.subr.mxu0 0.0
    %2565 = vmatpush1.msra.mxu0 0.0
    %2566 = vmatprep.subr.mxu0 0.0
    %2567 = vmatpush1.msra.mxu0 0.0
    %2568 = vmatprep.subr.mxu0 0.0
    %2569 = vmatpush1.msra.mxu0 0.0
    %2570 = vmatprep.subr.mxu0 0.0
    %2571 = vmatpush1.msra.mxu0 0.0
    %2572 = vmatprep.subr.mxu0 0.0
    %2573 = vmatpush1.msra.mxu0 0.0
    %2574 = vmatprep.mubr.f32.mxu0 0.0
    %2575 = vmatmul.mubr.f32.gmra.mrb[0].mxu0 %v170
    %v2576 = vpop.f32.mrb[0].mxu0
    %v2577 = vadd.f32 0.0, %v2576
    %v2578 = vpop.f32.mrb[0].mxu0
    %2579 = vmatprep.mubr.f32.mxu0 0.0
    %2580 = vmatmul.mubr.f32.gmra.mrb[0].mxu0 %v173
    %v2581 = vpop.f32.mrb[0].mxu0
    %v2582 = vadd.f32 0.0, %v2581
    %v2583 = vpop.f32.mrb[0].mxu0
    %2584 = vdwg.mxu0
    %v2585 = vmul.f32 %v47, %v2577
    %v2586 = vmul.f32 %v52, %v2582
    %v2587 = vmul.f32 %v255, %v2506
    %v2588 = vsub.f32 %v1362, %v2585
    %v2589 = vsub.f32 %v1363, %v2586
    %v2590 = vand.u32 2147483647, %v2588
    %v2591 = vand.u32 2147483647, %v2589
    %2594 = vrot.lane.b32.xlu0 %v2590, 16
    %v2595 = vpop.permute.xlu0 %2594
    %2596 = vrot.lane.b32.xlu0 %v2591, 16
    %v2597 = vpop.permute.xlu0 %2596
    %vm2600 = vcmask 162944
    %2601 = vst.msk [vmem:[#allocation2] sm:$0xff] %vm2600, %v2595
    %2602 = vst.msk [vmem:[#allocation2 + $0x8] sm:$0xff] %vm2600, %v2597
    %v2603 = vsub.f32 %v1364, %v2587
    %v2604 = vand.u32 2147483647, %v2603
    %2606 = vrot.lane.b32.xlu0 %v2604, 16
    %v2607 = vpop.permute.xlu0 %2606
    %2609 = vst.msk [vmem:[#allocation3] sm:$0xff] %vm2600, %v2607
    %v2610 = vand.u32 2147483647, %v2585
    %v2611 = vand.u32 2147483647, %v2586
    %2614 = vrot.lane.b32.xlu0 %v2610, 20
    %v2615 = vpop.permute.xlu0 %2614
    %2616 = vrot.lane.b32.xlu0 %v2611, 20
    %v2617 = vpop.permute.xlu0 %2616
    %vm2620 = vcmask 195744
    %2621 = vst.msk [vmem:[#allocation2] sm:$0xff] %vm2620, %v2615
    %2622 = vst.msk [vmem:[#allocation2 + $0x8] sm:$0xff] %vm2620, %v2617
    %v2623 = vand.u32 2147483647, %v2587
    %2625 = vrot.lane.b32.xlu0 %v2623, 20
    %v2626 = vpop.permute.xlu0 %2625
    %2628 = vst.msk [vmem:[#allocation3] sm:$0xff] %vm2620, %v2626
    %v2629 = vld [vmem:[#allocation2] sm:$0xff]
    %v2630 = vld [vmem:[#allocation2 + $0x8] sm:$0xff]
    %v2631 = vld [vmem:[#allocation3] sm:$0xff]
    %v2632 = vmul.f32 %v47, %v2629
    %v2633 = vmul.f32 %v52, %v2630
    %2634 = vmatprep.subr.mxu0 0.0
    %2635 = vmatpush1.msra.mxu0 %v2632
    %2636 = vmatprep.subr.mxu0 0.0
    %2637 = vmatpush1.msra.mxu0 %v2633
    %2638 = vmatprep.subr.mxu0 0.0
    %2639 = vmatpush1.msra.mxu0 0.0
    %2640 = vmatprep.subr.mxu0 0.0
    %2641 = vmatpush1.msra.mxu0 0.0
    %2642 = vmatprep.subr.mxu0 0.0
    %2643 = vmatpush1.msra.mxu0 0.0
    %2644 = vmatprep.subr.mxu0 0.0
    %2645 = vmatpush1.msra.mxu0 0.0
    %2646 = vmatprep.subr.mxu0 0.0
    %2647 = vmatpush1.msra.mxu0 0.0
    %2648 = vmatprep.subr.mxu0 0.0
    %2649 = vmatpush1.msra.mxu0 0.0
    %2650 = vmatprep.subr.mxu0 0.0
    %2651 = vmatpush1.msra.mxu0 0.0
    %2652 = vmatprep.subr.mxu0 0.0
    %2653 = vmatpush1.msra.mxu0 0.0
    %2654 = vmatprep.subr.mxu0 0.0
    %2655 = vmatpush1.msra.mxu0 0.0
    %2656 = vmatprep.subr.mxu0 0.0
    %2657 = vmatpush1.msra.mxu0 0.0
    %2658 = vmatprep.subr.mxu0 0.0
    %2659 = vmatpush1.msra.mxu0 0.0
    %2660 = vmatprep.subr.mxu0 0.0
    %2661 = vmatpush1.msra.mxu0 0.0
    %2662 = vmatprep.subr.mxu0 0.0
    %2663 = vmatpush1.msra.mxu0 0.0
    %2664 = vmatprep.subr.mxu0 0.0
    %2665 = vmatpush1.msra.mxu0 0.0
    %2666 = vmatprep.subr.mxu0 0.0
    %2667 = vmatpush1.msra.mxu0 0.0
    %2668 = vmatprep.subr.mxu0 0.0
    %2669 = vmatpush1.msra.mxu0 0.0
    %2670 = vmatprep.subr.mxu0 0.0
    %2671 = vmatpush1.msra.mxu0 0.0
    %2672 = vmatprep.subr.mxu0 0.0
    %2673 = vmatpush1.msra.mxu0 0.0
    %2674 = vmatprep.subr.mxu0 0.0
    %2675 = vmatpush1.msra.mxu0 0.0
    %2676 = vmatprep.subr.mxu0 0.0
    %2677 = vmatpush1.msra.mxu0 0.0
    %2678 = vmatprep.subr.mxu0 0.0
    %2679 = vmatpush1.msra.mxu0 0.0
    %2680 = vmatprep.subr.mxu0 0.0
    %2681 = vmatpush1.msra.mxu0 0.0
    %2682 = vmatprep.subr.mxu0 0.0
    %2683 = vmatpush1.msra.mxu0 0.0
    %2684 = vmatprep.subr.mxu0 0.0
    %2685 = vmatpush1.msra.mxu0 0.0
    %2686 = vmatprep.subr.mxu0 0.0
    %2687 = vmatpush1.msra.mxu0 0.0
    %2688 = vmatprep.subr.mxu0 0.0
    %2689 = vmatpush1.msra.mxu0 0.0
    %2690 = vmatprep.subr.mxu0 0.0
    %2691 = vmatpush1.msra.mxu0 0.0
    %2692 = vmatprep.subr.mxu0 0.0
    %2693 = vmatpush1.msra.mxu0 0.0
    %2694 = vmatprep.subr.mxu0 0.0
    %2695 = vmatpush1.msra.mxu0 0.0
    %2696 = vmatprep.subr.mxu0 0.0
    %2697 = vmatpush1.msra.mxu0 0.0
    %2698 = vmatprep.mubr.f32.mxu0 0.0
    %2699 = vmatmul.mubr.f32.gmra.mrb[0].mxu0 %v90
    %v2700 = vpop.f32.mrb[0].mxu0
    %v2701 = vadd.f32 0.0, %v2700
    %v2702 = vpop.f32.mrb[0].mxu0
    %2703 = vdwg.mxu0
    %v2704 = vmul.f32 %v165, %v2701
    %2705 = vmatprep.subr.mxu0 0.0
    %2706 = vmatpush1.msra.mxu0 %v2704
    %2707 = vmatprep.subr.mxu0 0.0
    %2708 = vmatpush1.msra.mxu0 0.0
    %2709 = vmatprep.subr.mxu0 0.0
    %2710 = vmatpush1.msra.mxu0 0.0
    %2711 = vmatprep.subr.mxu0 0.0
    %2712 = vmatpush1.msra.mxu0 0.0
    %2713 = vmatprep.subr.mxu0 0.0
    %2714 = vmatpush1.msra.mxu0 0.0
    %2715 = vmatprep.subr.mxu0 0.0
    %2716 = vmatpush1.msra.mxu0 0.0
    %2717 = vmatprep.subr.mxu0 0.0
    %2718 = vmatpush1.msra.mxu0 0.0
    %2719 = vmatprep.subr.mxu0 0.0
    %2720 = vmatpush1.msra.mxu0 0.0
    %2721 = vmatprep.subr.mxu0 0.0
    %2722 = vmatpush1.msra.mxu0 0.0
    %2723 = vmatprep.subr.mxu0 0.0
    %2724 = vmatpush1.msra.mxu0 0.0
    %2725 = vmatprep.subr.mxu0 0.0
    %2726 = vmatpush1.msra.mxu0 0.0
    %2727 = vmatprep.subr.mxu0 0.0
    %2728 = vmatpush1.msra.mxu0 0.0
    %2729 = vmatprep.subr.mxu0 0.0
    %2730 = vmatpush1.msra.mxu0 0.0
    %2731 = vmatprep.subr.mxu0 0.0
    %2732 = vmatpush1.msra.mxu0 0.0
    %2733 = vmatprep.subr.mxu0 0.0
    %2734 = vmatpush1.msra.mxu0 0.0
    %2735 = vmatprep.subr.mxu0 0.0
    %2736 = vmatpush1.msra.mxu0 0.0
    %2737 = vmatprep.subr.mxu0 0.0
    %2738 = vmatpush1.msra.mxu0 0.0
    %2739 = vmatprep.subr.mxu0 0.0
    %2740 = vmatpush1.msra.mxu0 0.0
    %2741 = vmatprep.subr.mxu0 0.0
    %2742 = vmatpush1.msra.mxu0 0.0
    %2743 = vmatprep.subr.mxu0 0.0
    %2744 = vmatpush1.msra.mxu0 0.0
    %2745 = vmatprep.subr.mxu0 0.0
    %2746 = vmatpush1.msra.mxu0 0.0
    %2747 = vmatprep.subr.mxu0 0.0
    %2748 = vmatpush1.msra.mxu0 0.0
    %2749 = vmatprep.subr.mxu0 0.0
    %2750 = vmatpush1.msra.mxu0 0.0
    %2751 = vmatprep.subr.mxu0 0.0
    %2752 = vmatpush1.msra.mxu0 0.0
    %2753 = vmatprep.subr.mxu0 0.0
    %2754 = vmatpush1.msra.mxu0 0.0
    %2755 = vmatprep.subr.mxu0 0.0
    %2756 = vmatpush1.msra.mxu0 0.0
    %2757 = vmatprep.subr.mxu0 0.0
    %2758 = vmatpush1.msra.mxu0 0.0
    %2759 = vmatprep.subr.mxu0 0.0
    %2760 = vmatpush1.msra.mxu0 0.0
    %2761 = vmatprep.subr.mxu0 0.0
    %2762 = vmatpush1.msra.mxu0 0.0
    %2763 = vmatprep.subr.mxu0 0.0
    %2764 = vmatpush1.msra.mxu0 0.0
    %2765 = vmatprep.subr.mxu0 0.0
    %2766 = vmatpush1.msra.mxu0 0.0
    %2767 = vmatprep.subr.mxu0 0.0
    %2768 = vmatpush1.msra.mxu0 0.0
    %2769 = vmatprep.mubr.f32.mxu0 0.0
    %2770 = vmatmul.mubr.f32.gmra.mrb[0].mxu0 %v170
    %v2771 = vpop.f32.mrb[0].mxu0
    %v2772 = vadd.f32 0.0, %v2771
    %v2773 = vpop.f32.mrb[0].mxu0
    %2774 = vmatprep.mubr.f32.mxu0 0.0
    %2775 = vmatmul.mubr.f32.gmra.mrb[0].mxu0 %v173
    %v2776 = vpop.f32.mrb[0].mxu0
    %v2777 = vadd.f32 0.0, %v2776
    %v2778 = vpop.f32.mrb[0].mxu0
    %2779 = vdwg.mxu0
    %v2780 = vmul.f32 %v47, %v2772
    %v2781 = vmul.f32 %v52, %v2777
    %v2782 = vmul.f32 %v255, %v2701
    %v2783 = vsub.f32 %v2629, %v2780
    %v2784 = vsub.f32 %v2630, %v2781
    %v2785 = vand.u32 2147483647, %v2783
    %v2786 = vand.u32 2147483647, %v2784
    %vm2787 = vcmask 195584
    %2788 = vst.msk [vmem:[#allocation4] sm:$0xff] %vm2787, %v2785
    %2789 = vst.msk [vmem:[#allocation4 + $0x10] sm:$0xff] %vm2787, %v2786
    %v2790 = vsub.f32 %v2631, %v2782
    %v2791 = vand.u32 2147483647, %v2790
    %2792 = vst.msk [vmem:[#allocation5] sm:$0xff] %vm2787, %v2791
    %v2793 = vmul.f32 %v47, %v2780
    %v2794 = vmul.f32 %v52, %v2781
    %2795 = vmatprep.subr.mxu0 0.0
    %2796 = vmatpush1.msra.mxu0 %v2793
    %2797 = vmatprep.subr.mxu0 0.0
    %2798 = vmatpush1.msra.mxu0 %v2794
    %2799 = vmatprep.subr.mxu0 0.0
    %2800 = vmatpush1.msra.mxu0 0.0
    %2801 = vmatprep.subr.mxu0 0.0
    %2802 = vmatpush1.msra.mxu0 0.0
    %2803 = vmatprep.subr.mxu0 0.0
    %2804 = vmatpush1.msra.mxu0 0.0
    %2805 = vmatprep.subr.mxu0 0.0
    %2806 = vmatpush1.msra.mxu0 0.0
    %2807 = vmatprep.subr.mxu0 0.0
    %2808 = vmatpush1.msra.mxu0 0.0
    %2809 = vmatprep.subr.mxu0 0.0
    %2810 = vmatpush1.msra.mxu0 0.0
    %2811 = vmatprep.subr.mxu0 0.0
    %2812 = vmatpush1.msra.mxu0 0.0
    %2813 = vmatprep.subr.mxu0 0.0
    %2814 = vmatpush1.msra.mxu0 0.0
    %2815 = vmatprep.subr.mxu0 0.0
    %2816 = vmatpush1.msra.mxu0 0.0
    %2817 = vmatprep.subr.mxu0 0.0
    %2818 = vmatpush1.msra.mxu0 0.0
    %2819 = vmatprep.subr.mxu0 0.0
    %2820 = vmatpush1.msra.mxu0 0.0
    %2821 = vmatprep.subr.mxu0 0.0
    %2822 = vmatpush1.msra.mxu0 0.0
    %2823 = vmatprep.subr.mxu0 0.0
    %2824 = vmatpush1.msra.mxu0 0.0
    %2825 = vmatprep.subr.mxu0 0.0
    %2826 = vmatpush1.msra.mxu0 0.0
    %2827 = vmatprep.subr.mxu0 0.0
    %2828 = vmatpush1.msra.mxu0 0.0
    %2829 = vmatprep.subr.mxu0 0.0
    %2830 = vmatpush1.msra.mxu0 0.0
    %2831 = vmatprep.subr.mxu0 0.0
    %2832 = vmatpush1.msra.mxu0 0.0
    %2833 = vmatprep.subr.mxu0 0.0
    %2834 = vmatpush1.msra.mxu0 0.0
    %2835 = vmatprep.subr.mxu0 0.0
    %2836 = vmatpush1.msra.mxu0 0.0
    %2837 = vmatprep.subr.mxu0 0.0
    %2838 = vmatpush1.msra.mxu0 0.0
    %2839 = vmatprep.subr.mxu0 0.0
    %2840 = vmatpush1.msra.mxu0 0.0
    %2841 = vmatprep.subr.mxu0 0.0
    %2842 = vmatpush1.msra.mxu0 0.0
    %2843 = vmatprep.subr.mxu0 0.0
    %2844 = vmatpush1.msra.mxu0 0.0
    %2845 = vmatprep.subr.mxu0 0.0
    %2846 = vmatpush1.msra.mxu0 0.0
    %2847 = vmatprep.subr.mxu0 0.0
    %2848 = vmatpush1.msra.mxu0 0.0
    %2849 = vmatprep.subr.mxu0 0.0
    %2850 = vmatpush1.msra.mxu0 0.0
    %2851 = vmatprep.subr.mxu0 0.0
    %2852 = vmatpush1.msra.mxu0 0.0
    %2853 = vmatprep.subr.mxu0 0.0
    %2854 = vmatpush1.msra.mxu0 0.0
    %2855 = vmatprep.subr.mxu0 0.0
    %2856 = vmatpush1.msra.mxu0 0.0
    %2857 = vmatprep.subr.mxu0 0.0
    %2858 = vmatpush1.msra.mxu0 0.0
    %2859 = vmatprep.mubr.f32.mxu0 0.0
    %2860 = vmatmul.mubr.f32.gmra.mrb[0].mxu0 %v90
    %v2861 = vpop.f32.mrb[0].mxu0
    %v2862 = vadd.f32 0.0, %v2861
    %v2863 = vpop.f32.mrb[0].mxu0
    %2864 = vdwg.mxu0
    %v2865 = vmul.f32 %v165, %v2862
    %2866 = vmatprep.subr.mxu0 0.0
    %2867 = vmatpush1.msra.mxu0 %v2865
    %2868 = vmatprep.subr.mxu0 0.0
    %2869 = vmatpush1.msra.mxu0 0.0
    %2870 = vmatprep.subr.mxu0 0.0
    %2871 = vmatpush1.msra.mxu0 0.0
    %2872 = vmatprep.subr.mxu0 0.0
    %2873 = vmatpush1.msra.mxu0 0.0
    %2874 = vmatprep.subr.mxu0 0.0
    %2875 = vmatpush1.msra.mxu0 0.0
    %2876 = vmatprep.subr.mxu0 0.0
    %2877 = vmatpush1.msra.mxu0 0.0
    %2878 = vmatprep.subr.mxu0 0.0
    %2879 = vmatpush1.msra.mxu0 0.0
    %2880 = vmatprep.subr.mxu0 0.0
    %2881 = vmatpush1.msra.mxu0 0.0
    %2882 = vmatprep.subr.mxu0 0.0
    %2883 = vmatpush1.msra.mxu0 0.0
    %2884 = vmatprep.subr.mxu0 0.0
    %2885 = vmatpush1.msra.mxu0 0.0
    %2886 = vmatprep.subr.mxu0 0.0
    %2887 = vmatpush1.msra.mxu0 0.0
    %2888 = vmatprep.subr.mxu0 0.0
    %2889 = vmatpush1.msra.mxu0 0.0
    %2890 = vmatprep.subr.mxu0 0.0
    %2891 = vmatpush1.msra.mxu0 0.0
    %2892 = vmatprep.subr.mxu0 0.0
    %2893 = vmatpush1.msra.mxu0 0.0
    %2894 = vmatprep.subr.mxu0 0.0
    %2895 = vmatpush1.msra.mxu0 0.0
    %2896 = vmatprep.subr.mxu0 0.0
    %2897 = vmatpush1.msra.mxu0 0.0
    %2898 = vmatprep.subr.mxu0 0.0
    %2899 = vmatpush1.msra.mxu0 0.0
    %2900 = vmatprep.subr.mxu0 0.0
    %2901 = vmatpush1.msra.mxu0 0.0
    %2902 = vmatprep.subr.mxu0 0.0
    %2903 = vmatpush1.msra.mxu0 0.0
    %2904 = vmatprep.subr.mxu0 0.0
    %2905 = vmatpush1.msra.mxu0 0.0
    %2906 = vmatprep.subr.mxu0 0.0
    %2907 = vmatpush1.msra.mxu0 0.0
    %2908 = vmatprep.subr.mxu0 0.0
    %2909 = vmatpush1.msra.mxu0 0.0
    %2910 = vmatprep.subr.mxu0 0.0
    %2911 = vmatpush1.msra.mxu0 0.0
    %2912 = vmatprep.subr.mxu0 0.0
    %2913 = vmatpush1.msra.mxu0 0.0
    %2914 = vmatprep.subr.mxu0 0.0
    %2915 = vmatpush1.msra.mxu0 0.0
    %2916 = vmatprep.subr.mxu0 0.0
    %2917 = vmatpush1.msra.mxu0 0.0
    %2918 = vmatprep.subr.mxu0 0.0
    %2919 = vmatpush1.msra.mxu0 0.0
    %2920 = vmatprep.subr.mxu0 0.0
    %2921 = vmatpush1.msra.mxu0 0.0
    %2922 = vmatprep.subr.mxu0 0.0
    %2923 = vmatpush1.msra.mxu0 0.0
    %2924 = vmatprep.subr.mxu0 0.0
    %2925 = vmatpush1.msra.mxu0 0.0
    %2926 = vmatprep.subr.mxu0 0.0
    %2927 = vmatpush1.msra.mxu0 0.0
    %2928 = vmatprep.subr.mxu0 0.0
    %2929 = vmatpush1.msra.mxu0 0.0
    %2930 = vmatprep.mubr.f32.mxu0 0.0
    %2931 = vmatmul.mubr.f32.gmra.mrb[0].mxu0 %v170
    %v2932 = vpop.f32.mrb[0].mxu0
    %v2933 = vadd.f32 0.0, %v2932
    %v2934 = vpop.f32.mrb[0].mxu0
    %2935 = vmatprep.mubr.f32.mxu0 0.0
    %2936 = vmatmul.mubr.f32.gmra.mrb[0].mxu0 %v173
    %v2937 = vpop.f32.mrb[0].mxu0
    %v2938 = vadd.f32 0.0, %v2937
    %v2939 = vpop.f32.mrb[0].mxu0
    %2940 = vdwg.mxu0
    %v2941 = vmul.f32 %v47, %v2933
    %v2942 = vmul.f32 %v52, %v2938
    %v2943 = vmul.f32 %v255, %v2862
    %v2944 = vsub.f32 %v2780, %v2941
    %v2945 = vsub.f32 %v2781, %v2942
    %v2946 = vand.u32 2147483647, %v2944
    %v2947 = vand.u32 2147483647, %v2945
    %2950 = vrot.lane.b32.xlu0 %v2946, 24
    %v2951 = vpop.permute.xlu0 %2950
    %2952 = vrot.lane.b32.xlu0 %v2947, 24
    %v2953 = vpop.permute.xlu0 %2952
    %vm2956 = vcmask 392384
    %2957 = vst.msk [vmem:[#allocation4] sm:$0xff] %vm2956, %v2951
    %2958 = vst.msk [vmem:[#allocation4 + $0x10] sm:$0xff] %vm2956, %v2953
    %v2959 = vsub.f32 %v2782, %v2943
    %v2960 = vand.u32 2147483647, %v2959
    %2962 = vrot.lane.b32.xlu0 %v2960, 24
    %v2963 = vpop.permute.xlu0 %2962
    %2965 = vst.msk [vmem:[#allocation5] sm:$0xff] %vm2956, %v2963
    %v2966 = vmul.f32 %v47, %v2941
    %v2967 = vmul.f32 %v52, %v2942
    %2968 = vmatprep.subr.mxu0 0.0
    %2969 = vmatpush1.msra.mxu0 %v2966
    %2970 = vmatprep.subr.mxu0 0.0
    %2971 = vmatpush1.msra.mxu0 %v2967
    %2972 = vmatprep.subr.mxu0 0.0
    %2973 = vmatpush1.msra.mxu0 0.0
    %2974 = vmatprep.subr.mxu0 0.0
    %2975 = vmatpush1.msra.mxu0 0.0
    %2976 = vmatprep.subr.mxu0 0.0
    %2977 = vmatpush1.msra.mxu0 0.0
    %2978 = vmatprep.subr.mxu0 0.0
    %2979 = vmatpush1.msra.mxu0 0.0
    %2980 = vmatprep.subr.mxu0 0.0
    %2981 = vmatpush1.msra.mxu0 0.0
    %2982 = vmatprep.subr.mxu0 0.0
    %2983 = vmatpush1.msra.mxu0 0.0
    %2984 = vmatprep.subr.mxu0 0.0
    %2985 = vmatpush1.msra.mxu0 0.0
    %2986 = vmatprep.subr.mxu0 0.0
    %2987 = vmatpush1.msra.mxu0 0.0
    %2988 = vmatprep.subr.mxu0 0.0
    %2989 = vmatpush1.msra.mxu0 0.0
    %2990 = vmatprep.subr.mxu0 0.0
    %2991 = vmatpush1.msra.mxu0 0.0
    %2992 = vmatprep.subr.mxu0 0.0
    %2993 = vmatpush1.msra.mxu0 0.0
    %2994 = vmatprep.subr.mxu0 0.0
    %2995 = vmatpush1.msra.mxu0 0.0
    %2996 = vmatprep.subr.mxu0 0.0
    %2997 = vmatpush1.msra.mxu0 0.0
    %2998 = vmatprep.subr.mxu0 0.0
    %2999 = vmatpush1.msra.mxu0 0.0
    %3000 = vmatprep.subr.mxu0 0.0
    %3001 = vmatpush1.msra.mxu0 0.0
    %3002 = vmatprep.subr.mxu0 0.0
    %3003 = vmatpush1.msra.mxu0 0.0
    %3004 = vmatprep.subr.mxu0 0.0
    %3005 = vmatpush1.msra.mxu0 0.0
    %3006 = vmatprep.subr.mxu0 0.0
    %3007 = vmatpush1.msra.mxu0 0.0
    %3008 = vmatprep.subr.mxu0 0.0
    %3009 = vmatpush1.msra.mxu0 0.0
    %3010 = vmatprep.subr.mxu0 0.0
    %3011 = vmatpush1.msra.mxu0 0.0
    %3012 = vmatprep.subr.mxu0 0.0
    %3013 = vmatpush1.msra.mxu0 0.0
    %3014 = vmatprep.subr.mxu0 0.0
    %3015 = vmatpush1.msra.mxu0 0.0
    %3016 = vmatprep.subr.mxu0 0.0
    %3017 = vmatpush1.msra.mxu0 0.0
    %3018 = vmatprep.subr.mxu0 0.0
    %3019 = vmatpush1.msra.mxu0 0.0
    %3020 = vmatprep.subr.mxu0 0.0
    %3021 = vmatpush1.msra.mxu0 0.0
    %3022 = vmatprep.subr.mxu0 0.0
    %3023 = vmatpush1.msra.mxu0 0.0
    %3024 = vmatprep.subr.mxu0 0.0
    %3025 = vmatpush1.msra.mxu0 0.0
    %3026 = vmatprep.subr.mxu0 0.0
    %3027 = vmatpush1.msra.mxu0 0.0
    %3028 = vmatprep.subr.mxu0 0.0
    %3029 = vmatpush1.msra.mxu0 0.0
    %3030 = vmatprep.subr.mxu0 0.0
    %3031 = vmatpush1.msra.mxu0 0.0
    %3032 = vmatprep.mubr.f32.mxu0 0.0
    %3033 = vmatmul.mubr.f32.gmra.mrb[0].mxu0 %v90
    %v3034 = vpop.f32.mrb[0].mxu0
    %v3035 = vadd.f32 0.0, %v3034
    %v3036 = vpop.f32.mrb[0].mxu0
    %3037 = vdwg.mxu0
    %v3038 = vmul.f32 %v165, %v3035
    %3039 = vmatprep.subr.mxu0 0.0
    %3040 = vmatpush1.msra.mxu0 %v3038
    %3041 = vmatprep.subr.mxu0 0.0
    %3042 = vmatpush1.msra.mxu0 0.0
    %3043 = vmatprep.subr.mxu0 0.0
    %3044 = vmatpush1.msra.mxu0 0.0
    %3045 = vmatprep.subr.mxu0 0.0
    %3046 = vmatpush1.msra.mxu0 0.0
    %3047 = vmatprep.subr.mxu0 0.0
    %3048 = vmatpush1.msra.mxu0 0.0
    %3049 = vmatprep.subr.mxu0 0.0
    %3050 = vmatpush1.msra.mxu0 0.0
    %3051 = vmatprep.subr.mxu0 0.0
    %3052 = vmatpush1.msra.mxu0 0.0
    %3053 = vmatprep.subr.mxu0 0.0
    %3054 = vmatpush1.msra.mxu0 0.0
    %3055 = vmatprep.subr.mxu0 0.0
    %3056 = vmatpush1.msra.mxu0 0.0
    %3057 = vmatprep.subr.mxu0 0.0
    %3058 = vmatpush1.msra.mxu0 0.0
    %3059 = vmatprep.subr.mxu0 0.0
    %3060 = vmatpush1.msra.mxu0 0.0
    %3061 = vmatprep.subr.mxu0 0.0
    %3062 = vmatpush1.msra.mxu0 0.0
    %3063 = vmatprep.subr.mxu0 0.0
    %3064 = vmatpush1.msra.mxu0 0.0
    %3065 = vmatprep.subr.mxu0 0.0
    %3066 = vmatpush1.msra.mxu0 0.0
    %3067 = vmatprep.subr.mxu0 0.0
    %3068 = vmatpush1.msra.mxu0 0.0
    %3069 = vmatprep.subr.mxu0 0.0
    %3070 = vmatpush1.msra.mxu0 0.0
    %3071 = vmatprep.subr.mxu0 0.0
    %3072 = vmatpush1.msra.mxu0 0.0
    %3073 = vmatprep.subr.mxu0 0.0
    %3074 = vmatpush1.msra.mxu0 0.0
    %3075 = vmatprep.subr.mxu0 0.0
    %3076 = vmatpush1.msra.mxu0 0.0
    %3077 = vmatprep.subr.mxu0 0.0
    %3078 = vmatpush1.msra.mxu0 0.0
    %3079 = vmatprep.subr.mxu0 0.0
    %3080 = vmatpush1.msra.mxu0 0.0
    %3081 = vmatprep.subr.mxu0 0.0
    %3082 = vmatpush1.msra.mxu0 0.0
    %3083 = vmatprep.subr.mxu0 0.0
    %3084 = vmatpush1.msra.mxu0 0.0
    %3085 = vmatprep.subr.mxu0 0.0
    %3086 = vmatpush1.msra.mxu0 0.0
    %3087 = vmatprep.subr.mxu0 0.0
    %3088 = vmatpush1.msra.mxu0 0.0
    %3089 = vmatprep.subr.mxu0 0.0
    %3090 = vmatpush1.msra.mxu0 0.0
    %3091 = vmatprep.subr.mxu0 0.0
    %3092 = vmatpush1.msra.mxu0 0.0
    %3093 = vmatprep.subr.mxu0 0.0
    %3094 = vmatpush1.msra.mxu0 0.0
    %3095 = vmatprep.subr.mxu0 0.0
    %3096 = vmatpush1.msra.mxu0 0.0
    %3097 = vmatprep.subr.mxu0 0.0
    %3098 = vmatpush1.msra.mxu0 0.0
    %3099 = vmatprep.subr.mxu0 0.0
    %3100 = vmatpush1.msra.mxu0 0.0
    %3101 = vmatprep.subr.mxu0 0.0
    %3102 = vmatpush1.msra.mxu0 0.0
    %3103 = vmatprep.mubr.f32.mxu0 0.0
    %3104 = vmatmul.mubr.f32.gmra.mrb[0].mxu0 %v170
    %v3105 = vpop.f32.mrb[0].mxu0
    %v3106 = vadd.f32 0.0, %v3105
    %v3107 = vpop.f32.mrb[0].mxu0
    %3108 = vmatprep.mubr.f32.mxu0 0.0
    %3109 = vmatmul.mubr.f32.gmra.mrb[0].mxu0 %v173
    %v3110 = vpop.f32.mrb[0].mxu0
    %v3111 = vadd.f32 0.0, %v3110
    %v3112 = vpop.f32.mrb[0].mxu0
    %3113 = vdwg.mxu0
    %v3114 = vmul.f32 %v47, %v3106
    %v3115 = vmul.f32 %v52, %v3111
    %v3116 = vmul.f32 %v47, %v3114
    %v3117 = vmul.f32 %v52, %v3115
    %3118 = vmatprep.subr.mxu0 0.0
    %3119 = vmatpush1.msra.mxu0 %v3116
    %3120 = vmatprep.subr.mxu0 0.0
    %3121 = vmatpush1.msra.mxu0 %v3117
    %3122 = vmatprep.subr.mxu0 0.0
    %3123 = vmatpush1.msra.mxu0 0.0
    %3124 = vmatprep.subr.mxu0 0.0
    %3125 = vmatpush1.msra.mxu0 0.0
    %3126 = vmatprep.subr.mxu0 0.0
    %3127 = vmatpush1.msra.mxu0 0.0
    %3128 = vmatprep.subr.mxu0 0.0
    %3129 = vmatpush1.msra.mxu0 0.0
    %3130 = vmatprep.subr.mxu0 0.0
    %3131 = vmatpush1.msra.mxu0 0.0
    %3132 = vmatprep.subr.mxu0 0.0
    %3133 = vmatpush1.msra.mxu0 0.0
    %3134 = vmatprep.subr.mxu0 0.0
    %3135 = vmatpush1.msra.mxu0 0.0
    %3136 = vmatprep.subr.mxu0 0.0
    %3137 = vmatpush1.msra.mxu0 0.0
    %3138 = vmatprep.subr.mxu0 0.0
    %3139 = vmatpush1.msra.mxu0 0.0
    %3140 = vmatprep.subr.mxu0 0.0
    %3141 = vmatpush1.msra.mxu0 0.0
    %3142 = vmatprep.subr.mxu0 0.0
    %3143 = vmatpush1.msra.mxu0 0.0
    %3144 = vmatprep.subr.mxu0 0.0
    %3145 = vmatpush1.msra.mxu0 0.0
    %3146 = vmatprep.subr.mxu0 0.0
    %3147 = vmatpush1.msra.mxu0 0.0
    %3148 = vmatprep.subr.mxu0 0.0
    %3149 = vmatpush1.msra.mxu0 0.0
    %3150 = vmatprep.subr.mxu0 0.0
    %3151 = vmatpush1.msra.mxu0 0.0
    %3152 = vmatprep.subr.mxu0 0.0
    %3153 = vmatpush1.msra.mxu0 0.0
    %3154 = vmatprep.subr.mxu0 0.0
    %3155 = vmatpush1.msra.mxu0 0.0
    %3156 = vmatprep.subr.mxu0 0.0
    %3157 = vmatpush1.msra.mxu0 0.0
    %3158 = vmatprep.subr.mxu0 0.0
    %3159 = vmatpush1.msra.mxu0 0.0
    %3160 = vmatprep.subr.mxu0 0.0
    %3161 = vmatpush1.msra.mxu0 0.0
    %3162 = vmatprep.subr.mxu0 0.0
    %3163 = vmatpush1.msra.mxu0 0.0
    %3164 = vmatprep.subr.mxu0 0.0
    %3165 = vmatpush1.msra.mxu0 0.0
    %3166 = vmatprep.subr.mxu0 0.0
    %3167 = vmatpush1.msra.mxu0 0.0
    %3168 = vmatprep.subr.mxu0 0.0
    %3169 = vmatpush1.msra.mxu0 0.0
    %3170 = vmatprep.subr.mxu0 0.0
    %3171 = vmatpush1.msra.mxu0 0.0
    %3172 = vmatprep.subr.mxu0 0.0
    %3173 = vmatpush1.msra.mxu0 0.0
    %3174 = vmatprep.subr.mxu0 0.0
    %3175 = vmatpush1.msra.mxu0 0.0
    %3176 = vmatprep.subr.mxu0 0.0
    %3177 = vmatpush1.msra.mxu0 0.0
    %3178 = vmatprep.subr.mxu0 0.0
    %3179 = vmatpush1.msra.mxu0 0.0
    %3180 = vmatprep.subr.mxu0 0.0
    %3181 = vmatpush1.msra.mxu0 0.0
    %3182 = vmatprep.mubr.f32.mxu0 0.0
    %3183 = vmatmul.mubr.f32.gmra.mrb[0].mxu0 %v90
    %v3184 = vpop.f32.mrb[0].mxu0
    %v3185 = vadd.f32 0.0, %v3184
    %v3186 = vpop.f32.mrb[0].mxu0
    %3187 = vdwg.mxu0
    %v3188 = vmul.f32 %v165, %v3185
    %3189 = vmatprep.subr.mxu0 0.0
    %3190 = vmatpush1.msra.mxu0 %v3188
    %3191 = vmatprep.subr.mxu0 0.0
    %3192 = vmatpush1.msra.mxu0 0.0
    %3193 = vmatprep.subr.mxu0 0.0
    %3194 = vmatpush1.msra.mxu0 0.0
    %3195 = vmatprep.subr.mxu0 0.0
    %3196 = vmatpush1.msra.mxu0 0.0
    %3197 = vmatprep.subr.mxu0 0.0
    %3198 = vmatpush1.msra.mxu0 0.0
    %3199 = vmatprep.subr.mxu0 0.0
    %3200 = vmatpush1.msra.mxu0 0.0
    %3201 = vmatprep.subr.mxu0 0.0
    %3202 = vmatpush1.msra.mxu0 0.0
    %3203 = vmatprep.subr.mxu0 0.0
    %3204 = vmatpush1.msra.mxu0 0.0
    %3205 = vmatprep.subr.mxu0 0.0
    %3206 = vmatpush1.msra.mxu0 0.0
    %3207 = vmatprep.subr.mxu0 0.0
    %3208 = vmatpush1.msra.mxu0 0.0
    %3209 = vmatprep.subr.mxu0 0.0
    %3210 = vmatpush1.msra.mxu0 0.0
    %3211 = vmatprep.subr.mxu0 0.0
    %3212 = vmatpush1.msra.mxu0 0.0
    %3213 = vmatprep.subr.mxu0 0.0
    %3214 = vmatpush1.msra.mxu0 0.0
    %3215 = vmatprep.subr.mxu0 0.0
    %3216 = vmatpush1.msra.mxu0 0.0
    %3217 = vmatprep.subr.mxu0 0.0
    %3218 = vmatpush1.msra.mxu0 0.0
    %3219 = vmatprep.subr.mxu0 0.0
    %3220 = vmatpush1.msra.mxu0 0.0
    %3221 = vmatprep.subr.mxu0 0.0
    %3222 = vmatpush1.msra.mxu0 0.0
    %3223 = vmatprep.subr.mxu0 0.0
    %3224 = vmatpush1.msra.mxu0 0.0
    %3225 = vmatprep.subr.mxu0 0.0
    %3226 = vmatpush1.msra.mxu0 0.0
    %3227 = vmatprep.subr.mxu0 0.0
    %3228 = vmatpush1.msra.mxu0 0.0
    %3229 = vmatprep.subr.mxu0 0.0
    %3230 = vmatpush1.msra.mxu0 0.0
    %3231 = vmatprep.subr.mxu0 0.0
    %3232 = vmatpush1.msra.mxu0 0.0
    %3233 = vmatprep.subr.mxu0 0.0
    %3234 = vmatpush1.msra.mxu0 0.0
    %3235 = vmatprep.subr.mxu0 0.0
    %3236 = vmatpush1.msra.mxu0 0.0
    %3237 = vmatprep.subr.mxu0 0.0
    %3238 = vmatpush1.msra.mxu0 0.0
    %3239 = vmatprep.subr.mxu0 0.0
    %3240 = vmatpush1.msra.mxu0 0.0
    %3241 = vmatprep.subr.mxu0 0.0
    %3242 = vmatpush1.msra.mxu0 0.0
    %3243 = vmatprep.subr.mxu0 0.0
    %3244 = vmatpush1.msra.mxu0 0.0
    %3245 = vmatprep.subr.mxu0 0.0
    %3246 = vmatpush1.msra.mxu0 0.0
    %3247 = vmatprep.subr.mxu0 0.0
    %3248 = vmatpush1.msra.mxu0 0.0
    %3249 = vmatprep.subr.mxu0 0.0
    %3250 = vmatpush1.msra.mxu0 0.0
    %3251 = vmatprep.subr.mxu0 0.0
    %3252 = vmatpush1.msra.mxu0 0.0
    %3253 = vmatprep.mubr.f32.mxu0 0.0
    %3254 = vmatmul.mubr.f32.gmra.mrb[0].mxu0 %v170
    %v3255 = vpop.f32.mrb[0].mxu0
    %v3256 = vadd.f32 0.0, %v3255
    %v3257 = vpop.f32.mrb[0].mxu0
    %3258 = vmatprep.mubr.f32.mxu0 0.0
    %3259 = vmatmul.mubr.f32.gmra.mrb[0].mxu0 %v173
    %v3260 = vpop.f32.mrb[0].mxu0
    %v3261 = vadd.f32 0.0, %v3260
    %v3262 = vpop.f32.mrb[0].mxu0
    %3263 = vdwg.mxu0
    %v3264 = vmul.f32 %v47, %v3256
    %v3265 = vmul.f32 %v52, %v3261
    %v3266 = vmul.f32 %v255, %v3185
    %v3267 = vsub.f32 %v2941, %v3264
    %v3268 = vsub.f32 %v2942, %v3265
    %v3269 = vand.u32 2147483647, %v3267
    %v3270 = vand.u32 2147483647, %v3268
    %3273 = vrot.lane.b32.xlu0 %v3269, 48
    %v3274 = vpop.permute.xlu0 %3273
    %3275 = vrot.lane.b32.xlu0 %v3270, 48
    %v3276 = vpop.permute.xlu0 %3275
    %vm3279 = vcmask 589184
    %3280 = vst.msk [vmem:[#allocation4] sm:$0xff] %vm3279, %v3274
    %3281 = vst.msk [vmem:[#allocation4 + $0x10] sm:$0xff] %vm3279, %v3276
    %v3282 = vsub.f32 %v2943, %v3266
    %v3283 = vand.u32 2147483647, %v3282
    %3285 = vrot.lane.b32.xlu0 %v3283, 48
    %v3286 = vpop.permute.xlu0 %3285
    %3288 = vst.msk [vmem:[#allocation5] sm:$0xff] %vm3279, %v3286
    %v3289 = vmul.f32 %v47, %v3264
    %v3290 = vmul.f32 %v52, %v3265
    %3291 = vmatprep.subr.mxu0 0.0
    %3292 = vmatpush1.msra.mxu0 %v3289
    %3293 = vmatprep.subr.mxu0 0.0
    %3294 = vmatpush1.msra.mxu0 %v3290
    %3295 = vmatprep.subr.mxu0 0.0
    %3296 = vmatpush1.msra.mxu0 0.0
    %3297 = vmatprep.subr.mxu0 0.0
    %3298 = vmatpush1.msra.mxu0 0.0
    %3299 = vmatprep.subr.mxu0 0.0
    %3300 = vmatpush1.msra.mxu0 0.0
    %3301 = vmatprep.subr.mxu0 0.0
    %3302 = vmatpush1.msra.mxu0 0.0
    %3303 = vmatprep.subr.mxu0 0.0
    %3304 = vmatpush1.msra.mxu0 0.0
    %3305 = vmatprep.subr.mxu0 0.0
    %3306 = vmatpush1.msra.mxu0 0.0
    %3307 = vmatprep.subr.mxu0 0.0
    %3308 = vmatpush1.msra.mxu0 0.0
    %3309 = vmatprep.subr.mxu0 0.0
    %3310 = vmatpush1.msra.mxu0 0.0
    %3311 = vmatprep.subr.mxu0 0.0
    %3312 = vmatpush1.msra.mxu0 0.0
    %3313 = vmatprep.subr.mxu0 0.0
    %3314 = vmatpush1.msra.mxu0 0.0
    %3315 = vmatprep.subr.mxu0 0.0
    %3316 = vmatpush1.msra.mxu0 0.0
    %3317 = vmatprep.subr.mxu0 0.0
    %3318 = vmatpush1.msra.mxu0 0.0
    %3319 = vmatprep.subr.mxu0 0.0
    %3320 = vmatpush1.msra.mxu0 0.0
    %3321 = vmatprep.subr.mxu0 0.0
    %3322 = vmatpush1.msra.mxu0 0.0
    %3323 = vmatprep.subr.mxu0 0.0
    %3324 = vmatpush1.msra.mxu0 0.0
    %3325 = vmatprep.subr.mxu0 0.0
    %3326 = vmatpush1.msra.mxu0 0.0
    %3327 = vmatprep.subr.mxu0 0.0
    %3328 = vmatpush1.msra.mxu0 0.0
    %3329 = vmatprep.subr.mxu0 0.0
    %3330 = vmatpush1.msra.mxu0 0.0
    %3331 = vmatprep.subr.mxu0 0.0
    %3332 = vmatpush1.msra.mxu0 0.0
    %3333 = vmatprep.subr.mxu0 0.0
    %3334 = vmatpush1.msra.mxu0 0.0
    %3335 = vmatprep.subr.mxu0 0.0
    %3336 = vmatpush1.msra.mxu0 0.0
    %3337 = vmatprep.subr.mxu0 0.0
    %3338 = vmatpush1.msra.mxu0 0.0
    %3339 = vmatprep.subr.mxu0 0.0
    %3340 = vmatpush1.msra.mxu0 0.0
    %3341 = vmatprep.subr.mxu0 0.0
    %3342 = vmatpush1.msra.mxu0 0.0
    %3343 = vmatprep.subr.mxu0 0.0
    %3344 = vmatpush1.msra.mxu0 0.0
    %3345 = vmatprep.subr.mxu0 0.0
    %3346 = vmatpush1.msra.mxu0 0.0
    %3347 = vmatprep.subr.mxu0 0.0
    %3348 = vmatpush1.msra.mxu0 0.0
    %3349 = vmatprep.subr.mxu0 0.0
    %3350 = vmatpush1.msra.mxu0 0.0
    %3351 = vmatprep.subr.mxu0 0.0
    %3352 = vmatpush1.msra.mxu0 0.0
    %3353 = vmatprep.subr.mxu0 0.0
    %3354 = vmatpush1.msra.mxu0 0.0
    %3355 = vmatprep.mubr.f32.mxu0 0.0
    %3356 = vmatmul.mubr.f32.gmra.mrb[0].mxu0 %v90
    %v3357 = vpop.f32.mrb[0].mxu0
    %v3358 = vadd.f32 0.0, %v3357
    %v3359 = vpop.f32.mrb[0].mxu0
    %3360 = vdwg.mxu0
    %v3361 = vmul.f32 %v165, %v3358
    %3362 = vmatprep.subr.mxu0 0.0
    %3363 = vmatpush1.msra.mxu0 %v3361
    %3364 = vmatprep.subr.mxu0 0.0
    %3365 = vmatpush1.msra.mxu0 0.0
    %3366 = vmatprep.subr.mxu0 0.0
    %3367 = vmatpush1.msra.mxu0 0.0
    %3368 = vmatprep.subr.mxu0 0.0
    %3369 = vmatpush1.msra.mxu0 0.0
    %3370 = vmatprep.subr.mxu0 0.0
    %3371 = vmatpush1.msra.mxu0 0.0
    %3372 = vmatprep.subr.mxu0 0.0
    %3373 = vmatpush1.msra.mxu0 0.0
    %3374 = vmatprep.subr.mxu0 0.0
    %3375 = vmatpush1.msra.mxu0 0.0
    %3376 = vmatprep.subr.mxu0 0.0
    %3377 = vmatpush1.msra.mxu0 0.0
    %3378 = vmatprep.subr.mxu0 0.0
    %3379 = vmatpush1.msra.mxu0 0.0
    %3380 = vmatprep.subr.mxu0 0.0
    %3381 = vmatpush1.msra.mxu0 0.0
    %3382 = vmatprep.subr.mxu0 0.0
    %3383 = vmatpush1.msra.mxu0 0.0
    %3384 = vmatprep.subr.mxu0 0.0
    %3385 = vmatpush1.msra.mxu0 0.0
    %3386 = vmatprep.subr.mxu0 0.0
    %3387 = vmatpush1.msra.mxu0 0.0
    %3388 = vmatprep.subr.mxu0 0.0
    %3389 = vmatpush1.msra.mxu0 0.0
    %3390 = vmatprep.subr.mxu0 0.0
    %3391 = vmatpush1.msra.mxu0 0.0
    %3392 = vmatprep.subr.mxu0 0.0
    %3393 = vmatpush1.msra.mxu0 0.0
    %3394 = vmatprep.subr.mxu0 0.0
    %3395 = vmatpush1.msra.mxu0 0.0
    %3396 = vmatprep.subr.mxu0 0.0
    %3397 = vmatpush1.msra.mxu0 0.0
    %3398 = vmatprep.subr.mxu0 0.0
    %3399 = vmatpush1.msra.mxu0 0.0
    %3400 = vmatprep.subr.mxu0 0.0
    %3401 = vmatpush1.msra.mxu0 0.0
    %3402 = vmatprep.subr.mxu0 0.0
    %3403 = vmatpush1.msra.mxu0 0.0
    %3404 = vmatprep.subr.mxu0 0.0
    %3405 = vmatpush1.msra.mxu0 0.0
    %3406 = vmatprep.subr.mxu0 0.0
    %3407 = vmatpush1.msra.mxu0 0.0
    %3408 = vmatprep.subr.mxu0 0.0
    %3409 = vmatpush1.msra.mxu0 0.0
    %3410 = vmatprep.subr.mxu0 0.0
    %3411 = vmatpush1.msra.mxu0 0.0
    %3412 = vmatprep.subr.mxu0 0.0
    %3413 = vmatpush1.msra.mxu0 0.0
    %3414 = vmatprep.subr.mxu0 0.0
    %3415 = vmatpush1.msra.mxu0 0.0
    %3416 = vmatprep.subr.mxu0 0.0
    %3417 = vmatpush1.msra.mxu0 0.0
    %3418 = vmatprep.subr.mxu0 0.0
    %3419 = vmatpush1.msra.mxu0 0.0
    %3420 = vmatprep.subr.mxu0 0.0
    %3421 = vmatpush1.msra.mxu0 0.0
    %3422 = vmatprep.subr.mxu0 0.0
    %3423 = vmatpush1.msra.mxu0 0.0
    %3424 = vmatprep.subr.mxu0 0.0
    %3425 = vmatpush1.msra.mxu0 0.0
    %3426 = vmatprep.mubr.f32.mxu0 0.0
    %3427 = vmatmul.mubr.f32.gmra.mrb[0].mxu0 %v170
    %v3428 = vpop.f32.mrb[0].mxu0
    %v3429 = vadd.f32 0.0, %v3428
    %v3430 = vpop.f32.mrb[0].mxu0
    %3431 = vmatprep.mubr.f32.mxu0 0.0
    %3432 = vmatmul.mubr.f32.gmra.mrb[0].mxu0 %v173
    %v3433 = vpop.f32.mrb[0].mxu0
    %v3434 = vadd.f32 0.0, %v3433
    %v3435 = vpop.f32.mrb[0].mxu0
    %3436 = vdwg.mxu0
    %v3437 = vmul.f32 %v47, %v3429
    %v3438 = vmul.f32 %v52, %v3434
    %v3439 = vmul.f32 %v47, %v3437
    %v3440 = vmul.f32 %v52, %v3438
    %3441 = vmatprep.subr.mxu0 0.0
    %3442 = vmatpush1.msra.mxu0 %v3439
    %3443 = vmatprep.subr.mxu0 0.0
    %3444 = vmatpush1.msra.mxu0 %v3440
    %3445 = vmatprep.subr.mxu0 0.0
    %3446 = vmatpush1.msra.mxu0 0.0
    %3447 = vmatprep.subr.mxu0 0.0
    %3448 = vmatpush1.msra.mxu0 0.0
    %3449 = vmatprep.subr.mxu0 0.0
    %3450 = vmatpush1.msra.mxu0 0.0
    %3451 = vmatprep.subr.mxu0 0.0
    %3452 = vmatpush1.msra.mxu0 0.0
    %3453 = vmatprep.subr.mxu0 0.0
    %3454 = vmatpush1.msra.mxu0 0.0
    %3455 = vmatprep.subr.mxu0 0.0
    %3456 = vmatpush1.msra.mxu0 0.0
    %3457 = vmatprep.subr.mxu0 0.0
    %3458 = vmatpush1.msra.mxu0 0.0
    %3459 = vmatprep.subr.mxu0 0.0
    %3460 = vmatpush1.msra.mxu0 0.0
    %3461 = vmatprep.subr.mxu0 0.0
    %3462 = vmatpush1.msra.mxu0 0.0
    %3463 = vmatprep.subr.mxu0 0.0
    %3464 = vmatpush1.msra.mxu0 0.0
    %3465 = vmatprep.subr.mxu0 0.0
    %3466 = vmatpush1.msra.mxu0 0.0
    %3467 = vmatprep.subr.mxu0 0.0
    %3468 = vmatpush1.msra.mxu0 0.0
    %3469 = vmatprep.subr.mxu0 0.0
    %3470 = vmatpush1.msra.mxu0 0.0
    %3471 = vmatprep.subr.mxu0 0.0
    %3472 = vmatpush1.msra.mxu0 0.0
    %3473 = vmatprep.subr.mxu0 0.0
    %3474 = vmatpush1.msra.mxu0 0.0
    %3475 = vmatprep.subr.mxu0 0.0
    %3476 = vmatpush1.msra.mxu0 0.0
    %3477 = vmatprep.subr.mxu0 0.0
    %3478 = vmatpush1.msra.mxu0 0.0
    %3479 = vmatprep.subr.mxu0 0.0
    %3480 = vmatpush1.msra.mxu0 0.0
    %3481 = vmatprep.subr.mxu0 0.0
    %3482 = vmatpush1.msra.mxu0 0.0
    %3483 = vmatprep.subr.mxu0 0.0
    %3484 = vmatpush1.msra.mxu0 0.0
    %3485 = vmatprep.subr.mxu0 0.0
    %3486 = vmatpush1.msra.mxu0 0.0
    %3487 = vmatprep.subr.mxu0 0.0
    %3488 = vmatpush1.msra.mxu0 0.0
    %3489 = vmatprep.subr.mxu0 0.0
    %3490 = vmatpush1.msra.mxu0 0.0
    %3491 = vmatprep.subr.mxu0 0.0
    %3492 = vmatpush1.msra.mxu0 0.0
    %3493 = vmatprep.subr.mxu0 0.0
    %3494 = vmatpush1.msra.mxu0 0.0
    %3495 = vmatprep.subr.mxu0 0.0
    %3496 = vmatpush1.msra.mxu0 0.0
    %3497 = vmatprep.subr.mxu0 0.0
    %3498 = vmatpush1.msra.mxu0 0.0
    %3499 = vmatprep.subr.mxu0 0.0
    %3500 = vmatpush1.msra.mxu0 0.0
    %3501 = vmatprep.subr.mxu0 0.0
    %3502 = vmatpush1.msra.mxu0 0.0
    %3503 = vmatprep.subr.mxu0 0.0
    %3504 = vmatpush1.msra.mxu0 0.0
    %3505 = vmatprep.mubr.f32.mxu0 0.0
    %3506 = vmatmul.mubr.f32.gmra.mrb[0].mxu0 %v90
    %v3507 = vpop.f32.mrb[0].mxu0
    %v3508 = vadd.f32 0.0, %v3507
    %v3509 = vpop.f32.mrb[0].mxu0
    %3510 = vdwg.mxu0
    %v3511 = vmul.f32 %v165, %v3508
    %3512 = vmatprep.subr.mxu0 0.0
    %3513 = vmatpush1.msra.mxu0 %v3511
    %3514 = vmatprep.subr.mxu0 0.0
    %3515 = vmatpush1.msra.mxu0 0.0
    %3516 = vmatprep.subr.mxu0 0.0
    %3517 = vmatpush1.msra.mxu0 0.0
    %3518 = vmatprep.subr.mxu0 0.0
    %3519 = vmatpush1.msra.mxu0 0.0
    %3520 = vmatprep.subr.mxu0 0.0
    %3521 = vmatpush1.msra.mxu0 0.0
    %3522 = vmatprep.subr.mxu0 0.0
    %3523 = vmatpush1.msra.mxu0 0.0
    %3524 = vmatprep.subr.mxu0 0.0
    %3525 = vmatpush1.msra.mxu0 0.0
    %3526 = vmatprep.subr.mxu0 0.0
    %3527 = vmatpush1.msra.mxu0 0.0
    %3528 = vmatprep.subr.mxu0 0.0
    %3529 = vmatpush1.msra.mxu0 0.0
    %3530 = vmatprep.subr.mxu0 0.0
    %3531 = vmatpush1.msra.mxu0 0.0
    %3532 = vmatprep.subr.mxu0 0.0
    %3533 = vmatpush1.msra.mxu0 0.0
    %3534 = vmatprep.subr.mxu0 0.0
    %3535 = vmatpush1.msra.mxu0 0.0
    %3536 = vmatprep.subr.mxu0 0.0
    %3537 = vmatpush1.msra.mxu0 0.0
    %3538 = vmatprep.subr.mxu0 0.0
    %3539 = vmatpush1.msra.mxu0 0.0
    %3540 = vmatprep.subr.mxu0 0.0
    %3541 = vmatpush1.msra.mxu0 0.0
    %3542 = vmatprep.subr.mxu0 0.0
    %3543 = vmatpush1.msra.mxu0 0.0
    %3544 = vmatprep.subr.mxu0 0.0
    %3545 = vmatpush1.msra.mxu0 0.0
    %3546 = vmatprep.subr.mxu0 0.0
    %3547 = vmatpush1.msra.mxu0 0.0
    %3548 = vmatprep.subr.mxu0 0.0
    %3549 = vmatpush1.msra.mxu0 0.0
    %3550 = vmatprep.subr.mxu0 0.0
    %3551 = vmatpush1.msra.mxu0 0.0
    %3552 = vmatprep.subr.mxu0 0.0
    %3553 = vmatpush1.msra.mxu0 0.0
    %3554 = vmatprep.subr.mxu0 0.0
    %3555 = vmatpush1.msra.mxu0 0.0
    %3556 = vmatprep.subr.mxu0 0.0
    %3557 = vmatpush1.msra.mxu0 0.0
    %3558 = vmatprep.subr.mxu0 0.0
    %3559 = vmatpush1.msra.mxu0 0.0
    %3560 = vmatprep.subr.mxu0 0.0
    %3561 = vmatpush1.msra.mxu0 0.0
    %3562 = vmatprep.subr.mxu0 0.0
    %3563 = vmatpush1.msra.mxu0 0.0
    %3564 = vmatprep.subr.mxu0 0.0
    %3565 = vmatpush1.msra.mxu0 0.0
    %3566 = vmatprep.subr.mxu0 0.0
    %3567 = vmatpush1.msra.mxu0 0.0
    %3568 = vmatprep.subr.mxu0 0.0
    %3569 = vmatpush1.msra.mxu0 0.0
    %3570 = vmatprep.subr.mxu0 0.0
    %3571 = vmatpush1.msra.mxu0 0.0
    %3572 = vmatprep.subr.mxu0 0.0
    %3573 = vmatpush1.msra.mxu0 0.0
    %3574 = vmatprep.subr.mxu0 0.0
    %3575 = vmatpush1.msra.mxu0 0.0
    %3576 = vmatprep.mubr.f32.mxu0 0.0
    %3577 = vmatmul.mubr.f32.gmra.mrb[0].mxu0 %v170
    %v3578 = vpop.f32.mrb[0].mxu0
    %v3579 = vadd.f32 0.0, %v3578
    %v3580 = vpop.f32.mrb[0].mxu0
    %3581 = vmatprep.mubr.f32.mxu0 0.0
    %3582 = vmatmul.mubr.f32.gmra.mrb[0].mxu0 %v173
    %v3583 = vpop.f32.mrb[0].mxu0
    %v3584 = vadd.f32 0.0, %v3583
    %v3585 = vpop.f32.mrb[0].mxu0
    %3586 = vdwg.mxu0
    %v3587 = vmul.f32 %v47, %v3579
    %v3588 = vmul.f32 %v52, %v3584
    %v3589 = vmul.f32 %v47, %v3587
    %v3590 = vmul.f32 %v52, %v3588
    %3591 = vmatprep.subr.mxu0 0.0
    %3592 = vmatpush1.msra.mxu0 %v3589
    %3593 = vmatprep.subr.mxu0 0.0
    %3594 = vmatpush1.msra.mxu0 %v3590
    %3595 = vmatprep.subr.mxu0 0.0
    %3596 = vmatpush1.msra.mxu0 0.0
    %3597 = vmatprep.subr.mxu0 0.0
    %3598 = vmatpush1.msra.mxu0 0.0
    %3599 = vmatprep.subr.mxu0 0.0
    %3600 = vmatpush1.msra.mxu0 0.0
    %3601 = vmatprep.subr.mxu0 0.0
    %3602 = vmatpush1.msra.mxu0 0.0
    %3603 = vmatprep.subr.mxu0 0.0
    %3604 = vmatpush1.msra.mxu0 0.0
    %3605 = vmatprep.subr.mxu0 0.0
    %3606 = vmatpush1.msra.mxu0 0.0
    %3607 = vmatprep.subr.mxu0 0.0
    %3608 = vmatpush1.msra.mxu0 0.0
    %3609 = vmatprep.subr.mxu0 0.0
    %3610 = vmatpush1.msra.mxu0 0.0
    %3611 = vmatprep.subr.mxu0 0.0
    %3612 = vmatpush1.msra.mxu0 0.0
    %3613 = vmatprep.subr.mxu0 0.0
    %3614 = vmatpush1.msra.mxu0 0.0
    %3615 = vmatprep.subr.mxu0 0.0
    %3616 = vmatpush1.msra.mxu0 0.0
    %3617 = vmatprep.subr.mxu0 0.0
    %3618 = vmatpush1.msra.mxu0 0.0
    %3619 = vmatprep.subr.mxu0 0.0
    %3620 = vmatpush1.msra.mxu0 0.0
    %3621 = vmatprep.subr.mxu0 0.0
    %3622 = vmatpush1.msra.mxu0 0.0
    %3623 = vmatprep.subr.mxu0 0.0
    %3624 = vmatpush1.msra.mxu0 0.0
    %3625 = vmatprep.subr.mxu0 0.0
    %3626 = vmatpush1.msra.mxu0 0.0
    %3627 = vmatprep.subr.mxu0 0.0
    %3628 = vmatpush1.msra.mxu0 0.0
    %3629 = vmatprep.subr.mxu0 0.0
    %3630 = vmatpush1.msra.mxu0 0.0
    %3631 = vmatprep.subr.mxu0 0.0
    %3632 = vmatpush1.msra.mxu0 0.0
    %3633 = vmatprep.subr.mxu0 0.0
    %3634 = vmatpush1.msra.mxu0 0.0
    %3635 = vmatprep.subr.mxu0 0.0
    %3636 = vmatpush1.msra.mxu0 0.0
    %3637 = vmatprep.subr.mxu0 0.0
    %3638 = vmatpush1.msra.mxu0 0.0
    %3639 = vmatprep.subr.mxu0 0.0
    %3640 = vmatpush1.msra.mxu0 0.0
    %3641 = vmatprep.subr.mxu0 0.0
    %3642 = vmatpush1.msra.mxu0 0.0
    %3643 = vmatprep.subr.mxu0 0.0
    %3644 = vmatpush1.msra.mxu0 0.0
    %3645 = vmatprep.subr.mxu0 0.0
    %3646 = vmatpush1.msra.mxu0 0.0
    %3647 = vmatprep.subr.mxu0 0.0
    %3648 = vmatpush1.msra.mxu0 0.0
    %3649 = vmatprep.subr.mxu0 0.0
    %3650 = vmatpush1.msra.mxu0 0.0
    %3651 = vmatprep.subr.mxu0 0.0
    %3652 = vmatpush1.msra.mxu0 0.0
    %3653 = vmatprep.subr.mxu0 0.0
    %3654 = vmatpush1.msra.mxu0 0.0
    %3655 = vmatprep.mubr.f32.mxu0 0.0
    %3656 = vmatmul.mubr.f32.gmra.mrb[0].mxu0 %v90
    %v3657 = vpop.f32.mrb[0].mxu0
    %v3658 = vadd.f32 0.0, %v3657
    %v3659 = vpop.f32.mrb[0].mxu0
    %3660 = vdwg.mxu0
    %v3661 = vmul.f32 %v165, %v3658
    %3662 = vmatprep.subr.mxu0 0.0
    %3663 = vmatpush1.msra.mxu0 %v3661
    %3664 = vmatprep.subr.mxu0 0.0
    %3665 = vmatpush1.msra.mxu0 0.0
    %3666 = vmatprep.subr.mxu0 0.0
    %3667 = vmatpush1.msra.mxu0 0.0
    %3668 = vmatprep.subr.mxu0 0.0
    %3669 = vmatpush1.msra.mxu0 0.0
    %3670 = vmatprep.subr.mxu0 0.0
    %3671 = vmatpush1.msra.mxu0 0.0
    %3672 = vmatprep.subr.mxu0 0.0
    %3673 = vmatpush1.msra.mxu0 0.0
    %3674 = vmatprep.subr.mxu0 0.0
    %3675 = vmatpush1.msra.mxu0 0.0
    %3676 = vmatprep.subr.mxu0 0.0
    %3677 = vmatpush1.msra.mxu0 0.0
    %3678 = vmatprep.subr.mxu0 0.0
    %3679 = vmatpush1.msra.mxu0 0.0
    %3680 = vmatprep.subr.mxu0 0.0
    %3681 = vmatpush1.msra.mxu0 0.0
    %3682 = vmatprep.subr.mxu0 0.0
    %3683 = vmatpush1.msra.mxu0 0.0
    %3684 = vmatprep.subr.mxu0 0.0
    %3685 = vmatpush1.msra.mxu0 0.0
    %3686 = vmatprep.subr.mxu0 0.0
    %3687 = vmatpush1.msra.mxu0 0.0
    %3688 = vmatprep.subr.mxu0 0.0
    %3689 = vmatpush1.msra.mxu0 0.0
    %3690 = vmatprep.subr.mxu0 0.0
    %3691 = vmatpush1.msra.mxu0 0.0
    %3692 = vmatprep.subr.mxu0 0.0
    %3693 = vmatpush1.msra.mxu0 0.0
    %3694 = vmatprep.subr.mxu0 0.0
    %3695 = vmatpush1.msra.mxu0 0.0
    %3696 = vmatprep.subr.mxu0 0.0
    %3697 = vmatpush1.msra.mxu0 0.0
    %3698 = vmatprep.subr.mxu0 0.0
    %3699 = vmatpush1.msra.mxu0 0.0
    %3700 = vmatprep.subr.mxu0 0.0
    %3701 = vmatpush1.msra.mxu0 0.0
    %3702 = vmatprep.subr.mxu0 0.0
    %3703 = vmatpush1.msra.mxu0 0.0
    %3704 = vmatprep.subr.mxu0 0.0
    %3705 = vmatpush1.msra.mxu0 0.0
    %3706 = vmatprep.subr.mxu0 0.0
    %3707 = vmatpush1.msra.mxu0 0.0
    %3708 = vmatprep.subr.mxu0 0.0
    %3709 = vmatpush1.msra.mxu0 0.0
    %3710 = vmatprep.subr.mxu0 0.0
    %3711 = vmatpush1.msra.mxu0 0.0
    %3712 = vmatprep.subr.mxu0 0.0
    %3713 = vmatpush1.msra.mxu0 0.0
    %3714 = vmatprep.subr.mxu0 0.0
    %3715 = vmatpush1.msra.mxu0 0.0
    %3716 = vmatprep.subr.mxu0 0.0
    %3717 = vmatpush1.msra.mxu0 0.0
    %3718 = vmatprep.subr.mxu0 0.0
    %3719 = vmatpush1.msra.mxu0 0.0
    %3720 = vmatprep.subr.mxu0 0.0
    %3721 = vmatpush1.msra.mxu0 0.0
    %3722 = vmatprep.subr.mxu0 0.0
    %3723 = vmatpush1.msra.mxu0 0.0
    %3724 = vmatprep.subr.mxu0 0.0
    %3725 = vmatpush1.msra.mxu0 0.0
    %3726 = vmatprep.mubr.f32.mxu0 0.0
    %3727 = vmatmul.mubr.f32.gmra.mrb[0].mxu0 %v170
    %v3728 = vpop.f32.mrb[0].mxu0
    %v3729 = vadd.f32 0.0, %v3728
    %v3730 = vpop.f32.mrb[0].mxu0
    %3731 = vmatprep.mubr.f32.mxu0 0.0
    %3732 = vmatmul.mubr.f32.gmra.mrb[0].mxu0 %v173
    %v3733 = vpop.f32.mrb[0].mxu0
    %v3734 = vadd.f32 0.0, %v3733
    %v3735 = vpop.f32.mrb[0].mxu0
    %3736 = vdwg.mxu0
    %v3737 = vmul.f32 %v47, %v3729
    %v3738 = vmul.f32 %v52, %v3734
    %v3739 = vmul.f32 %v47, %v3737
    %v3740 = vmul.f32 %v52, %v3738
    %3741 = vmatprep.subr.mxu0 0.0
    %3742 = vmatpush1.msra.mxu0 %v3739
    %3743 = vmatprep.subr.mxu0 0.0
    %3744 = vmatpush1.msra.mxu0 %v3740
    %3745 = vmatprep.subr.mxu0 0.0
    %3746 = vmatpush1.msra.mxu0 0.0
    %3747 = vmatprep.subr.mxu0 0.0
    %3748 = vmatpush1.msra.mxu0 0.0
    %3749 = vmatprep.subr.mxu0 0.0
    %3750 = vmatpush1.msra.mxu0 0.0
    %3751 = vmatprep.subr.mxu0 0.0
    %3752 = vmatpush1.msra.mxu0 0.0
    %3753 = vmatprep.subr.mxu0 0.0
    %3754 = vmatpush1.msra.mxu0 0.0
    %3755 = vmatprep.subr.mxu0 0.0
    %3756 = vmatpush1.msra.mxu0 0.0
    %3757 = vmatprep.subr.mxu0 0.0
    %3758 = vmatpush1.msra.mxu0 0.0
    %3759 = vmatprep.subr.mxu0 0.0
    %3760 = vmatpush1.msra.mxu0 0.0
    %3761 = vmatprep.subr.mxu0 0.0
    %3762 = vmatpush1.msra.mxu0 0.0
    %3763 = vmatprep.subr.mxu0 0.0
    %3764 = vmatpush1.msra.mxu0 0.0
    %3765 = vmatprep.subr.mxu0 0.0
    %3766 = vmatpush1.msra.mxu0 0.0
    %3767 = vmatprep.subr.mxu0 0.0
    %3768 = vmatpush1.msra.mxu0 0.0
    %3769 = vmatprep.subr.mxu0 0.0
    %3770 = vmatpush1.msra.mxu0 0.0
    %3771 = vmatprep.subr.mxu0 0.0
    %3772 = vmatpush1.msra.mxu0 0.0
    %3773 = vmatprep.subr.mxu0 0.0
    %3774 = vmatpush1.msra.mxu0 0.0
    %3775 = vmatprep.subr.mxu0 0.0
    %3776 = vmatpush1.msra.mxu0 0.0
    %3777 = vmatprep.subr.mxu0 0.0
    %3778 = vmatpush1.msra.mxu0 0.0
    %3779 = vmatprep.subr.mxu0 0.0
    %3780 = vmatpush1.msra.mxu0 0.0
    %3781 = vmatprep.subr.mxu0 0.0
    %3782 = vmatpush1.msra.mxu0 0.0
    %3783 = vmatprep.subr.mxu0 0.0
    %3784 = vmatpush1.msra.mxu0 0.0
    %3785 = vmatprep.subr.mxu0 0.0
    %3786 = vmatpush1.msra.mxu0 0.0
    %3787 = vmatprep.subr.mxu0 0.0
    %3788 = vmatpush1.msra.mxu0 0.0
    %3789 = vmatprep.subr.mxu0 0.0
    %3790 = vmatpush1.msra.mxu0 0.0
    %3791 = vmatprep.subr.mxu0 0.0
    %3792 = vmatpush1.msra.mxu0 0.0
    %3793 = vmatprep.subr.mxu0 0.0
    %3794 = vmatpush1.msra.mxu0 0.0
    %3795 = vmatprep.subr.mxu0 0.0
    %3796 = vmatpush1.msra.mxu0 0.0
    %3797 = vmatprep.subr.mxu0 0.0
    %3798 = vmatpush1.msra.mxu0 0.0
    %3799 = vmatprep.subr.mxu0 0.0
    %3800 = vmatpush1.msra.mxu0 0.0
    %3801 = vmatprep.subr.mxu0 0.0
    %3802 = vmatpush1.msra.mxu0 0.0
    %3803 = vmatprep.subr.mxu0 0.0
    %3804 = vmatpush1.msra.mxu0 0.0
    %3805 = vmatprep.mubr.f32.mxu0 0.0
    %3806 = vmatmul.mubr.f32.gmra.mrb[0].mxu0 %v90
    %v3807 = vpop.f32.mrb[0].mxu0
    %v3808 = vadd.f32 0.0, %v3807
    %v3809 = vpop.f32.mrb[0].mxu0
    %3810 = vdwg.mxu0
    %v3811 = vmul.f32 %v165, %v3808
    %3812 = vmatprep.subr.mxu0 0.0
    %3813 = vmatpush1.msra.mxu0 %v3811
    %3814 = vmatprep.subr.mxu0 0.0
    %3815 = vmatpush1.msra.mxu0 0.0
    %3816 = vmatprep.subr.mxu0 0.0
    %3817 = vmatpush1.msra.mxu0 0.0
    %3818 = vmatprep.subr.mxu0 0.0
    %3819 = vmatpush1.msra.mxu0 0.0
    %3820 = vmatprep.subr.mxu0 0.0
    %3821 = vmatpush1.msra.mxu0 0.0
    %3822 = vmatprep.subr.mxu0 0.0
    %3823 = vmatpush1.msra.mxu0 0.0
    %3824 = vmatprep.subr.mxu0 0.0
    %3825 = vmatpush1.msra.mxu0 0.0
    %3826 = vmatprep.subr.mxu0 0.0
    %3827 = vmatpush1.msra.mxu0 0.0
    %3828 = vmatprep.subr.mxu0 0.0
    %3829 = vmatpush1.msra.mxu0 0.0
    %3830 = vmatprep.subr.mxu0 0.0
    %3831 = vmatpush1.msra.mxu0 0.0
    %3832 = vmatprep.subr.mxu0 0.0
    %3833 = vmatpush1.msra.mxu0 0.0
    %3834 = vmatprep.subr.mxu0 0.0
    %3835 = vmatpush1.msra.mxu0 0.0
    %3836 = vmatprep.subr.mxu0 0.0
    %3837 = vmatpush1.msra.mxu0 0.0
    %3838 = vmatprep.subr.mxu0 0.0
    %3839 = vmatpush1.msra.mxu0 0.0
    %3840 = vmatprep.subr.mxu0 0.0
    %3841 = vmatpush1.msra.mxu0 0.0
    %3842 = vmatprep.subr.mxu0 0.0
    %3843 = vmatpush1.msra.mxu0 0.0
    %3844 = vmatprep.subr.mxu0 0.0
    %3845 = vmatpush1.msra.mxu0 0.0
    %3846 = vmatprep.subr.mxu0 0.0
    %3847 = vmatpush1.msra.mxu0 0.0
    %3848 = vmatprep.subr.mxu0 0.0
    %3849 = vmatpush1.msra.mxu0 0.0
    %3850 = vmatprep.subr.mxu0 0.0
    %3851 = vmatpush1.msra.mxu0 0.0
    %3852 = vmatprep.subr.mxu0 0.0
    %3853 = vmatpush1.msra.mxu0 0.0
    %3854 = vmatprep.subr.mxu0 0.0
    %3855 = vmatpush1.msra.mxu0 0.0
    %3856 = vmatprep.subr.mxu0 0.0
    %3857 = vmatpush1.msra.mxu0 0.0
    %3858 = vmatprep.subr.mxu0 0.0
    %3859 = vmatpush1.msra.mxu0 0.0
    %3860 = vmatprep.subr.mxu0 0.0
    %3861 = vmatpush1.msra.mxu0 0.0
    %3862 = vmatprep.subr.mxu0 0.0
    %3863 = vmatpush1.msra.mxu0 0.0
    %3864 = vmatprep.subr.mxu0 0.0
    %3865 = vmatpush1.msra.mxu0 0.0
    %3866 = vmatprep.subr.mxu0 0.0
    %3867 = vmatpush1.msra.mxu0 0.0
    %3868 = vmatprep.subr.mxu0 0.0
    %3869 = vmatpush1.msra.mxu0 0.0
    %3870 = vmatprep.subr.mxu0 0.0
    %3871 = vmatpush1.msra.mxu0 0.0
    %3872 = vmatprep.subr.mxu0 0.0
    %3873 = vmatpush1.msra.mxu0 0.0
    %3874 = vmatprep.subr.mxu0 0.0
    %3875 = vmatpush1.msra.mxu0 0.0
    %3876 = vmatprep.mubr.f32.mxu0 0.0
    %3877 = vmatmul.mubr.f32.gmra.mrb[0].mxu0 %v170
    %v3878 = vpop.f32.mrb[0].mxu0
    %v3879 = vadd.f32 0.0, %v3878
    %v3880 = vpop.f32.mrb[0].mxu0
    %3881 = vmatprep.mubr.f32.mxu0 0.0
    %3882 = vmatmul.mubr.f32.gmra.mrb[0].mxu0 %v173
    %v3883 = vpop.f32.mrb[0].mxu0
    %v3884 = vadd.f32 0.0, %v3883
    %v3885 = vpop.f32.mrb[0].mxu0
    %3886 = vdwg.mxu0
    %v3887 = vmul.f32 %v47, %v3879
    %v3888 = vmul.f32 %v52, %v3884
    %v3889 = vmul.f32 %v255, %v3808
    %v3890 = vsub.f32 %v3264, %v3887
    %v3891 = vsub.f32 %v3265, %v3888
    %v3892 = vand.u32 2147483647, %v3890
    %v3893 = vand.u32 2147483647, %v3891
    %3896 = vrot.lane.b32.xlu0 %v3892, 72
    %v3897 = vpop.permute.xlu0 %3896
    %3898 = vrot.lane.b32.xlu0 %v3893, 72
    %v3899 = vpop.permute.xlu0 %3898
    %vm3902 = vcmask 785984
    %3903 = vst.msk [vmem:[#allocation4] sm:$0xff] %vm3902, %v3897
    %3904 = vst.msk [vmem:[#allocation4 + $0x10] sm:$0xff] %vm3902, %v3899
    %v3905 = vsub.f32 %v3266, %v3889
    %v3906 = vand.u32 2147483647, %v3905
    %3908 = vrot.lane.b32.xlu0 %v3906, 72
    %v3909 = vpop.permute.xlu0 %3908
    %3911 = vst.msk [vmem:[#allocation5] sm:$0xff] %vm3902, %v3909
    %v3912 = vmul.f32 %v47, %v3887
    %v3913 = vmul.f32 %v52, %v3888
    %3914 = vmatprep.subr.mxu0 0.0
    %3915 = vmatpush1.msra.mxu0 %v3912
    %3916 = vmatprep.subr.mxu0 0.0
    %3917 = vmatpush1.msra.mxu0 %v3913
    %3918 = vmatprep.subr.mxu0 0.0
    %3919 = vmatpush1.msra.mxu0 0.0
    %3920 = vmatprep.subr.mxu0 0.0
    %3921 = vmatpush1.msra.mxu0 0.0
    %3922 = vmatprep.subr.mxu0 0.0
    %3923 = vmatpush1.msra.mxu0 0.0
    %3924 = vmatprep.subr.mxu0 0.0
    %3925 = vmatpush1.msra.mxu0 0.0
    %3926 = vmatprep.subr.mxu0 0.0
    %3927 = vmatpush1.msra.mxu0 0.0
    %3928 = vmatprep.subr.mxu0 0.0
    %3929 = vmatpush1.msra.mxu0 0.0
    %3930 = vmatprep.subr.mxu0 0.0
    %3931 = vmatpush1.msra.mxu0 0.0
    %3932 = vmatprep.subr.mxu0 0.0
    %3933 = vmatpush1.msra.mxu0 0.0
    %3934 = vmatprep.subr.mxu0 0.0
    %3935 = vmatpush1.msra.mxu0 0.0
    %3936 = vmatprep.subr.mxu0 0.0
    %3937 = vmatpush1.msra.mxu0 0.0
    %3938 = vmatprep.subr.mxu0 0.0
    %3939 = vmatpush1.msra.mxu0 0.0
    %3940 = vmatprep.subr.mxu0 0.0
    %3941 = vmatpush1.msra.mxu0 0.0
    %3942 = vmatprep.subr.mxu0 0.0
    %3943 = vmatpush1.msra.mxu0 0.0
    %3944 = vmatprep.subr.mxu0 0.0
    %3945 = vmatpush1.msra.mxu0 0.0
    %3946 = vmatprep.subr.mxu0 0.0
    %3947 = vmatpush1.msra.mxu0 0.0
    %3948 = vmatprep.subr.mxu0 0.0
    %3949 = vmatpush1.msra.mxu0 0.0
    %3950 = vmatprep.subr.mxu0 0.0
    %3951 = vmatpush1.msra.mxu0 0.0
    %3952 = vmatprep.subr.mxu0 0.0
    %3953 = vmatpush1.msra.mxu0 0.0
    %3954 = vmatprep.subr.mxu0 0.0
    %3955 = vmatpush1.msra.mxu0 0.0
    %3956 = vmatprep.subr.mxu0 0.0
    %3957 = vmatpush1.msra.mxu0 0.0
    %3958 = vmatprep.subr.mxu0 0.0
    %3959 = vmatpush1.msra.mxu0 0.0
    %3960 = vmatprep.subr.mxu0 0.0
    %3961 = vmatpush1.msra.mxu0 0.0
    %3962 = vmatprep.subr.mxu0 0.0
    %3963 = vmatpush1.msra.mxu0 0.0
    %3964 = vmatprep.subr.mxu0 0.0
    %3965 = vmatpush1.msra.mxu0 0.0
    %3966 = vmatprep.subr.mxu0 0.0
    %3967 = vmatpush1.msra.mxu0 0.0
    %3968 = vmatprep.subr.mxu0 0.0
    %3969 = vmatpush1.msra.mxu0 0.0
    %3970 = vmatprep.subr.mxu0 0.0
    %3971 = vmatpush1.msra.mxu0 0.0
    %3972 = vmatprep.subr.mxu0 0.0
    %3973 = vmatpush1.msra.mxu0 0.0
    %3974 = vmatprep.subr.mxu0 0.0
    %3975 = vmatpush1.msra.mxu0 0.0
    %3976 = vmatprep.subr.mxu0 0.0
    %3977 = vmatpush1.msra.mxu0 0.0
    %3978 = vmatprep.mubr.f32.mxu0 0.0
    %3979 = vmatmul.mubr.f32.gmra.mrb[0].mxu0 %v90
    %v3980 = vpop.f32.mrb[0].mxu0
    %v3981 = vadd.f32 0.0, %v3980
    %v3982 = vpop.f32.mrb[0].mxu0
    %3983 = vdwg.mxu0
    %v3984 = vmul.f32 %v165, %v3981
    %3985 = vmatprep.subr.mxu0 0.0
    %3986 = vmatpush1.msra.mxu0 %v3984
    %3987 = vmatprep.subr.mxu0 0.0
    %3988 = vmatpush1.msra.mxu0 0.0
    %3989 = vmatprep.subr.mxu0 0.0
    %3990 = vmatpush1.msra.mxu0 0.0
    %3991 = vmatprep.subr.mxu0 0.0
    %3992 = vmatpush1.msra.mxu0 0.0
    %3993 = vmatprep.subr.mxu0 0.0
    %3994 = vmatpush1.msra.mxu0 0.0
    %3995 = vmatprep.subr.mxu0 0.0
    %3996 = vmatpush1.msra.mxu0 0.0
    %3997 = vmatprep.subr.mxu0 0.0
    %3998 = vmatpush1.msra.mxu0 0.0
    %3999 = vmatprep.subr.mxu0 0.0
    %4000 = vmatpush1.msra.mxu0 0.0
    %4001 = vmatprep.subr.mxu0 0.0
    %4002 = vmatpush1.msra.mxu0 0.0
    %4003 = vmatprep.subr.mxu0 0.0
    %4004 = vmatpush1.msra.mxu0 0.0
    %4005 = vmatprep.subr.mxu0 0.0
    %4006 = vmatpush1.msra.mxu0 0.0
    %4007 = vmatprep.subr.mxu0 0.0
    %4008 = vmatpush1.msra.mxu0 0.0
    %4009 = vmatprep.subr.mxu0 0.0
    %4010 = vmatpush1.msra.mxu0 0.0
    %4011 = vmatprep.subr.mxu0 0.0
    %4012 = vmatpush1.msra.mxu0 0.0
    %4013 = vmatprep.subr.mxu0 0.0
    %4014 = vmatpush1.msra.mxu0 0.0
    %4015 = vmatprep.subr.mxu0 0.0
    %4016 = vmatpush1.msra.mxu0 0.0
    %4017 = vmatprep.subr.mxu0 0.0
    %4018 = vmatpush1.msra.mxu0 0.0
    %4019 = vmatprep.subr.mxu0 0.0
    %4020 = vmatpush1.msra.mxu0 0.0
    %4021 = vmatprep.subr.mxu0 0.0
    %4022 = vmatpush1.msra.mxu0 0.0
    %4023 = vmatprep.subr.mxu0 0.0
    %4024 = vmatpush1.msra.mxu0 0.0
    %4025 = vmatprep.subr.mxu0 0.0
    %4026 = vmatpush1.msra.mxu0 0.0
    %4027 = vmatprep.subr.mxu0 0.0
    %4028 = vmatpush1.msra.mxu0 0.0
    %4029 = vmatprep.subr.mxu0 0.0
    %4030 = vmatpush1.msra.mxu0 0.0
    %4031 = vmatprep.subr.mxu0 0.0
    %4032 = vmatpush1.msra.mxu0 0.0
    %4033 = vmatprep.subr.mxu0 0.0
    %4034 = vmatpush1.msra.mxu0 0.0
    %4035 = vmatprep.subr.mxu0 0.0
    %4036 = vmatpush1.msra.mxu0 0.0
    %4037 = vmatprep.subr.mxu0 0.0
    %4038 = vmatpush1.msra.mxu0 0.0
    %4039 = vmatprep.subr.mxu0 0.0
    %4040 = vmatpush1.msra.mxu0 0.0
    %4041 = vmatprep.subr.mxu0 0.0
    %4042 = vmatpush1.msra.mxu0 0.0
    %4043 = vmatprep.subr.mxu0 0.0
    %4044 = vmatpush1.msra.mxu0 0.0
    %4045 = vmatprep.subr.mxu0 0.0
    %4046 = vmatpush1.msra.mxu0 0.0
    %4047 = vmatprep.subr.mxu0 0.0
    %4048 = vmatpush1.msra.mxu0 0.0
    %4049 = vmatprep.mubr.f32.mxu0 0.0
    %4050 = vmatmul.mubr.f32.gmra.mrb[0].mxu0 %v170
    %v4051 = vpop.f32.mrb[0].mxu0
    %v4052 = vadd.f32 0.0, %v4051
    %v4053 = vpop.f32.mrb[0].mxu0
    %4054 = vmatprep.mubr.f32.mxu0 0.0
    %4055 = vmatmul.mubr.f32.gmra.mrb[0].mxu0 %v173
    %v4056 = vpop.f32.mrb[0].mxu0
    %v4057 = vadd.f32 0.0, %v4056
    %v4058 = vpop.f32.mrb[0].mxu0
    %4059 = vdwg.mxu0
    %v4060 = vmul.f32 %v47, %v4052
    %v4061 = vmul.f32 %v52, %v4057
    %v4062 = vmul.f32 %v47, %v4060
    %v4063 = vmul.f32 %v52, %v4061
    %4064 = vmatprep.subr.mxu0 0.0
    %4065 = vmatpush1.msra.mxu0 %v4062
    %4066 = vmatprep.subr.mxu0 0.0
    %4067 = vmatpush1.msra.mxu0 %v4063
    %4068 = vmatprep.subr.mxu0 0.0
    %4069 = vmatpush1.msra.mxu0 0.0
    %4070 = vmatprep.subr.mxu0 0.0
    %4071 = vmatpush1.msra.mxu0 0.0
    %4072 = vmatprep.subr.mxu0 0.0
    %4073 = vmatpush1.msra.mxu0 0.0
    %4074 = vmatprep.subr.mxu0 0.0
    %4075 = vmatpush1.msra.mxu0 0.0
    %4076 = vmatprep.subr.mxu0 0.0
    %4077 = vmatpush1.msra.mxu0 0.0
    %4078 = vmatprep.subr.mxu0 0.0
    %4079 = vmatpush1.msra.mxu0 0.0
    %4080 = vmatprep.subr.mxu0 0.0
    %4081 = vmatpush1.msra.mxu0 0.0
    %4082 = vmatprep.subr.mxu0 0.0
    %4083 = vmatpush1.msra.mxu0 0.0
    %4084 = vmatprep.subr.mxu0 0.0
    %4085 = vmatpush1.msra.mxu0 0.0
    %4086 = vmatprep.subr.mxu0 0.0
    %4087 = vmatpush1.msra.mxu0 0.0
    %4088 = vmatprep.subr.mxu0 0.0
    %4089 = vmatpush1.msra.mxu0 0.0
    %4090 = vmatprep.subr.mxu0 0.0
    %4091 = vmatpush1.msra.mxu0 0.0
    %4092 = vmatprep.subr.mxu0 0.0
    %4093 = vmatpush1.msra.mxu0 0.0
    %4094 = vmatprep.subr.mxu0 0.0
    %4095 = vmatpush1.msra.mxu0 0.0
    %4096 = vmatprep.subr.mxu0 0.0
    %4097 = vmatpush1.msra.mxu0 0.0
    %4098 = vmatprep.subr.mxu0 0.0
    %4099 = vmatpush1.msra.mxu0 0.0
    %4100 = vmatprep.subr.mxu0 0.0
    %4101 = vmatpush1.msra.mxu0 0.0
    %4102 = vmatprep.subr.mxu0 0.0
    %4103 = vmatpush1.msra.mxu0 0.0
    %4104 = vmatprep.subr.mxu0 0.0
    %4105 = vmatpush1.msra.mxu0 0.0
    %4106 = vmatprep.subr.mxu0 0.0
    %4107 = vmatpush1.msra.mxu0 0.0
    %4108 = vmatprep.subr.mxu0 0.0
    %4109 = vmatpush1.msra.mxu0 0.0
    %4110 = vmatprep.subr.mxu0 0.0
    %4111 = vmatpush1.msra.mxu0 0.0
    %4112 = vmatprep.subr.mxu0 0.0
    %4113 = vmatpush1.msra.mxu0 0.0
    %4114 = vmatprep.subr.mxu0 0.0
    %4115 = vmatpush1.msra.mxu0 0.0
    %4116 = vmatprep.subr.mxu0 0.0
    %4117 = vmatpush1.msra.mxu0 0.0
    %4118 = vmatprep.subr.mxu0 0.0
    %4119 = vmatpush1.msra.mxu0 0.0
    %4120 = vmatprep.subr.mxu0 0.0
    %4121 = vmatpush1.msra.mxu0 0.0
    %4122 = vmatprep.subr.mxu0 0.0
    %4123 = vmatpush1.msra.mxu0 0.0
    %4124 = vmatprep.subr.mxu0 0.0
    %4125 = vmatpush1.msra.mxu0 0.0
    %4126 = vmatprep.subr.mxu0 0.0
    %4127 = vmatpush1.msra.mxu0 0.0
    %4128 = vmatprep.mubr.f32.mxu0 0.0
    %4129 = vmatmul.mubr.f32.gmra.mrb[0].mxu0 %v90
    %v4130 = vpop.f32.mrb[0].mxu0
    %v4131 = vadd.f32 0.0, %v4130
    %v4132 = vpop.f32.mrb[0].mxu0
    %4133 = vdwg.mxu0
    %v4134 = vmul.f32 %v165, %v4131
    %4135 = vmatprep.subr.mxu0 0.0
    %4136 = vmatpush1.msra.mxu0 %v4134
    %4137 = vmatprep.subr.mxu0 0.0
    %4138 = vmatpush1.msra.mxu0 0.0
    %4139 = vmatprep.subr.mxu0 0.0
    %4140 = vmatpush1.msra.mxu0 0.0
    %4141 = vmatprep.subr.mxu0 0.0
    %4142 = vmatpush1.msra.mxu0 0.0
    %4143 = vmatprep.subr.mxu0 0.0
    %4144 = vmatpush1.msra.mxu0 0.0
    %4145 = vmatprep.subr.mxu0 0.0
    %4146 = vmatpush1.msra.mxu0 0.0
    %4147 = vmatprep.subr.mxu0 0.0
    %4148 = vmatpush1.msra.mxu0 0.0
    %4149 = vmatprep.subr.mxu0 0.0
    %4150 = vmatpush1.msra.mxu0 0.0
    %4151 = vmatprep.subr.mxu0 0.0
    %4152 = vmatpush1.msra.mxu0 0.0
    %4153 = vmatprep.subr.mxu0 0.0
    %4154 = vmatpush1.msra.mxu0 0.0
    %4155 = vmatprep.subr.mxu0 0.0
    %4156 = vmatpush1.msra.mxu0 0.0
    %4157 = vmatprep.subr.mxu0 0.0
    %4158 = vmatpush1.msra.mxu0 0.0
    %4159 = vmatprep.subr.mxu0 0.0
    %4160 = vmatpush1.msra.mxu0 0.0
    %4161 = vmatprep.subr.mxu0 0.0
    %4162 = vmatpush1.msra.mxu0 0.0
    %4163 = vmatprep.subr.mxu0 0.0
    %4164 = vmatpush1.msra.mxu0 0.0
    %4165 = vmatprep.subr.mxu0 0.0
    %4166 = vmatpush1.msra.mxu0 0.0
    %4167 = vmatprep.subr.mxu0 0.0
    %4168 = vmatpush1.msra.mxu0 0.0
    %4169 = vmatprep.subr.mxu0 0.0
    %4170 = vmatpush1.msra.mxu0 0.0
    %4171 = vmatprep.subr.mxu0 0.0
    %4172 = vmatpush1.msra.mxu0 0.0
    %4173 = vmatprep.subr.mxu0 0.0
    %4174 = vmatpush1.msra.mxu0 0.0
    %4175 = vmatprep.subr.mxu0 0.0
    %4176 = vmatpush1.msra.mxu0 0.0
    %4177 = vmatprep.subr.mxu0 0.0
    %4178 = vmatpush1.msra.mxu0 0.0
    %4179 = vmatprep.subr.mxu0 0.0
    %4180 = vmatpush1.msra.mxu0 0.0
    %4181 = vmatprep.subr.mxu0 0.0
    %4182 = vmatpush1.msra.mxu0 0.0
    %4183 = vmatprep.subr.mxu0 0.0
    %4184 = vmatpush1.msra.mxu0 0.0
    %4185 = vmatprep.subr.mxu0 0.0
    %4186 = vmatpush1.msra.mxu0 0.0
    %4187 = vmatprep.subr.mxu0 0.0
    %4188 = vmatpush1.msra.mxu0 0.0
    %4189 = vmatprep.subr.mxu0 0.0
    %4190 = vmatpush1.msra.mxu0 0.0
    %4191 = vmatprep.subr.mxu0 0.0
    %4192 = vmatpush1.msra.mxu0 0.0
    %4193 = vmatprep.subr.mxu0 0.0
    %4194 = vmatpush1.msra.mxu0 0.0
    %4195 = vmatprep.subr.mxu0 0.0
    %4196 = vmatpush1.msra.mxu0 0.0
    %4197 = vmatprep.subr.mxu0 0.0
    %4198 = vmatpush1.msra.mxu0 0.0
    %4199 = vmatprep.mubr.f32.mxu0 0.0
    %4200 = vmatmul.mubr.f32.gmra.mrb[0].mxu0 %v170
    %v4201 = vpop.f32.mrb[0].mxu0
    %v4202 = vadd.f32 0.0, %v4201
    %v4203 = vpop.f32.mrb[0].mxu0
    %4204 = vmatprep.mubr.f32.mxu0 0.0
    %4205 = vmatmul.mubr.f32.gmra.mrb[0].mxu0 %v173
    %v4206 = vpop.f32.mrb[0].mxu0
    %v4207 = vadd.f32 0.0, %v4206
    %v4208 = vpop.f32.mrb[0].mxu0
    %4209 = vdwg.mxu0
    %v4210 = vmul.f32 %v47, %v4202
    %v4211 = vmul.f32 %v52, %v4207
    %v4212 = vmul.f32 %v47, %v4210
    %v4213 = vmul.f32 %v52, %v4211
    %4214 = vmatprep.subr.mxu0 0.0
    %4215 = vmatpush1.msra.mxu0 %v4212
    %4216 = vmatprep.subr.mxu0 0.0
    %4217 = vmatpush1.msra.mxu0 %v4213
    %4218 = vmatprep.subr.mxu0 0.0
    %4219 = vmatpush1.msra.mxu0 0.0
    %4220 = vmatprep.subr.mxu0 0.0
    %4221 = vmatpush1.msra.mxu0 0.0
    %4222 = vmatprep.subr.mxu0 0.0
    %4223 = vmatpush1.msra.mxu0 0.0
    %4224 = vmatprep.subr.mxu0 0.0
    %4225 = vmatpush1.msra.mxu0 0.0
    %4226 = vmatprep.subr.mxu0 0.0
    %4227 = vmatpush1.msra.mxu0 0.0
    %4228 = vmatprep.subr.mxu0 0.0
    %4229 = vmatpush1.msra.mxu0 0.0
    %4230 = vmatprep.subr.mxu0 0.0
    %4231 = vmatpush1.msra.mxu0 0.0
    %4232 = vmatprep.subr.mxu0 0.0
    %4233 = vmatpush1.msra.mxu0 0.0
    %4234 = vmatprep.subr.mxu0 0.0
    %4235 = vmatpush1.msra.mxu0 0.0
    %4236 = vmatprep.subr.mxu0 0.0
    %4237 = vmatpush1.msra.mxu0 0.0
    %4238 = vmatprep.subr.mxu0 0.0
    %4239 = vmatpush1.msra.mxu0 0.0
    %4240 = vmatprep.subr.mxu0 0.0
    %4241 = vmatpush1.msra.mxu0 0.0
    %4242 = vmatprep.subr.mxu0 0.0
    %4243 = vmatpush1.msra.mxu0 0.0
    %4244 = vmatprep.subr.mxu0 0.0
    %4245 = vmatpush1.msra.mxu0 0.0
    %4246 = vmatprep.subr.mxu0 0.0
    %4247 = vmatpush1.msra.mxu0 0.0
    %4248 = vmatprep.subr.mxu0 0.0
    %4249 = vmatpush1.msra.mxu0 0.0
    %4250 = vmatprep.subr.mxu0 0.0
    %4251 = vmatpush1.msra.mxu0 0.0
    %4252 = vmatprep.subr.mxu0 0.0
    %4253 = vmatpush1.msra.mxu0 0.0
    %4254 = vmatprep.subr.mxu0 0.0
    %4255 = vmatpush1.msra.mxu0 0.0
    %4256 = vmatprep.subr.mxu0 0.0
    %4257 = vmatpush1.msra.mxu0 0.0
    %4258 = vmatprep.subr.mxu0 0.0
    %4259 = vmatpush1.msra.mxu0 0.0
    %4260 = vmatprep.subr.mxu0 0.0
    %4261 = vmatpush1.msra.mxu0 0.0
    %4262 = vmatprep.subr.mxu0 0.0
    %4263 = vmatpush1.msra.mxu0 0.0
    %4264 = vmatprep.subr.mxu0 0.0
    %4265 = vmatpush1.msra.mxu0 0.0
    %4266 = vmatprep.subr.mxu0 0.0
    %4267 = vmatpush1.msra.mxu0 0.0
    %4268 = vmatprep.subr.mxu0 0.0
    %4269 = vmatpush1.msra.mxu0 0.0
    %4270 = vmatprep.subr.mxu0 0.0
    %4271 = vmatpush1.msra.mxu0 0.0
    %4272 = vmatprep.subr.mxu0 0.0
    %4273 = vmatpush1.msra.mxu0 0.0
    %4274 = vmatprep.subr.mxu0 0.0
    %4275 = vmatpush1.msra.mxu0 0.0
    %4276 = vmatprep.subr.mxu0 0.0
    %4277 = vmatpush1.msra.mxu0 0.0
    %4278 = vmatprep.mubr.f32.mxu0 0.0
    %4279 = vmatmul.mubr.f32.gmra.mrb[0].mxu0 %v90
    %v4280 = vpop.f32.mrb[0].mxu0
    %v4281 = vadd.f32 0.0, %v4280
    %v4282 = vpop.f32.mrb[0].mxu0
    %4283 = vdwg.mxu0
    %v4284 = vmul.f32 %v165, %v4281
    %4285 = vmatprep.subr.mxu0 0.0
    %4286 = vmatpush1.msra.mxu0 %v4284
    %4287 = vmatprep.subr.mxu0 0.0
    %4288 = vmatpush1.msra.mxu0 0.0
    %4289 = vmatprep.subr.mxu0 0.0
    %4290 = vmatpush1.msra.mxu0 0.0
    %4291 = vmatprep.subr.mxu0 0.0
    %4292 = vmatpush1.msra.mxu0 0.0
    %4293 = vmatprep.subr.mxu0 0.0
    %4294 = vmatpush1.msra.mxu0 0.0
    %4295 = vmatprep.subr.mxu0 0.0
    %4296 = vmatpush1.msra.mxu0 0.0
    %4297 = vmatprep.subr.mxu0 0.0
    %4298 = vmatpush1.msra.mxu0 0.0
    %4299 = vmatprep.subr.mxu0 0.0
    %4300 = vmatpush1.msra.mxu0 0.0
    %4301 = vmatprep.subr.mxu0 0.0
    %4302 = vmatpush1.msra.mxu0 0.0
    %4303 = vmatprep.subr.mxu0 0.0
    %4304 = vmatpush1.msra.mxu0 0.0
    %4305 = vmatprep.subr.mxu0 0.0
    %4306 = vmatpush1.msra.mxu0 0.0
    %4307 = vmatprep.subr.mxu0 0.0
    %4308 = vmatpush1.msra.mxu0 0.0
    %4309 = vmatprep.subr.mxu0 0.0
    %4310 = vmatpush1.msra.mxu0 0.0
    %4311 = vmatprep.subr.mxu0 0.0
    %4312 = vmatpush1.msra.mxu0 0.0
    %4313 = vmatprep.subr.mxu0 0.0
    %4314 = vmatpush1.msra.mxu0 0.0
    %4315 = vmatprep.subr.mxu0 0.0
    %4316 = vmatpush1.msra.mxu0 0.0
    %4317 = vmatprep.subr.mxu0 0.0
    %4318 = vmatpush1.msra.mxu0 0.0
    %4319 = vmatprep.subr.mxu0 0.0
    %4320 = vmatpush1.msra.mxu0 0.0
    %4321 = vmatprep.subr.mxu0 0.0
    %4322 = vmatpush1.msra.mxu0 0.0
    %4323 = vmatprep.subr.mxu0 0.0
    %4324 = vmatpush1.msra.mxu0 0.0
    %4325 = vmatprep.subr.mxu0 0.0
    %4326 = vmatpush1.msra.mxu0 0.0
    %4327 = vmatprep.subr.mxu0 0.0
    %4328 = vmatpush1.msra.mxu0 0.0
    %4329 = vmatprep.subr.mxu0 0.0
    %4330 = vmatpush1.msra.mxu0 0.0
    %4331 = vmatprep.subr.mxu0 0.0
    %4332 = vmatpush1.msra.mxu0 0.0
    %4333 = vmatprep.subr.mxu0 0.0
    %4334 = vmatpush1.msra.mxu0 0.0
    %4335 = vmatprep.subr.mxu0 0.0
    %4336 = vmatpush1.msra.mxu0 0.0
    %4337 = vmatprep.subr.mxu0 0.0
    %4338 = vmatpush1.msra.mxu0 0.0
    %4339 = vmatprep.subr.mxu0 0.0
    %4340 = vmatpush1.msra.mxu0 0.0
    %4341 = vmatprep.subr.mxu0 0.0
    %4342 = vmatpush1.msra.mxu0 0.0
    %4343 = vmatprep.subr.mxu0 0.0
    %4344 = vmatpush1.msra.mxu0 0.0
    %4345 = vmatprep.subr.mxu0 0.0
    %4346 = vmatpush1.msra.mxu0 0.0
    %4347 = vmatprep.subr.mxu0 0.0
    %4348 = vmatpush1.msra.mxu0 0.0
    %4349 = vmatprep.mubr.f32.mxu0 0.0
    %4350 = vmatmul.mubr.f32.gmra.mrb[0].mxu0 %v170
    %v4351 = vpop.f32.mrb[0].mxu0
    %v4352 = vadd.f32 0.0, %v4351
    %v4353 = vpop.f32.mrb[0].mxu0
    %4354 = vmatprep.mubr.f32.mxu0 0.0
    %4355 = vmatmul.mubr.f32.gmra.mrb[0].mxu0 %v173
    %v4356 = vpop.f32.mrb[0].mxu0
    %v4357 = vadd.f32 0.0, %v4356
    %v4358 = vpop.f32.mrb[0].mxu0
    %4359 = vdwg.mxu0
    %v4360 = vmul.f32 %v47, %v4352
    %v4361 = vmul.f32 %v52, %v4357
    %v4362 = vmul.f32 %v47, %v4360
    %v4363 = vmul.f32 %v52, %v4361
    %4364 = vmatprep.subr.mxu0 0.0
    %4365 = vmatpush1.msra.mxu0 %v4362
    %4366 = vmatprep.subr.mxu0 0.0
    %4367 = vmatpush1.msra.mxu0 %v4363
    %4368 = vmatprep.subr.mxu0 0.0
    %4369 = vmatpush1.msra.mxu0 0.0
    %4370 = vmatprep.subr.mxu0 0.0
    %4371 = vmatpush1.msra.mxu0 0.0
    %4372 = vmatprep.subr.mxu0 0.0
    %4373 = vmatpush1.msra.mxu0 0.0
    %4374 = vmatprep.subr.mxu0 0.0
    %4375 = vmatpush1.msra.mxu0 0.0
    %4376 = vmatprep.subr.mxu0 0.0
    %4377 = vmatpush1.msra.mxu0 0.0
    %4378 = vmatprep.subr.mxu0 0.0
    %4379 = vmatpush1.msra.mxu0 0.0
    %4380 = vmatprep.subr.mxu0 0.0
    %4381 = vmatpush1.msra.mxu0 0.0
    %4382 = vmatprep.subr.mxu0 0.0
    %4383 = vmatpush1.msra.mxu0 0.0
    %4384 = vmatprep.subr.mxu0 0.0
    %4385 = vmatpush1.msra.mxu0 0.0
    %4386 = vmatprep.subr.mxu0 0.0
    %4387 = vmatpush1.msra.mxu0 0.0
    %4388 = vmatprep.subr.mxu0 0.0
    %4389 = vmatpush1.msra.mxu0 0.0
    %4390 = vmatprep.subr.mxu0 0.0
    %4391 = vmatpush1.msra.mxu0 0.0
    %4392 = vmatprep.subr.mxu0 0.0
    %4393 = vmatpush1.msra.mxu0 0.0
    %4394 = vmatprep.subr.mxu0 0.0
    %4395 = vmatpush1.msra.mxu0 0.0
    %4396 = vmatprep.subr.mxu0 0.0
    %4397 = vmatpush1.msra.mxu0 0.0
    %4398 = vmatprep.subr.mxu0 0.0
    %4399 = vmatpush1.msra.mxu0 0.0
    %4400 = vmatprep.subr.mxu0 0.0
    %4401 = vmatpush1.msra.mxu0 0.0
    %4402 = vmatprep.subr.mxu0 0.0
    %4403 = vmatpush1.msra.mxu0 0.0
    %4404 = vmatprep.subr.mxu0 0.0
    %4405 = vmatpush1.msra.mxu0 0.0
    %4406 = vmatprep.subr.mxu0 0.0
    %4407 = vmatpush1.msra.mxu0 0.0
    %4408 = vmatprep.subr.mxu0 0.0
    %4409 = vmatpush1.msra.mxu0 0.0
    %4410 = vmatprep.subr.mxu0 0.0
    %4411 = vmatpush1.msra.mxu0 0.0
    %4412 = vmatprep.subr.mxu0 0.0
    %4413 = vmatpush1.msra.mxu0 0.0
    %4414 = vmatprep.subr.mxu0 0.0
    %4415 = vmatpush1.msra.mxu0 0.0
    %4416 = vmatprep.subr.mxu0 0.0
    %4417 = vmatpush1.msra.mxu0 0.0
    %4418 = vmatprep.subr.mxu0 0.0
    %4419 = vmatpush1.msra.mxu0 0.0
    %4420 = vmatprep.subr.mxu0 0.0
    %4421 = vmatpush1.msra.mxu0 0.0
    %4422 = vmatprep.subr.mxu0 0.0
    %4423 = vmatpush1.msra.mxu0 0.0
    %4424 = vmatprep.subr.mxu0 0.0
    %4425 = vmatpush1.msra.mxu0 0.0
    %4426 = vmatprep.subr.mxu0 0.0
    %4427 = vmatpush1.msra.mxu0 0.0
    %4428 = vmatprep.mubr.f32.mxu0 0.0
    %4429 = vmatmul.mubr.f32.gmra.mrb[0].mxu0 %v90
    %v4430 = vpop.f32.mrb[0].mxu0
    %v4431 = vadd.f32 0.0, %v4430
    %v4432 = vpop.f32.mrb[0].mxu0
    %4433 = vdwg.mxu0
    %v4434 = vmul.f32 %v165, %v4431
    %4435 = vmatprep.subr.mxu0 0.0
    %4436 = vmatpush1.msra.mxu0 %v4434
    %4437 = vmatprep.subr.mxu0 0.0
    %4438 = vmatpush1.msra.mxu0 0.0
    %4439 = vmatprep.subr.mxu0 0.0
    %4440 = vmatpush1.msra.mxu0 0.0
    %4441 = vmatprep.subr.mxu0 0.0
    %4442 = vmatpush1.msra.mxu0 0.0
    %4443 = vmatprep.subr.mxu0 0.0
    %4444 = vmatpush1.msra.mxu0 0.0
    %4445 = vmatprep.subr.mxu0 0.0
    %4446 = vmatpush1.msra.mxu0 0.0
    %4447 = vmatprep.subr.mxu0 0.0
    %4448 = vmatpush1.msra.mxu0 0.0
    %4449 = vmatprep.subr.mxu0 0.0
    %4450 = vmatpush1.msra.mxu0 0.0
    %4451 = vmatprep.subr.mxu0 0.0
    %4452 = vmatpush1.msra.mxu0 0.0
    %4453 = vmatprep.subr.mxu0 0.0
    %4454 = vmatpush1.msra.mxu0 0.0
    %4455 = vmatprep.subr.mxu0 0.0
    %4456 = vmatpush1.msra.mxu0 0.0
    %4457 = vmatprep.subr.mxu0 0.0
    %4458 = vmatpush1.msra.mxu0 0.0
    %4459 = vmatprep.subr.mxu0 0.0
    %4460 = vmatpush1.msra.mxu0 0.0
    %4461 = vmatprep.subr.mxu0 0.0
    %4462 = vmatpush1.msra.mxu0 0.0
    %4463 = vmatprep.subr.mxu0 0.0
    %4464 = vmatpush1.msra.mxu0 0.0
    %4465 = vmatprep.subr.mxu0 0.0
    %4466 = vmatpush1.msra.mxu0 0.0
    %4467 = vmatprep.subr.mxu0 0.0
    %4468 = vmatpush1.msra.mxu0 0.0
    %4469 = vmatprep.subr.mxu0 0.0
    %4470 = vmatpush1.msra.mxu0 0.0
    %4471 = vmatprep.subr.mxu0 0.0
    %4472 = vmatpush1.msra.mxu0 0.0
    %4473 = vmatprep.subr.mxu0 0.0
    %4474 = vmatpush1.msra.mxu0 0.0
    %4475 = vmatprep.subr.mxu0 0.0
    %4476 = vmatpush1.msra.mxu0 0.0
    %4477 = vmatprep.subr.mxu0 0.0
    %4478 = vmatpush1.msra.mxu0 0.0
    %4479 = vmatprep.subr.mxu0 0.0
    %4480 = vmatpush1.msra.mxu0 0.0
    %4481 = vmatprep.subr.mxu0 0.0
    %4482 = vmatpush1.msra.mxu0 0.0
    %4483 = vmatprep.subr.mxu0 0.0
    %4484 = vmatpush1.msra.mxu0 0.0
    %4485 = vmatprep.subr.mxu0 0.0
    %4486 = vmatpush1.msra.mxu0 0.0
    %4487 = vmatprep.subr.mxu0 0.0
    %4488 = vmatpush1.msra.mxu0 0.0
    %4489 = vmatprep.subr.mxu0 0.0
    %4490 = vmatpush1.msra.mxu0 0.0
    %4491 = vmatprep.subr.mxu0 0.0
    %4492 = vmatpush1.msra.mxu0 0.0
    %4493 = vmatprep.subr.mxu0 0.0
    %4494 = vmatpush1.msra.mxu0 0.0
    %4495 = vmatprep.subr.mxu0 0.0
    %4496 = vmatpush1.msra.mxu0 0.0
    %4497 = vmatprep.subr.mxu0 0.0
    %4498 = vmatpush1.msra.mxu0 0.0
    %4499 = vmatprep.mubr.f32.mxu0 0.0
    %4500 = vmatmul.mubr.f32.gmra.mrb[0].mxu0 %v170
    %v4501 = vpop.f32.mrb[0].mxu0
    %v4502 = vadd.f32 0.0, %v4501
    %v4503 = vpop.f32.mrb[0].mxu0
    %4504 = vmatprep.mubr.f32.mxu0 0.0
    %4505 = vmatmul.mubr.f32.gmra.mrb[0].mxu0 %v173
    %v4506 = vpop.f32.mrb[0].mxu0
    %v4507 = vadd.f32 0.0, %v4506
    %v4508 = vpop.f32.mrb[0].mxu0
    %4509 = vdwg.mxu0
    %v4510 = vmul.f32 %v47, %v4502
    %v4511 = vmul.f32 %v52, %v4507
    %v4512 = vmul.f32 %v47, %v4510
    %v4513 = vmul.f32 %v52, %v4511
    %4514 = vmatprep.subr.mxu0 0.0
    %4515 = vmatpush1.msra.mxu0 %v4512
    %4516 = vmatprep.subr.mxu0 0.0
    %4517 = vmatpush1.msra.mxu0 %v4513
    %4518 = vmatprep.subr.mxu0 0.0
    %4519 = vmatpush1.msra.mxu0 0.0
    %4520 = vmatprep.subr.mxu0 0.0
    %4521 = vmatpush1.msra.mxu0 0.0
    %4522 = vmatprep.subr.mxu0 0.0
    %4523 = vmatpush1.msra.mxu0 0.0
    %4524 = vmatprep.subr.mxu0 0.0
    %4525 = vmatpush1.msra.mxu0 0.0
    %4526 = vmatprep.subr.mxu0 0.0
    %4527 = vmatpush1.msra.mxu0 0.0
    %4528 = vmatprep.subr.mxu0 0.0
    %4529 = vmatpush1.msra.mxu0 0.0
    %4530 = vmatprep.subr.mxu0 0.0
    %4531 = vmatpush1.msra.mxu0 0.0
    %4532 = vmatprep.subr.mxu0 0.0
    %4533 = vmatpush1.msra.mxu0 0.0
    %4534 = vmatprep.subr.mxu0 0.0
    %4535 = vmatpush1.msra.mxu0 0.0
    %4536 = vmatprep.subr.mxu0 0.0
    %4537 = vmatpush1.msra.mxu0 0.0
    %4538 = vmatprep.subr.mxu0 0.0
    %4539 = vmatpush1.msra.mxu0 0.0
    %4540 = vmatprep.subr.mxu0 0.0
    %4541 = vmatpush1.msra.mxu0 0.0
    %4542 = vmatprep.subr.mxu0 0.0
    %4543 = vmatpush1.msra.mxu0 0.0
    %4544 = vmatprep.subr.mxu0 0.0
    %4545 = vmatpush1.msra.mxu0 0.0
    %4546 = vmatprep.subr.mxu0 0.0
    %4547 = vmatpush1.msra.mxu0 0.0
    %4548 = vmatprep.subr.mxu0 0.0
    %4549 = vmatpush1.msra.mxu0 0.0
    %4550 = vmatprep.subr.mxu0 0.0
    %4551 = vmatpush1.msra.mxu0 0.0
    %4552 = vmatprep.subr.mxu0 0.0
    %4553 = vmatpush1.msra.mxu0 0.0
    %4554 = vmatprep.subr.mxu0 0.0
    %4555 = vmatpush1.msra.mxu0 0.0
    %4556 = vmatprep.subr.mxu0 0.0
    %4557 = vmatpush1.msra.mxu0 0.0
    %4558 = vmatprep.subr.mxu0 0.0
    %4559 = vmatpush1.msra.mxu0 0.0
    %4560 = vmatprep.subr.mxu0 0.0
    %4561 = vmatpush1.msra.mxu0 0.0
    %4562 = vmatprep.subr.mxu0 0.0
    %4563 = vmatpush1.msra.mxu0 0.0
    %4564 = vmatprep.subr.mxu0 0.0
    %4565 = vmatpush1.msra.mxu0 0.0
    %4566 = vmatprep.subr.mxu0 0.0
    %4567 = vmatpush1.msra.mxu0 0.0
    %4568 = vmatprep.subr.mxu0 0.0
    %4569 = vmatpush1.msra.mxu0 0.0
    %4570 = vmatprep.subr.mxu0 0.0
    %4571 = vmatpush1.msra.mxu0 0.0
    %4572 = vmatprep.subr.mxu0 0.0
    %4573 = vmatpush1.msra.mxu0 0.0
    %4574 = vmatprep.subr.mxu0 0.0
    %4575 = vmatpush1.msra.mxu0 0.0
    %4576 = vmatprep.subr.mxu0 0.0
    %4577 = vmatpush1.msra.mxu0 0.0
    %4578 = vmatprep.mubr.f32.mxu0 0.0
    %4579 = vmatmul.mubr.f32.gmra.mrb[0].mxu0 %v90
    %v4580 = vpop.f32.mrb[0].mxu0
    %v4581 = vadd.f32 0.0, %v4580
    %v4582 = vpop.f32.mrb[0].mxu0
    %4583 = vdwg.mxu0
    %v4584 = vmul.f32 %v165, %v4581
    %4585 = vmatprep.subr.mxu0 0.0
    %4586 = vmatpush1.msra.mxu0 %v4584
    %4587 = vmatprep.subr.mxu0 0.0
    %4588 = vmatpush1.msra.mxu0 0.0
    %4589 = vmatprep.subr.mxu0 0.0
    %4590 = vmatpush1.msra.mxu0 0.0
    %4591 = vmatprep.subr.mxu0 0.0
    %4592 = vmatpush1.msra.mxu0 0.0
    %4593 = vmatprep.subr.mxu0 0.0
    %4594 = vmatpush1.msra.mxu0 0.0
    %4595 = vmatprep.subr.mxu0 0.0
    %4596 = vmatpush1.msra.mxu0 0.0
    %4597 = vmatprep.subr.mxu0 0.0
    %4598 = vmatpush1.msra.mxu0 0.0
    %4599 = vmatprep.subr.mxu0 0.0
    %4600 = vmatpush1.msra.mxu0 0.0
    %4601 = vmatprep.subr.mxu0 0.0
    %4602 = vmatpush1.msra.mxu0 0.0
    %4603 = vmatprep.subr.mxu0 0.0
    %4604 = vmatpush1.msra.mxu0 0.0
    %4605 = vmatprep.subr.mxu0 0.0
    %4606 = vmatpush1.msra.mxu0 0.0
    %4607 = vmatprep.subr.mxu0 0.0
    %4608 = vmatpush1.msra.mxu0 0.0
    %4609 = vmatprep.subr.mxu0 0.0
    %4610 = vmatpush1.msra.mxu0 0.0
    %4611 = vmatprep.subr.mxu0 0.0
    %4612 = vmatpush1.msra.mxu0 0.0
    %4613 = vmatprep.subr.mxu0 0.0
    %4614 = vmatpush1.msra.mxu0 0.0
    %4615 = vmatprep.subr.mxu0 0.0
    %4616 = vmatpush1.msra.mxu0 0.0
    %4617 = vmatprep.subr.mxu0 0.0
    %4618 = vmatpush1.msra.mxu0 0.0
    %4619 = vmatprep.subr.mxu0 0.0
    %4620 = vmatpush1.msra.mxu0 0.0
    %4621 = vmatprep.subr.mxu0 0.0
    %4622 = vmatpush1.msra.mxu0 0.0
    %4623 = vmatprep.subr.mxu0 0.0
    %4624 = vmatpush1.msra.mxu0 0.0
    %4625 = vmatprep.subr.mxu0 0.0
    %4626 = vmatpush1.msra.mxu0 0.0
    %4627 = vmatprep.subr.mxu0 0.0
    %4628 = vmatpush1.msra.mxu0 0.0
    %4629 = vmatprep.subr.mxu0 0.0
    %4630 = vmatpush1.msra.mxu0 0.0
    %4631 = vmatprep.subr.mxu0 0.0
    %4632 = vmatpush1.msra.mxu0 0.0
    %4633 = vmatprep.subr.mxu0 0.0
    %4634 = vmatpush1.msra.mxu0 0.0
    %4635 = vmatprep.subr.mxu0 0.0
    %4636 = vmatpush1.msra.mxu0 0.0
    %4637 = vmatprep.subr.mxu0 0.0
    %4638 = vmatpush1.msra.mxu0 0.0
    %4639 = vmatprep.subr.mxu0 0.0
    %4640 = vmatpush1.msra.mxu0 0.0
    %4641 = vmatprep.subr.mxu0 0.0
    %4642 = vmatpush1.msra.mxu0 0.0
    %4643 = vmatprep.subr.mxu0 0.0
    %4644 = vmatpush1.msra.mxu0 0.0
    %4645 = vmatprep.subr.mxu0 0.0
    %4646 = vmatpush1.msra.mxu0 0.0
    %4647 = vmatprep.subr.mxu0 0.0
    %4648 = vmatpush1.msra.mxu0 0.0
    %4649 = vmatprep.mubr.f32.mxu0 0.0
    %4650 = vmatmul.mubr.f32.gmra.mrb[0].mxu0 %v170
    %v4651 = vpop.f32.mrb[0].mxu0
    %v4652 = vadd.f32 0.0, %v4651
    %v4653 = vpop.f32.mrb[0].mxu0
    %4654 = vmatprep.mubr.f32.mxu0 0.0
    %4655 = vmatmul.mubr.f32.gmra.mrb[0].mxu0 %v173
    %v4656 = vpop.f32.mrb[0].mxu0
    %v4657 = vadd.f32 0.0, %v4656
    %v4658 = vpop.f32.mrb[0].mxu0
    %4659 = vdwg.mxu0
    %v4660 = vmul.f32 %v47, %v4652
    %v4661 = vmul.f32 %v52, %v4657
    %v4662 = vmul.f32 %v47, %v4660
    %v4663 = vmul.f32 %v52, %v4661
    %4664 = vmatprep.subr.mxu0 0.0
    %4665 = vmatpush1.msra.mxu0 %v4662
    %4666 = vmatprep.subr.mxu0 0.0
    %4667 = vmatpush1.msra.mxu0 %v4663
    %4668 = vmatprep.subr.mxu0 0.0
    %4669 = vmatpush1.msra.mxu0 0.0
    %4670 = vmatprep.subr.mxu0 0.0
    %4671 = vmatpush1.msra.mxu0 0.0
    %4672 = vmatprep.subr.mxu0 0.0
    %4673 = vmatpush1.msra.mxu0 0.0
    %4674 = vmatprep.subr.mxu0 0.0
    %4675 = vmatpush1.msra.mxu0 0.0
    %4676 = vmatprep.subr.mxu0 0.0
    %4677 = vmatpush1.msra.mxu0 0.0
    %4678 = vmatprep.subr.mxu0 0.0
    %4679 = vmatpush1.msra.mxu0 0.0
    %4680 = vmatprep.subr.mxu0 0.0
    %4681 = vmatpush1.msra.mxu0 0.0
    %4682 = vmatprep.subr.mxu0 0.0
    %4683 = vmatpush1.msra.mxu0 0.0
    %4684 = vmatprep.subr.mxu0 0.0
    %4685 = vmatpush1.msra.mxu0 0.0
    %4686 = vmatprep.subr.mxu0 0.0
    %4687 = vmatpush1.msra.mxu0 0.0
    %4688 = vmatprep.subr.mxu0 0.0
    %4689 = vmatpush1.msra.mxu0 0.0
    %4690 = vmatprep.subr.mxu0 0.0
    %4691 = vmatpush1.msra.mxu0 0.0
    %4692 = vmatprep.subr.mxu0 0.0
    %4693 = vmatpush1.msra.mxu0 0.0
    %4694 = vmatprep.subr.mxu0 0.0
    %4695 = vmatpush1.msra.mxu0 0.0
    %4696 = vmatprep.subr.mxu0 0.0
    %4697 = vmatpush1.msra.mxu0 0.0
    %4698 = vmatprep.subr.mxu0 0.0
    %4699 = vmatpush1.msra.mxu0 0.0
    %4700 = vmatprep.subr.mxu0 0.0
    %4701 = vmatpush1.msra.mxu0 0.0
    %4702 = vmatprep.subr.mxu0 0.0
    %4703 = vmatpush1.msra.mxu0 0.0
    %4704 = vmatprep.subr.mxu0 0.0
    %4705 = vmatpush1.msra.mxu0 0.0
    %4706 = vmatprep.subr.mxu0 0.0
    %4707 = vmatpush1.msra.mxu0 0.0
    %4708 = vmatprep.subr.mxu0 0.0
    %4709 = vmatpush1.msra.mxu0 0.0
    %4710 = vmatprep.subr.mxu0 0.0
    %4711 = vmatpush1.msra.mxu0 0.0
    %4712 = vmatprep.subr.mxu0 0.0
    %4713 = vmatpush1.msra.mxu0 0.0
    %4714 = vmatprep.subr.mxu0 0.0
    %4715 = vmatpush1.msra.mxu0 0.0
    %4716 = vmatprep.subr.mxu0 0.0
    %4717 = vmatpush1.msra.mxu0 0.0
    %4718 = vmatprep.subr.mxu0 0.0
    %4719 = vmatpush1.msra.mxu0 0.0
    %4720 = vmatprep.subr.mxu0 0.0
    %4721 = vmatpush1.msra.mxu0 0.0
    %4722 = vmatprep.subr.mxu0 0.0
    %4723 = vmatpush1.msra.mxu0 0.0
    %4724 = vmatprep.subr.mxu0 0.0
    %4725 = vmatpush1.msra.mxu0 0.0
    %4726 = vmatprep.subr.mxu0 0.0
    %4727 = vmatpush1.msra.mxu0 0.0
    %4728 = vmatprep.mubr.f32.mxu0 0.0
    %4729 = vmatmul.mubr.f32.gmra.mrb[0].mxu0 %v90
    %v4730 = vpop.f32.mrb[0].mxu0
    %v4731 = vadd.f32 0.0, %v4730
    %v4732 = vpop.f32.mrb[0].mxu0
    %4733 = vdwg.mxu0
    %v4734 = vmul.f32 %v165, %v4731
    %4735 = vmatprep.subr.mxu0 0.0
    %4736 = vmatpush1.msra.mxu0 %v4734
    %4737 = vmatprep.subr.mxu0 0.0
    %4738 = vmatpush1.msra.mxu0 0.0
    %4739 = vmatprep.subr.mxu0 0.0
    %4740 = vmatpush1.msra.mxu0 0.0
    %4741 = vmatprep.subr.mxu0 0.0
    %4742 = vmatpush1.msra.mxu0 0.0
    %4743 = vmatprep.subr.mxu0 0.0
    %4744 = vmatpush1.msra.mxu0 0.0
    %4745 = vmatprep.subr.mxu0 0.0
    %4746 = vmatpush1.msra.mxu0 0.0
    %4747 = vmatprep.subr.mxu0 0.0
    %4748 = vmatpush1.msra.mxu0 0.0
    %4749 = vmatprep.subr.mxu0 0.0
    %4750 = vmatpush1.msra.mxu0 0.0
    %4751 = vmatprep.subr.mxu0 0.0
    %4752 = vmatpush1.msra.mxu0 0.0
    %4753 = vmatprep.subr.mxu0 0.0
    %4754 = vmatpush1.msra.mxu0 0.0
    %4755 = vmatprep.subr.mxu0 0.0
    %4756 = vmatpush1.msra.mxu0 0.0
    %4757 = vmatprep.subr.mxu0 0.0
    %4758 = vmatpush1.msra.mxu0 0.0
    %4759 = vmatprep.subr.mxu0 0.0
    %4760 = vmatpush1.msra.mxu0 0.0
    %4761 = vmatprep.subr.mxu0 0.0
    %4762 = vmatpush1.msra.mxu0 0.0
    %4763 = vmatprep.subr.mxu0 0.0
    %4764 = vmatpush1.msra.mxu0 0.0
    %4765 = vmatprep.subr.mxu0 0.0
    %4766 = vmatpush1.msra.mxu0 0.0
    %4767 = vmatprep.subr.mxu0 0.0
    %4768 = vmatpush1.msra.mxu0 0.0
    %4769 = vmatprep.subr.mxu0 0.0
    %4770 = vmatpush1.msra.mxu0 0.0
    %4771 = vmatprep.subr.mxu0 0.0
    %4772 = vmatpush1.msra.mxu0 0.0
    %4773 = vmatprep.subr.mxu0 0.0
    %4774 = vmatpush1.msra.mxu0 0.0
    %4775 = vmatprep.subr.mxu0 0.0
    %4776 = vmatpush1.msra.mxu0 0.0
    %4777 = vmatprep.subr.mxu0 0.0
    %4778 = vmatpush1.msra.mxu0 0.0
    %4779 = vmatprep.subr.mxu0 0.0
    %4780 = vmatpush1.msra.mxu0 0.0
    %4781 = vmatprep.subr.mxu0 0.0
    %4782 = vmatpush1.msra.mxu0 0.0
    %4783 = vmatprep.subr.mxu0 0.0
    %4784 = vmatpush1.msra.mxu0 0.0
    %4785 = vmatprep.subr.mxu0 0.0
    %4786 = vmatpush1.msra.mxu0 0.0
    %4787 = vmatprep.subr.mxu0 0.0
    %4788 = vmatpush1.msra.mxu0 0.0
    %4789 = vmatprep.subr.mxu0 0.0
    %4790 = vmatpush1.msra.mxu0 0.0
    %4791 = vmatprep.subr.mxu0 0.0
    %4792 = vmatpush1.msra.mxu0 0.0
    %4793 = vmatprep.subr.mxu0 0.0
    %4794 = vmatpush1.msra.mxu0 0.0
    %4795 = vmatprep.subr.mxu0 0.0
    %4796 = vmatpush1.msra.mxu0 0.0
    %4797 = vmatprep.subr.mxu0 0.0
    %4798 = vmatpush1.msra.mxu0 0.0
    %4799 = vmatprep.mubr.f32.mxu0 0.0
    %4800 = vmatmul.mubr.f32.gmra.mrb[0].mxu0 %v170
    %v4801 = vpop.f32.mrb[0].mxu0
    %v4802 = vadd.f32 0.0, %v4801
    %v4803 = vpop.f32.mrb[0].mxu0
    %4804 = vmatprep.mubr.f32.mxu0 0.0
    %4805 = vmatmul.mubr.f32.gmra.mrb[0].mxu0 %v173
    %v4806 = vpop.f32.mrb[0].mxu0
    %v4807 = vadd.f32 0.0, %v4806
    %v4808 = vpop.f32.mrb[0].mxu0
    %4809 = vdwg.mxu0
    %v4810 = vmul.f32 %v47, %v4802
    %v4811 = vmul.f32 %v52, %v4807
    %v4812 = vmul.f32 %v47, %v4810
    %v4813 = vmul.f32 %v52, %v4811
    %4814 = vmatprep.subr.mxu0 0.0
    %4815 = vmatpush1.msra.mxu0 %v4812
    %4816 = vmatprep.subr.mxu0 0.0
    %4817 = vmatpush1.msra.mxu0 %v4813
    %4818 = vmatprep.subr.mxu0 0.0
    %4819 = vmatpush1.msra.mxu0 0.0
    %4820 = vmatprep.subr.mxu0 0.0
    %4821 = vmatpush1.msra.mxu0 0.0
    %4822 = vmatprep.subr.mxu0 0.0
    %4823 = vmatpush1.msra.mxu0 0.0
    %4824 = vmatprep.subr.mxu0 0.0
    %4825 = vmatpush1.msra.mxu0 0.0
    %4826 = vmatprep.subr.mxu0 0.0
    %4827 = vmatpush1.msra.mxu0 0.0
    %4828 = vmatprep.subr.mxu0 0.0
    %4829 = vmatpush1.msra.mxu0 0.0
    %4830 = vmatprep.subr.mxu0 0.0
    %4831 = vmatpush1.msra.mxu0 0.0
    %4832 = vmatprep.subr.mxu0 0.0
    %4833 = vmatpush1.msra.mxu0 0.0
    %4834 = vmatprep.subr.mxu0 0.0
    %4835 = vmatpush1.msra.mxu0 0.0
    %4836 = vmatprep.subr.mxu0 0.0
    %4837 = vmatpush1.msra.mxu0 0.0
    %4838 = vmatprep.subr.mxu0 0.0
    %4839 = vmatpush1.msra.mxu0 0.0
    %4840 = vmatprep.subr.mxu0 0.0
    %4841 = vmatpush1.msra.mxu0 0.0
    %4842 = vmatprep.subr.mxu0 0.0
    %4843 = vmatpush1.msra.mxu0 0.0
    %4844 = vmatprep.subr.mxu0 0.0
    %4845 = vmatpush1.msra.mxu0 0.0
    %4846 = vmatprep.subr.mxu0 0.0
    %4847 = vmatpush1.msra.mxu0 0.0
    %4848 = vmatprep.subr.mxu0 0.0
    %4849 = vmatpush1.msra.mxu0 0.0
    %4850 = vmatprep.subr.mxu0 0.0
    %4851 = vmatpush1.msra.mxu0 0.0
    %4852 = vmatprep.subr.mxu0 0.0
    %4853 = vmatpush1.msra.mxu0 0.0
    %4854 = vmatprep.subr.mxu0 0.0
    %4855 = vmatpush1.msra.mxu0 0.0
    %4856 = vmatprep.subr.mxu0 0.0
    %4857 = vmatpush1.msra.mxu0 0.0
    %4858 = vmatprep.subr.mxu0 0.0
    %4859 = vmatpush1.msra.mxu0 0.0
    %4860 = vmatprep.subr.mxu0 0.0
    %4861 = vmatpush1.msra.mxu0 0.0
    %4862 = vmatprep.subr.mxu0 0.0
    %4863 = vmatpush1.msra.mxu0 0.0
    %4864 = vmatprep.subr.mxu0 0.0
    %4865 = vmatpush1.msra.mxu0 0.0
    %4866 = vmatprep.subr.mxu0 0.0
    %4867 = vmatpush1.msra.mxu0 0.0
    %4868 = vmatprep.subr.mxu0 0.0
    %4869 = vmatpush1.msra.mxu0 0.0
    %4870 = vmatprep.subr.mxu0 0.0
    %4871 = vmatpush1.msra.mxu0 0.0
    %4872 = vmatprep.subr.mxu0 0.0
    %4873 = vmatpush1.msra.mxu0 0.0
    %4874 = vmatprep.subr.mxu0 0.0
    %4875 = vmatpush1.msra.mxu0 0.0
    %4876 = vmatprep.subr.mxu0 0.0
    %4877 = vmatpush1.msra.mxu0 0.0
    %4878 = vmatprep.mubr.f32.mxu0 0.0
    %4879 = vmatmul.mubr.f32.gmra.mrb[0].mxu0 %v90
    %v4880 = vpop.f32.mrb[0].mxu0
    %v4881 = vadd.f32 0.0, %v4880
    %v4882 = vpop.f32.mrb[0].mxu0
    %4883 = vdwg.mxu0
    %v4884 = vmul.f32 %v165, %v4881
    %4885 = vmatprep.subr.mxu0 0.0
    %4886 = vmatpush1.msra.mxu0 %v4884
    %4887 = vmatprep.subr.mxu0 0.0
    %4888 = vmatpush1.msra.mxu0 0.0
    %4889 = vmatprep.subr.mxu0 0.0
    %4890 = vmatpush1.msra.mxu0 0.0
    %4891 = vmatprep.subr.mxu0 0.0
    %4892 = vmatpush1.msra.mxu0 0.0
    %4893 = vmatprep.subr.mxu0 0.0
    %4894 = vmatpush1.msra.mxu0 0.0
    %4895 = vmatprep.subr.mxu0 0.0
    %4896 = vmatpush1.msra.mxu0 0.0
    %4897 = vmatprep.subr.mxu0 0.0
    %4898 = vmatpush1.msra.mxu0 0.0
    %4899 = vmatprep.subr.mxu0 0.0
    %4900 = vmatpush1.msra.mxu0 0.0
    %4901 = vmatprep.subr.mxu0 0.0
    %4902 = vmatpush1.msra.mxu0 0.0
    %4903 = vmatprep.subr.mxu0 0.0
    %4904 = vmatpush1.msra.mxu0 0.0
    %4905 = vmatprep.subr.mxu0 0.0
    %4906 = vmatpush1.msra.mxu0 0.0
    %4907 = vmatprep.subr.mxu0 0.0
    %4908 = vmatpush1.msra.mxu0 0.0
    %4909 = vmatprep.subr.mxu0 0.0
    %4910 = vmatpush1.msra.mxu0 0.0
    %4911 = vmatprep.subr.mxu0 0.0
    %4912 = vmatpush1.msra.mxu0 0.0
    %4913 = vmatprep.subr.mxu0 0.0
    %4914 = vmatpush1.msra.mxu0 0.0
    %4915 = vmatprep.subr.mxu0 0.0
    %4916 = vmatpush1.msra.mxu0 0.0
    %4917 = vmatprep.subr.mxu0 0.0
    %4918 = vmatpush1.msra.mxu0 0.0
    %4919 = vmatprep.subr.mxu0 0.0
    %4920 = vmatpush1.msra.mxu0 0.0
    %4921 = vmatprep.subr.mxu0 0.0
    %4922 = vmatpush1.msra.mxu0 0.0
    %4923 = vmatprep.subr.mxu0 0.0
    %4924 = vmatpush1.msra.mxu0 0.0
    %4925 = vmatprep.subr.mxu0 0.0
    %4926 = vmatpush1.msra.mxu0 0.0
    %4927 = vmatprep.subr.mxu0 0.0
    %4928 = vmatpush1.msra.mxu0 0.0
    %4929 = vmatprep.subr.mxu0 0.0
    %4930 = vmatpush1.msra.mxu0 0.0
    %4931 = vmatprep.subr.mxu0 0.0
    %4932 = vmatpush1.msra.mxu0 0.0
    %4933 = vmatprep.subr.mxu0 0.0
    %4934 = vmatpush1.msra.mxu0 0.0
    %4935 = vmatprep.subr.mxu0 0.0
    %4936 = vmatpush1.msra.mxu0 0.0
    %4937 = vmatprep.subr.mxu0 0.0
    %4938 = vmatpush1.msra.mxu0 0.0
    %4939 = vmatprep.subr.mxu0 0.0
    %4940 = vmatpush1.msra.mxu0 0.0
    %4941 = vmatprep.subr.mxu0 0.0
    %4942 = vmatpush1.msra.mxu0 0.0
    %4943 = vmatprep.subr.mxu0 0.0
    %4944 = vmatpush1.msra.mxu0 0.0
    %4945 = vmatprep.subr.mxu0 0.0
    %4946 = vmatpush1.msra.mxu0 0.0
    %4947 = vmatprep.subr.mxu0 0.0
    %4948 = vmatpush1.msra.mxu0 0.0
    %4949 = vmatprep.mubr.f32.mxu0 0.0
    %4950 = vmatmul.mubr.f32.gmra.mrb[0].mxu0 %v170
    %v4951 = vpop.f32.mrb[0].mxu0
    %v4952 = vadd.f32 0.0, %v4951
    %v4953 = vpop.f32.mrb[0].mxu0
    %4954 = vmatprep.mubr.f32.mxu0 0.0
    %4955 = vmatmul.mubr.f32.gmra.mrb[0].mxu0 %v173
    %v4956 = vpop.f32.mrb[0].mxu0
    %v4957 = vadd.f32 0.0, %v4956
    %v4958 = vpop.f32.mrb[0].mxu0
    %4959 = vdwg.mxu0
    %v4960 = vmul.f32 %v47, %v4952
    %v4961 = vmul.f32 %v52, %v4957
    %v4962 = vmul.f32 %v47, %v4960
    %v4963 = vmul.f32 %v52, %v4961
    %4964 = vmatprep.subr.mxu0 0.0
    %4965 = vmatpush1.msra.mxu0 %v4962
    %4966 = vmatprep.subr.mxu0 0.0
    %4967 = vmatpush1.msra.mxu0 %v4963
    %4968 = vmatprep.subr.mxu0 0.0
    %4969 = vmatpush1.msra.mxu0 0.0
    %4970 = vmatprep.subr.mxu0 0.0
    %4971 = vmatpush1.msra.mxu0 0.0
    %4972 = vmatprep.subr.mxu0 0.0
    %4973 = vmatpush1.msra.mxu0 0.0
    %4974 = vmatprep.subr.mxu0 0.0
    %4975 = vmatpush1.msra.mxu0 0.0
    %4976 = vmatprep.subr.mxu0 0.0
    %4977 = vmatpush1.msra.mxu0 0.0
    %4978 = vmatprep.subr.mxu0 0.0
    %4979 = vmatpush1.msra.mxu0 0.0
    %4980 = vmatprep.subr.mxu0 0.0
    %4981 = vmatpush1.msra.mxu0 0.0
    %4982 = vmatprep.subr.mxu0 0.0
    %4983 = vmatpush1.msra.mxu0 0.0
    %4984 = vmatprep.subr.mxu0 0.0
    %4985 = vmatpush1.msra.mxu0 0.0
    %4986 = vmatprep.subr.mxu0 0.0
    %4987 = vmatpush1.msra.mxu0 0.0
    %4988 = vmatprep.subr.mxu0 0.0
    %4989 = vmatpush1.msra.mxu0 0.0
    %4990 = vmatprep.subr.mxu0 0.0
    %4991 = vmatpush1.msra.mxu0 0.0
    %4992 = vmatprep.subr.mxu0 0.0
    %4993 = vmatpush1.msra.mxu0 0.0
    %4994 = vmatprep.subr.mxu0 0.0
    %4995 = vmatpush1.msra.mxu0 0.0
    %4996 = vmatprep.subr.mxu0 0.0
    %4997 = vmatpush1.msra.mxu0 0.0
    %4998 = vmatprep.subr.mxu0 0.0
    %4999 = vmatpush1.msra.mxu0 0.0
    %5000 = vmatprep.subr.mxu0 0.0
    %5001 = vmatpush1.msra.mxu0 0.0
    %5002 = vmatprep.subr.mxu0 0.0
    %5003 = vmatpush1.msra.mxu0 0.0
    %5004 = vmatprep.subr.mxu0 0.0
    %5005 = vmatpush1.msra.mxu0 0.0
    %5006 = vmatprep.subr.mxu0 0.0
    %5007 = vmatpush1.msra.mxu0 0.0
    %5008 = vmatprep.subr.mxu0 0.0
    %5009 = vmatpush1.msra.mxu0 0.0
    %5010 = vmatprep.subr.mxu0 0.0
    %5011 = vmatpush1.msra.mxu0 0.0
    %5012 = vmatprep.subr.mxu0 0.0
    %5013 = vmatpush1.msra.mxu0 0.0
    %5014 = vmatprep.subr.mxu0 0.0
    %5015 = vmatpush1.msra.mxu0 0.0
    %5016 = vmatprep.subr.mxu0 0.0
    %5017 = vmatpush1.msra.mxu0 0.0
    %5018 = vmatprep.subr.mxu0 0.0
    %5019 = vmatpush1.msra.mxu0 0.0
    %5020 = vmatprep.subr.mxu0 0.0
    %5021 = vmatpush1.msra.mxu0 0.0
    %5022 = vmatprep.subr.mxu0 0.0
    %5023 = vmatpush1.msra.mxu0 0.0
    %5024 = vmatprep.subr.mxu0 0.0
    %5025 = vmatpush1.msra.mxu0 0.0
    %5026 = vmatprep.subr.mxu0 0.0
    %5027 = vmatpush1.msra.mxu0 0.0
    %5028 = vmatprep.mubr.f32.mxu0 0.0
    %5029 = vmatmul.mubr.f32.gmra.mrb[0].mxu0 %v90
    %v5030 = vpop.f32.mrb[0].mxu0
    %v5031 = vadd.f32 0.0, %v5030
    %v5032 = vpop.f32.mrb[0].mxu0
    %5033 = vdwg.mxu0
    %v5034 = vmul.f32 %v165, %v5031
    %5035 = vmatprep.subr.mxu0 0.0
    %5036 = vmatpush1.msra.mxu0 %v5034
    %5037 = vmatprep.subr.mxu0 0.0
    %5038 = vmatpush1.msra.mxu0 0.0
    %5039 = vmatprep.subr.mxu0 0.0
    %5040 = vmatpush1.msra.mxu0 0.0
    %5041 = vmatprep.subr.mxu0 0.0
    %5042 = vmatpush1.msra.mxu0 0.0
    %5043 = vmatprep.subr.mxu0 0.0
    %5044 = vmatpush1.msra.mxu0 0.0
    %5045 = vmatprep.subr.mxu0 0.0
    %5046 = vmatpush1.msra.mxu0 0.0
    %5047 = vmatprep.subr.mxu0 0.0
    %5048 = vmatpush1.msra.mxu0 0.0
    %5049 = vmatprep.subr.mxu0 0.0
    %5050 = vmatpush1.msra.mxu0 0.0
    %5051 = vmatprep.subr.mxu0 0.0
    %5052 = vmatpush1.msra.mxu0 0.0
    %5053 = vmatprep.subr.mxu0 0.0
    %5054 = vmatpush1.msra.mxu0 0.0
    %5055 = vmatprep.subr.mxu0 0.0
    %5056 = vmatpush1.msra.mxu0 0.0
    %5057 = vmatprep.subr.mxu0 0.0
    %5058 = vmatpush1.msra.mxu0 0.0
    %5059 = vmatprep.subr.mxu0 0.0
    %5060 = vmatpush1.msra.mxu0 0.0
    %5061 = vmatprep.subr.mxu0 0.0
    %5062 = vmatpush1.msra.mxu0 0.0
    %5063 = vmatprep.subr.mxu0 0.0
    %5064 = vmatpush1.msra.mxu0 0.0
    %5065 = vmatprep.subr.mxu0 0.0
    %5066 = vmatpush1.msra.mxu0 0.0
    %5067 = vmatprep.subr.mxu0 0.0
    %5068 = vmatpush1.msra.mxu0 0.0
    %5069 = vmatprep.subr.mxu0 0.0
    %5070 = vmatpush1.msra.mxu0 0.0
    %5071 = vmatprep.subr.mxu0 0.0
    %5072 = vmatpush1.msra.mxu0 0.0
    %5073 = vmatprep.subr.mxu0 0.0
    %5074 = vmatpush1.msra.mxu0 0.0
    %5075 = vmatprep.subr.mxu0 0.0
    %5076 = vmatpush1.msra.mxu0 0.0
    %5077 = vmatprep.subr.mxu0 0.0
    %5078 = vmatpush1.msra.mxu0 0.0
    %5079 = vmatprep.subr.mxu0 0.0
    %5080 = vmatpush1.msra.mxu0 0.0
    %5081 = vmatprep.subr.mxu0 0.0
    %5082 = vmatpush1.msra.mxu0 0.0
    %5083 = vmatprep.subr.mxu0 0.0
    %5084 = vmatpush1.msra.mxu0 0.0
    %5085 = vmatprep.subr.mxu0 0.0
    %5086 = vmatpush1.msra.mxu0 0.0
    %5087 = vmatprep.subr.mxu0 0.0
    %5088 = vmatpush1.msra.mxu0 0.0
    %5089 = vmatprep.subr.mxu0 0.0
    %5090 = vmatpush1.msra.mxu0 0.0
    %5091 = vmatprep.subr.mxu0 0.0
    %5092 = vmatpush1.msra.mxu0 0.0
    %5093 = vmatprep.subr.mxu0 0.0
    %5094 = vmatpush1.msra.mxu0 0.0
    %5095 = vmatprep.subr.mxu0 0.0
    %5096 = vmatpush1.msra.mxu0 0.0
    %5097 = vmatprep.subr.mxu0 0.0
    %5098 = vmatpush1.msra.mxu0 0.0
    %5099 = vmatprep.mubr.f32.mxu0 0.0
    %5100 = vmatmul.mubr.f32.gmra.mrb[0].mxu0 %v170
    %v5101 = vpop.f32.mrb[0].mxu0
    %v5102 = vadd.f32 0.0, %v5101
    %v5103 = vpop.f32.mrb[0].mxu0
    %5104 = vmatprep.mubr.f32.mxu0 0.0
    %5105 = vmatmul.mubr.f32.gmra.mrb[0].mxu0 %v173
    %v5106 = vpop.f32.mrb[0].mxu0
    %v5107 = vadd.f32 0.0, %v5106
    %v5108 = vpop.f32.mrb[0].mxu0
    %5109 = vdwg.mxu0
    %v5110 = vmul.f32 %v47, %v5102
    %v5111 = vmul.f32 %v52, %v5107
    %v5112 = vmul.f32 %v255, %v5031
    %v5113 = vsub.f32 %v3887, %v5110
    %v5114 = vsub.f32 %v3888, %v5111
    %v5115 = vand.u32 2147483647, %v5113
    %v5116 = vand.u32 2147483647, %v5114
    %5119 = vrot.lane.b32.xlu0 %v5115, 96
    %v5120 = vpop.permute.xlu0 %5119
    %5121 = vrot.lane.b32.xlu0 %v5116, 96
    %v5122 = vpop.permute.xlu0 %5121
    %vm5125 = vcmask 982784
    %5126 = vst.msk [vmem:[#allocation4] sm:$0xff] %vm5125, %v5120
    %5127 = vst.msk [vmem:[#allocation4 + $0x10] sm:$0xff] %vm5125, %v5122
    %v5128 = vsub.f32 %v3889, %v5112
    %v5129 = vand.u32 2147483647, %v5128
    %5131 = vrot.lane.b32.xlu0 %v5129, 96
    %v5132 = vpop.permute.xlu0 %5131
    %5134 = vst.msk [vmem:[#allocation5] sm:$0xff] %vm5125, %v5132
    %v5135 = vand.u32 2147483647, %v5110
    %v5136 = vand.u32 2147483647, %v5111
    %5139 = vrot.lane.b32.xlu0 %v5135, 120
    %v5140 = vpop.permute.xlu0 %5139
    %5141 = vrot.lane.b32.xlu0 %v5136, 120
    %v5142 = vpop.permute.xlu0 %5141
    %vm5145 = vcmask 1048512
    %5146 = vst.msk [vmem:[#allocation4] sm:$0xff] %vm5145, %v5140
    %5147 = vst.msk [vmem:[#allocation4 + $0x8] sm:$0xff] %vm88, %v5140
    %5148 = vst.msk [vmem:[#allocation4 + $0x10] sm:$0xff] %vm5145, %v5142
    %5149 = vst.msk [vmem:[#allocation4 + $0x18] sm:$0xff] %vm88, %v5142
    %v5150 = vand.u32 2147483647, %v5112
    %5152 = vrot.lane.b32.xlu0 %v5150, 120
    %v5153 = vpop.permute.xlu0 %5152
    %5155 = vst.msk [vmem:[#allocation5] sm:$0xff] %vm5145, %v5153
    %5156 = vst.msk [vmem:[#allocation5 + $0x8] sm:$0xff] %vm88, %v5153
    %v5157 = vld [vmem:[#allocation4] sm:$0xff]
    %v5158 = vld [vmem:[#allocation4 + $0x8] sm:$0xff]
    %v5159 = vld [vmem:[#allocation4 + $0x10] sm:$0xff]
    %v5160 = vld [vmem:[#allocation4 + $0x18] sm:$0xff]
    %v5161 = vld [vmem:[%s5] sm:$0xff]
    %v5162 = vld [vmem:[%s5 + $0x8] sm:$0xff]
    %v5163 = vld [vmem:[%s5 + $0x10] sm:$0xff]
    %v5164 = vld [vmem:[%s5 + $0x18] sm:$0xff]
    %v5165 = vld [vmem:[%s5 + $0x20] sm:$0xff]
    %v5166 = vld [vmem:[%s5 + $0x28] sm:$0xff]
    %v5167 = vld [vmem:[%s5 + $0x30] sm:$0xff]
    %v5168 = vld [vmem:[%s5 + $0x38] sm:$0xff]
    %v5169 = vld [vmem:[%s5 + $0x40] sm:$0xff]
    %v5170 = vld [vmem:[%s5 + $0x48] sm:$0xff]
    %v5171 = vld [vmem:[%s5 + $0x50] sm:$0xff]
    %v5172 = vld [vmem:[%s5 + $0x58] sm:$0xff]
    %v5173 = vld [vmem:[%s5 + $0x60] sm:$0xff]
    %v5174 = vld [vmem:[%s5 + $0x68] sm:$0xff]
    %v5175 = vld [vmem:[%s5 + $0x70] sm:$0xff]
    %v5176 = vld [vmem:[%s5 + $0x78] sm:$0xff]
    %v5177 = vld [vmem:[%s5 + $0x80] sm:$0xff]
    %v5178 = vld [vmem:[%s5 + $0x88] sm:$0xff]
    %v5179 = vld [vmem:[%s6] sm:$0x1]
    %v5181 = vlaneseq
    %v5182 = vshrl.u32 %v5181, 7
    %v5183 = vsub.s32 0, %v5182
    %v5184 = vrot.slane %v5179, %v5183
    %v5187 = vsel %vm88, %v5158, 0
    %v5190 = vsel %vm88, %v5160, 0
    %5192 = vmatprep.subr.mxu0 0.0
    %5193 = vmatpush1.msra.mxu0 %v5161
    %5194 = vmatprep.subr.mxu0 0.0
    %5195 = vmatpush1.msra.mxu0 %v5162
    %5196 = vmatprep.subr.mxu0 0.0
    %5197 = vmatpush1.msra.mxu0 %v5163
    %5198 = vmatprep.subr.mxu0 0.0
    %5199 = vmatpush1.msra.mxu0 %v5164
    %5200 = vmatprep.subr.mxu0 0.0
    %5201 = vmatpush1.msra.mxu0 %v5165
    %5202 = vmatprep.subr.mxu0 0.0
    %5203 = vmatpush1.msra.mxu0 %v5166
    %5204 = vmatprep.subr.mxu0 0.0
    %5205 = vmatpush1.msra.mxu0 %v5167
    %5206 = vmatprep.subr.mxu0 0.0
    %5207 = vmatpush1.msra.mxu0 %v5168
    %5208 = vmatprep.subr.mxu0 0.0
    %5209 = vmatpush1.msra.mxu0 %v5169
    %5210 = vmatprep.subr.mxu0 0.0
    %5211 = vmatpush1.msra.mxu0 %v5170
    %5212 = vmatprep.subr.mxu0 0.0
    %5213 = vmatpush1.msra.mxu0 %v5171
    %5214 = vmatprep.subr.mxu0 0.0
    %5215 = vmatpush1.msra.mxu0 %v5172
    %5216 = vmatprep.subr.mxu0 0.0
    %5217 = vmatpush1.msra.mxu0 %v5173
    %5218 = vmatprep.subr.mxu0 0.0
    %5219 = vmatpush1.msra.mxu0 %v5174
    %5220 = vmatprep.subr.mxu0 0.0
    %5221 = vmatpush1.msra.mxu0 %v5175
    %5222 = vmatprep.subr.mxu0 0.0
    %5223 = vmatpush1.msra.mxu0 %v5176
    %5224 = vmatprep.subr.mxu0 0.0
    %5225 = vmatpush1.msra.mxu0 %v5177
    %5226 = vmatprep.subr.mxu0 0.0
    %5227 = vmatpush1.msra.mxu0 %v5178
    %5228 = vmatprep.subr.mxu0 0.0
    %5229 = vmatpush1.msra.mxu0 0.0
    %5230 = vmatprep.subr.mxu0 0.0
    %5231 = vmatpush1.msra.mxu0 0.0
    %5232 = vmatprep.subr.mxu0 0.0
    %5233 = vmatpush1.msra.mxu0 0.0
    %5234 = vmatprep.subr.mxu0 0.0
    %5235 = vmatpush1.msra.mxu0 0.0
    %5236 = vmatprep.subr.mxu0 0.0
    %5237 = vmatpush1.msra.mxu0 0.0
    %5238 = vmatprep.subr.mxu0 0.0
    %5239 = vmatpush1.msra.mxu0 0.0
    %5240 = vmatprep.subr.mxu0 0.0
    %5241 = vmatpush1.msra.mxu0 0.0
    %5242 = vmatprep.subr.mxu0 0.0
    %5243 = vmatpush1.msra.mxu0 0.0
    %5244 = vmatprep.subr.mxu0 0.0
    %5245 = vmatpush1.msra.mxu0 0.0
    %5246 = vmatprep.subr.mxu0 0.0
    %5247 = vmatpush1.msra.mxu0 0.0
    %5248 = vmatprep.subr.mxu0 0.0
    %5249 = vmatpush1.msra.mxu0 0.0
    %5250 = vmatprep.subr.mxu0 0.0
    %5251 = vmatpush1.msra.mxu0 0.0
    %5252 = vmatprep.subr.mxu0 0.0
    %5253 = vmatpush1.msra.mxu0 0.0
    %5254 = vmatprep.subr.mxu0 0.0
    %5255 = vmatpush1.msra.mxu0 0.0
    %5256 = vmatprep.mubr.f32.mxu0 %v5187
    %5257 = vmatmul.mubr.f32.gmra.mrb[0].mxu0 %v5157
    %v5258 = vpop.f32.mrb[0].mxu0
    %v5259 = vadd.f32 %v5184, %v5258
    %v5260 = vpop.f32.mrb[0].mxu0
    %5261 = vmatprep.mubr.f32.mxu0 %v5190
    %5262 = vmatmul.mubr.f32.gmra.mrb[0].mxu0 %v5159
    %v5263 = vpop.f32.mrb[0].mxu0
    %v5264 = vadd.f32 %v5184, %v5263
    %v5265 = vpop.f32.mrb[0].mxu0
    %5266 = vdwg.mxu0
    %v5267 = vmax.f32 %v5259, 0.0
    %v5268 = vmax.f32 %v5264, 0.0
    %v5269 = vld [vmem:[%s7] sm:$0xff]
    %v5270 = vld [vmem:[%s7 + $0x8] sm:$0xff]
    %v5271 = vld [vmem:[%s7 + $0x10] sm:$0xff]
    %v5272 = vld [vmem:[%s7 + $0x18] sm:$0xff]
    %v5273 = vld [vmem:[%s7 + $0x20] sm:$0xff]
    %v5274 = vld [vmem:[%s7 + $0x28] sm:$0xff]
    %v5275 = vld [vmem:[%s7 + $0x30] sm:$0xff]
    %v5276 = vld [vmem:[%s7 + $0x38] sm:$0xff]
    %v5277 = vld [vmem:[%s7 + $0x40] sm:$0xff]
    %v5278 = vld [vmem:[%s8] sm:$0x1]
    %v5280 = vlaneseq
    %v5281 = vshrl.u32 %v5280, 7
    %v5282 = vsub.s32 0, %v5281
    %v5283 = vrot.slane %v5278, %v5282
    %vm5285 = vcmask 588800
    %v5287 = vsel %vm5285, %v5267, 0
    %v5290 = vsel %vm5285, %v5268, 0
    %5292 = vmatprep.subr.mxu0 0.0
    %5293 = vmatpush1.msra.mxu0 %v5269
    %5294 = vmatprep.subr.mxu0 0.0
    %5295 = vmatpush1.msra.mxu0 %v5270
    %5296 = vmatprep.subr.mxu0 0.0
    %5297 = vmatpush1.msra.mxu0 %v5271
    %5298 = vmatprep.subr.mxu0 0.0
    %5299 = vmatpush1.msra.mxu0 %v5272
    %5300 = vmatprep.subr.mxu0 0.0
    %5301 = vmatpush1.msra.mxu0 %v5273
    %5302 = vmatprep.subr.mxu0 0.0
    %5303 = vmatpush1.msra.mxu0 %v5274
    %5304 = vmatprep.subr.mxu0 0.0
    %5305 = vmatpush1.msra.mxu0 %v5275
    %5306 = vmatprep.subr.mxu0 0.0
    %5307 = vmatpush1.msra.mxu0 %v5276
    %5308 = vmatprep.subr.mxu0 0.0
    %5309 = vmatpush1.msra.mxu0 %v5277
    %5310 = vmatprep.subr.mxu0 0.0
    %5311 = vmatpush1.msra.mxu0 0.0
    %5312 = vmatprep.subr.mxu0 0.0
    %5313 = vmatpush1.msra.mxu0 0.0
    %5314 = vmatprep.subr.mxu0 0.0
    %5315 = vmatpush1.msra.mxu0 0.0
    %5316 = vmatprep.subr.mxu0 0.0
    %5317 = vmatpush1.msra.mxu0 0.0
    %5318 = vmatprep.subr.mxu0 0.0
    %5319 = vmatpush1.msra.mxu0 0.0
    %5320 = vmatprep.subr.mxu0 0.0
    %5321 = vmatpush1.msra.mxu0 0.0
    %5322 = vmatprep.subr.mxu0 0.0
    %5323 = vmatpush1.msra.mxu0 0.0
    %5324 = vmatprep.subr.mxu0 0.0
    %5325 = vmatpush1.msra.mxu0 0.0
    %5326 = vmatprep.subr.mxu0 0.0
    %5327 = vmatpush1.msra.mxu0 0.0
    %5328 = vmatprep.subr.mxu0 0.0
    %5329 = vmatpush1.msra.mxu0 0.0
    %5330 = vmatprep.subr.mxu0 0.0
    %5331 = vmatpush1.msra.mxu0 0.0
    %5332 = vmatprep.subr.mxu0 0.0
    %5333 = vmatpush1.msra.mxu0 0.0
    %5334 = vmatprep.subr.mxu0 0.0
    %5335 = vmatpush1.msra.mxu0 0.0
    %5336 = vmatprep.subr.mxu0 0.0
    %5337 = vmatpush1.msra.mxu0 0.0
    %5338 = vmatprep.subr.mxu0 0.0
    %5339 = vmatpush1.msra.mxu0 0.0
    %5340 = vmatprep.subr.mxu0 0.0
    %5341 = vmatpush1.msra.mxu0 0.0
    %5342 = vmatprep.subr.mxu0 0.0
    %5343 = vmatpush1.msra.mxu0 0.0
    %5344 = vmatprep.subr.mxu0 0.0
    %5345 = vmatpush1.msra.mxu0 0.0
    %5346 = vmatprep.subr.mxu0 0.0
    %5347 = vmatpush1.msra.mxu0 0.0
    %5348 = vmatprep.subr.mxu0 0.0
    %5349 = vmatpush1.msra.mxu0 0.0
    %5350 = vmatprep.subr.mxu0 0.0
    %5351 = vmatpush1.msra.mxu0 0.0
    %5352 = vmatprep.subr.mxu0 0.0
    %5353 = vmatpush1.msra.mxu0 0.0
    %5354 = vmatprep.subr.mxu0 0.0
    %5355 = vmatpush1.msra.mxu0 0.0
    %5356 = vmatprep.mubr.f32.mxu0 0.0
    %5357 = vmatmul.mubr.f32.gmra.mrb[0].mxu0 %v5287
    %v5358 = vpop.f32.mrb[0].mxu0
    %v5359 = vadd.f32 %v5283, %v5358
    %v5360 = vpop.f32.mrb[0].mxu0
    %5361 = vmatprep.mubr.f32.mxu0 0.0
    %5362 = vmatmul.mubr.f32.gmra.mrb[0].mxu0 %v5290
    %v5363 = vpop.f32.mrb[0].mxu0
    %v5364 = vadd.f32 %v5283, %v5363
    %v5365 = vpop.f32.mrb[0].mxu0
    %5366 = vdwg.mxu0
    %vm5367 = vcmask 23552
    %5368 = vst.msk [vmem:[%s9] sm:$0xff] %vm5367, %v5359
    %5369 = vst.msk [vmem:[%s9 + $0x8] sm:$0xff] %vm5367, %v5364
    // Predicated region
    $region38: #{tpu_custom_call.1} parent=1 // pred_check
      _
    $region39: #{tpu_custom_call.1} parent=1 // pred_check_branch
      %5371 = sbr.rel (0) target = $region41
    $region40: #{tpu_custom_call.1} parent=1 // pred_region
      _
    $region41: #{tpu_custom_call.1} parent=1 // pred_fallthru
      _
    // Predicated region
    $region42: #{tpu_custom_call.1} parent=1 // pred_check
      _
    $region43: #{tpu_custom_call.1} parent=1 // pred_check_branch
      %5373 = sbr.rel (0) target = $region45
    $region44: #{tpu_custom_call.1} parent=1 // pred_region
      %s5375 = ssub.s32 256, 256
      %5376 = vsyncadd [#allocation6], %s5375
      %s5378 = sshll.u32 [#allocation5], 4
      %s5379 = int_to_ptr.vmem [resolvable:$true] %s5378
      %5381 = dma.vmem_to_hbm [thread:$0]  %s5379, 256, %s10, [#allocation6]
    $region45: #{tpu_custom_call.1} parent=1 // pred_fallthru
      _
    // Predicated region
    $region46: #{tpu_custom_call.1} parent=1 // pred_check
      _
    $region47: #{tpu_custom_call.1} parent=1 // pred_check_branch
      %5383 = sbr.rel (0) target = $region49
    $region48: #{tpu_custom_call.1} parent=1 // pred_region
      _
    $region49: #{tpu_custom_call.1} parent=1 // pred_fallthru
      _
    // Predicated region
    $region50: #{tpu_custom_call.1} parent=1 // pred_check
      _
    $region51: #{tpu_custom_call.1} parent=1 // pred_check_branch
      %5385 = sbr.rel (0) target = $region53
    $region52: #{tpu_custom_call.1} parent=1 // pred_region
      %5386 = dma.done [#allocation6], 256
    $region53: #{tpu_custom_call.1} parent=1 // pred_fallthru
      _
    %5387 = vsyncpa [#allocation6], 1

</llo_original>
